<compile_context>
chip_gen: v7x
topology: tpu7x:2x2x1
jax: 0.10.0
libtpu: 0.0.40
codegen_flags: <defaults>
</compile_context>

<pallas_src>
import functools

import jax
import jax.numpy as jnp
from jax.experimental import pallas as pl
from jax.experimental.pallas import tpu as pltpu

NEG_INF = -1e9  # additive-mask value; exp(-1e9 - max) underflows to exactly 0


# ----------------------------- in-kernel helpers -----------------------------

def _layer_norm(x, w, b, eps=1e-5):
    # x: (N, E); w, b: (1, E)  (PyTorch LayerNorm, eps=1e-5)
    mu = jnp.mean(x, axis=-1, keepdims=True)
    var = jnp.mean((x - mu) ** 2, axis=-1, keepdims=True)
    return (x - mu) * jax.lax.rsqrt(var + eps) * w + b


def _split_heads(x, num_heads, hd):
    # (N, E) -> (H, N, hd) via static lane slices stacked on a new leading dim
    # (avoids 4-D transposes, which may not lower for sub-128 lane dims).
    return jnp.stack([x[:, h * hd:(h + 1) * hd] for h in range(num_heads)],
                     axis=0)


def _attention(xq, xkv, w_in, b_in, w_out, b_out, add_mask, num_heads):
    """PyTorch nn.MultiheadAttention forward, heads batched into single einsums.

    xq:  (Nq, E) f32 — rows are all (batch, position) pairs flattened.
    xkv: (Nk, E) f32.
    w_in: (E, 3E) bf16 pre-transposed packed in_proj; b_in: (1, 3E) f32.
    w_out: (E, E) bf16 pre-transposed out_proj;       b_out: (1, E) f32.
    add_mask: (Nq, Nk) additive f32. It encodes both the batch block-diagonal
      structure (cross-batch entries = NEG_INF) and the user memory mask, so
      all batch elements share one score block without mixing.
    """
    E = w_out.shape[-1]
    hd = E // num_heads
    scale = float(hd) ** -0.5

    xq_b = xq.astype(jnp.bfloat16)
    if xq is xkv:   # self-attention: one packed QKV matmul
        qkv = jnp.dot(xq_b, w_in, preferred_element_type=jnp.float32) + b_in
        q, k, v = qkv[:, :E], qkv[:, E:2 * E], qkv[:, 2 * E:]
    else:           # cross-attention: Q from target, KV from encoder memory
        xkv_b = xkv.astype(jnp.bfloat16)
        q = (jnp.dot(xq_b, w_in[:, :E], preferred_element_type=jnp.float32)
             + b_in[:, :E])
        kv = (jnp.dot(xkv_b, w_in[:, E:], preferred_element_type=jnp.float32)
              + b_in[:, E:])
        k, v = kv[:, :E], kv[:, E:]

    qh = _split_heads(q, num_heads, hd).astype(jnp.bfloat16)   # (H, Nq, hd)
    kh = _split_heads(k, num_heads, hd).astype(jnp.bfloat16)   # (H, Nk, hd)
    vh = _split_heads(v, num_heads, hd).astype(jnp.bfloat16)   # (H, Nk, hd)

    # One head-batched score einsum + ONE softmax over the whole (H, Nq, Nk)
    # block (instead of num_heads separate softmaxes).
    s = jnp.einsum('hqd,hkd->hqk', qh, kh,
                   preferred_element_type=jnp.float32) * scale  # (H, Nq, Nk)
    s = s + add_mask[None, :, :]
    s = s - jnp.max(s, axis=-1, keepdims=True)
    p = jnp.exp(s)
    p = p * pl.reciprocal(jnp.sum(p, axis=-1, keepdims=True), approx=True)

    o = jnp.einsum('hqk,hkd->hqd', p.astype(jnp.bfloat16), vh,
                   preferred_element_type=jnp.float32)          # (H, Nq, hd)
    # Concatenate heads back to (Nq, E) and do ONE dense out-projection.
    o2 = jnp.concatenate([o[h] for h in range(num_heads)], axis=-1)
    return (jnp.dot(o2.astype(jnp.bfloat16), w_out,
                    preferred_element_type=jnp.float32) + b_out)


# ------------------------------- fused kernel ---------------------------------

def fused_decoder_kernel(num_heads,
                         tok_ref, mem_ref, self_mask_ref, cross_mask_ref,
                         emb_ref,
                         ain_w_ref, ain_b_ref, aout_w_ref, aout_b_ref,
                         norm_ref, f1w_ref, f1b_ref, f2w_ref, f2b_ref,
                         lw_ref, lb_ref,
                         logits_ref):
    """Whole decoder stack + final linear in a single grid step.

    All layer weights fit VMEM at this size, so the layer loop is a static
    unroll (no grid machinery / pipeline prologue to pay for at L=2).
    """
    num_layers = ain_w_ref.shape[0]
    V, E = emb_ref.shape
    BT = tok_ref.shape[0]

    # --- embedding gather fused as one-hot @ table (V = 128 fills the lanes) ---
    tok = tok_ref[...]                                            # (BT, 1) int32
    vocab_ids = jax.lax.broadcasted_iota(jnp.int32, (BT, V), 1)
    onehot = (vocab_ids == tok).astype(jnp.float32)               # (BT, V)
    x = jnp.dot(onehot, emb_ref[...], preferred_element_type=jnp.float32)

    mem = mem_ref[...]                    # (B*S, E) f32, flattened on the host
    self_mask = self_mask_ref[...]        # (BT, BT) additive f32
    cross_mask = cross_mask_ref[...]      # (BT, B*S) additive f32

    for l in range(num_layers):           # layers are inherently sequential
        norms = norm_ref[l]               # (6, E): n1_w,n1_b,n2_w,n2_b,n3_w,n3_b

        # --- self-attention block (reference forward passes tgt_mask=None) ---
        sa = _attention(x, x, ain_w_ref[l, 0], ain_b_ref[l, 0],
                        aout_w_ref[l, 0], aout_b_ref[l, 0],
                        self_mask, num_heads)
        x = _layer_norm(x + sa, norms[0:1, :], norms[1:2, :])

        # --- cross-attention block with additive memory_mask ---
        ca = _attention(x, mem, ain_w_ref[l, 1], ain_b_ref[l, 1],
                        aout_w_ref[l, 1], aout_b_ref[l, 1],
                        cross_mask, num_heads)
        x = _layer_norm(x + ca, norms[2:3, :], norms[3:4, :])

        # --- feed-forward block: linear2(relu(linear1(x))) ---
        h = (jnp.dot(x.astype(jnp.bfloat16), f1w_ref[l],
                     preferred_element_type=jnp.float32) + f1b_ref[l])
        h = jnp.maximum(h, 0.0)
        ff = (jnp.dot(h.astype(jnp.bfloat16), f2w_ref[l],
                      preferred_element_type=jnp.float32) + f2b_ref[l])
        x = _layer_norm(x + ff, norms[4:5, :], norms[5:6, :])

    # --- final linear; logits are lane-dense (V = 128) ---
    logits_ref[...] = (jnp.dot(x.astype(jnp.bfloat16), lw_ref[...],
                               preferred_element_type=jnp.float32)
                       + lb_ref[...])


# ------------------------------- host wrapper ----------------------------------

def decoder_forward(params, tokens, attention_mask, encoder_hidden_state,
                    num_heads):
    B, T = tokens.shape
    S = encoder_hidden_state.shape[1]
    V, E = params["embedding"].shape
    BT, BS = B * T, B * S

    # Host-side flattening (free in XLA; avoids in-kernel relayouts).
    tok2d = tokens.reshape(BT, 1).astype(jnp.int32)
    mem2d = encoder_hidden_state.astype(jnp.float32).reshape(BS, E)

    # Batch-block-diagonal additive masks: all batch elements share one score
    # block in the kernel; cross-batch entries are NEG_INF (exp -> exactly 0).
    b_q = jnp.repeat(jnp.arange(B), T)                         # (BT,)
    self_mask = jnp.where(b_q[:, None] == b_q[None, :],
                          0.0, NEG_INF).astype(jnp.float32)    # (BT, BT)
    b_k = jnp.repeat(jnp.arange(B), S)                         # (BS,)
    mem_mask = jnp.tile(attention_mask.astype(jnp.float32), (B, B))  # (BT, BS)
    cross_mask = jnp.where(b_q[:, None] == b_k[None, :], mem_mask, NEG_INF)

    def const_spec(arr):
        nd = arr.ndim
        return pl.BlockSpec(arr.shape, lambda i, _nd=nd: (0,) * _nd)

    inputs = (tok2d, mem2d, self_mask, cross_mask,
              params["embedding"],
              params["attn_in_w"], params["attn_in_b"],
              params["attn_out_w"], params["attn_out_b"],
              params["norms"],
              params["ffn_w1"], params["ffn_b1"],
              params["ffn_w2"], params["ffn_b2"],
              params["out_w"], params["out_b"])

    logits2d = pl.pallas_call(
        functools.partial(fused_decoder_kernel, num_heads),
        out_shape=jax.ShapeDtypeStruct((BT, V), jnp.float32),
        grid=(1,),
        in_specs=[const_spec(a) for a in inputs],
        out_specs=pl.BlockSpec((BT, V), lambda i: (0, 0)),
        compiler_params=pltpu.CompilerParams(
            dimension_semantics=("arbitrary",)),
    )(*inputs)
    # TODO(synk): on v7x (2 TensorCores) a "parallel" grid axis over the batch
    # could use the second core; skipped since B*T=16 is below the per-step
    # overhead break-even.
    return logits2d.reshape(B, T, V)


# ------------------------------ parameter setup --------------------------------

def init_params(key, vocab_size, emb_size, hidden_dim, num_layers):
    """Random weights, stored pre-transposed (in_features, out_features), packed
    over layers. Matmul weight slabs are bf16 (MXU-native on v5e/v6e/v7x);
    biases / norms / embedding stay f32. For real PyTorch weights store
    `weight.T.astype(bf16)`."""
    keys = iter(jax.random.split(key, 4 + num_layers * 16))

    def nrm(shape, scale=0.02, dtype=jnp.float32):
        w = scale * jax.random.normal(next(keys), shape, jnp.float32)
        return w.astype(dtype)

    bf16 = jnp.bfloat16
    params = {
        "embedding": nrm((vocab_size, emb_size), 1.0),              # f32 table
        "out_w": nrm((emb_size, vocab_size), dtype=bf16),           # linear.weight.T
        "out_b": jnp.zeros((1, vocab_size), jnp.float32),
    }

    ain_w, ain_b, aout_w, aout_b = [], [], [], []
    norms, f1w, f1b, f2w, f2b = [], [], [], [], []
    ones = jnp.ones((emb_size,), jnp.float32)
    zeros = jnp.zeros((emb_size,), jnp.float32)
    for _ in range(num_layers):
        # index 0 = self-attention, index 1 = cross-attention
        ain_w.append(jnp.stack([nrm((emb_size, 3 * emb_size), dtype=bf16),
                                nrm((emb_size, 3 * emb_size), dtype=bf16)]))
        ain_b.append(jnp.stack([nrm((1, 3 * emb_size)),
                                nrm((1, 3 * emb_size))]))
        aout_w.append(jnp.stack([nrm((emb_size, emb_size), dtype=bf16),
                                 nrm((emb_size, emb_size), dtype=bf16)]))
        aout_b.append(jnp.stack([nrm((1, emb_size)),
                                 nrm((1, emb_size))]))
        # [n1_w, n1_b, n2_w, n2_b, n3_w, n3_b]
        norms.append(jnp.stack([ones, zeros, ones, zeros, ones, zeros]))
        f1w.append(nrm((emb_size, hidden_dim), dtype=bf16))   # linear1.weight.T
        f1b.append(nrm((1, hidden_dim)))
        f2w.append(nrm((hidden_dim, emb_size), dtype=bf16))   # linear2.weight.T
        f2b.append(nrm((1, emb_size)))

    params.update(
        attn_in_w=jnp.stack(ain_w),     # (L, 2, E, 3E)  bf16
        attn_in_b=jnp.stack(ain_b),     # (L, 2, 1, 3E)  f32
        attn_out_w=jnp.stack(aout_w),   # (L, 2, E, E)   bf16
        attn_out_b=jnp.stack(aout_b),   # (L, 2, 1, E)   f32
        norms=jnp.stack(norms),         # (L, 6, E)      f32
        ffn_w1=jnp.stack(f1w),          # (L, E, H)      bf16
        ffn_b1=jnp.stack(f1b),          # (L, 1, H)      f32
        ffn_w2=jnp.stack(f2w),          # (L, H, E)      bf16
        ffn_b2=jnp.stack(f2b),          # (L, 1, E)      f32
    )
    return params


# ------------------------------------ main -------------------------------------

if __name__ == "__main__":
    vocab_size, emb_size, hidden_dim, num_heads, num_layers = 128, 32, 64, 4, 2
    B, T, S = 2, 8, 16

    key = jax.random.PRNGKey(0)
    k_tok, k_mem, k_par = jax.random.split(key, 3)

    tokens = jax.random.randint(k_tok, (B, T), 0, vocab_size, dtype=jnp.int32)
    # additive float memory mask (T, S): second half of memory positions masked
    attention_mask = jnp.concatenate(
        [jnp.zeros((T, S // 2), jnp.float32),
         jnp.full((T, S // 2), -1e9, jnp.float32)], axis=1)
    encoder_hidden_state = jax.random.normal(k_mem, (B, S, emb_size),
                                             jnp.float32)

    params = init_params(k_par, vocab_size, emb_size, hidden_dim, num_layers)

    forward = jax.jit(functools.partial(decoder_forward, num_heads=num_heads))
    logits = forward(params, tokens, attention_mask, encoder_hidden_state)
    logits = jax.block_until_ready(logits)

    assert logits.shape == (B, T, vocab_size)
    assert bool(jnp.all(jnp.isfinite(logits)))
    print("KERNEL_OK")
</pallas_src>

<mosaic_0001>
module attributes {stable_mosaic.version = 11 : i64} {
  func.func @fused_decoder_kernel(%arg0: i32, %arg1: memref<16x1xi32, #tpu.memory_space<vmem>>, %arg2: memref<32x32xf32, #tpu.memory_space<vmem>>, %arg3: memref<16x16xf32, #tpu.memory_space<vmem>>, %arg4: memref<16x32xf32, #tpu.memory_space<vmem>>, %arg5: memref<128x32xf32, #tpu.memory_space<vmem>>, %arg6: memref<2x2x32x96xbf16, #tpu.memory_space<vmem>>, %arg7: memref<2x2x1x96xf32, #tpu.memory_space<vmem>>, %arg8: memref<2x2x32x32xbf16, #tpu.memory_space<vmem>>, %arg9: memref<2x2x1x32xf32, #tpu.memory_space<vmem>>, %arg10: memref<2x6x32xf32, #tpu.memory_space<vmem>>, %arg11: memref<2x32x64xbf16, #tpu.memory_space<vmem>>, %arg12: memref<2x1x64xf32, #tpu.memory_space<vmem>>, %arg13: memref<2x64x32xbf16, #tpu.memory_space<vmem>>, %arg14: memref<2x1x32xf32, #tpu.memory_space<vmem>>, %arg15: memref<32x128xbf16, #tpu.memory_space<vmem>>, %arg16: memref<1x128xf32, #tpu.memory_space<vmem>>, %arg17: memref<16x128xf32, #tpu.memory_space<vmem>>) attributes {dimension_semantics = [#tpu.dimension_semantics<arbitrary>], iteration_bounds = array<i64: 1>, scalar_prefetch = 0 : i64, scratch_operands = 0 : i64, tpu.core_type = #tpu.core_type<tc>, window_params = [{pipeline_mode = #tpu.pipeline_mode<synchronous>, transform_indices = @transform_0, window_bounds = array<i64: 16, 1>}, {pipeline_mode = #tpu.pipeline_mode<synchronous>, transform_indices = @transform_1, window_bounds = array<i64: 32, 32>}, {pipeline_mode = #tpu.pipeline_mode<synchronous>, transform_indices = @transform_2, window_bounds = array<i64: 16, 16>}, {pipeline_mode = #tpu.pipeline_mode<synchronous>, transform_indices = @transform_3, window_bounds = array<i64: 16, 32>}, {pipeline_mode = #tpu.pipeline_mode<synchronous>, transform_indices = @transform_4, window_bounds = array<i64: 128, 32>}, {pipeline_mode = #tpu.pipeline_mode<synchronous>, transform_indices = @transform_5, window_bounds = array<i64: 2, 2, 32, 96>}, {pipeline_mode = #tpu.pipeline_mode<synchronous>, transform_indices = @transform_6, window_bounds = array<i64: 2, 2, 1, 96>}, {pipeline_mode = #tpu.pipeline_mode<synchronous>, transform_indices = @transform_7, window_bounds = array<i64: 2, 2, 32, 32>}, {pipeline_mode = #tpu.pipeline_mode<synchronous>, transform_indices = @transform_8, window_bounds = array<i64: 2, 2, 1, 32>}, {pipeline_mode = #tpu.pipeline_mode<synchronous>, transform_indices = @transform_9, window_bounds = array<i64: 2, 6, 32>}, {pipeline_mode = #tpu.pipeline_mode<synchronous>, transform_indices = @transform_10, window_bounds = array<i64: 2, 32, 64>}, {pipeline_mode = #tpu.pipeline_mode<synchronous>, transform_indices = @transform_11, window_bounds = array<i64: 2, 1, 64>}, {pipeline_mode = #tpu.pipeline_mode<synchronous>, transform_indices = @transform_12, window_bounds = array<i64: 2, 64, 32>}, {pipeline_mode = #tpu.pipeline_mode<synchronous>, transform_indices = @transform_13, window_bounds = array<i64: 2, 1, 32>}, {pipeline_mode = #tpu.pipeline_mode<synchronous>, transform_indices = @transform_14, window_bounds = array<i64: 32, 128>}, {pipeline_mode = #tpu.pipeline_mode<synchronous>, transform_indices = @transform_15, window_bounds = array<i64: 1, 128>}, {pipeline_mode = #tpu.pipeline_mode<synchronous>, transform_indices = @transform_16, window_bounds = array<i64: 16, 128>}]} {
    %c0 = arith.constant 0 : index
    %c0_0 = arith.constant 0 : index
    %0 = vector.load %arg1[%c0, %c0_0] : memref<16x1xi32, #tpu.memory_space<vmem>>, vector<16x1xi32>
    %1 = tpu.iota {dimensions = array<i32: 1>} : vector<16x128xi32>
    %2 = vector.broadcast %0 : vector<16x1xi32> to vector<16x128xi32>
    %3 = arith.cmpi eq, %1, %2 : vector<16x128xi32>
    %4 = arith.extui %3 : vector<16x128xi1> to vector<16x128xi32>
    %5 = arith.sitofp %4 : vector<16x128xi32> to vector<16x128xf32>
    %c0_1 = arith.constant 0 : index
    %c0_2 = arith.constant 0 : index
    %6 = vector.load %arg5[%c0_1, %c0_2] : memref<128x32xf32, #tpu.memory_space<vmem>>, vector<128x32xf32>
    %cst = arith.constant dense<0.000000e+00> : vector<16x32xf32>
    %7 = tpu.matmul %5, %6, %cst {dimension_numbers = #tpu.dot_dimension_numbers<[1], [0], [0], [1], [0, 0, 1, 1], [], []>} : vector<16x128xf32>, vector<128x32xf32>, vector<16x32xf32> -> vector<16x32xf32>
    %c0_3 = arith.constant 0 : index
    %c0_4 = arith.constant 0 : index
    %8 = vector.load %arg2[%c0_3, %c0_4] : memref<32x32xf32, #tpu.memory_space<vmem>>, vector<32x32xf32>
    %c0_5 = arith.constant 0 : index
    %c0_6 = arith.constant 0 : index
    %9 = vector.load %arg3[%c0_5, %c0_6] : memref<16x16xf32, #tpu.memory_space<vmem>>, vector<16x16xf32>
    %c0_7 = arith.constant 0 : index
    %c0_8 = arith.constant 0 : index
    %10 = vector.load %arg4[%c0_7, %c0_8] : memref<16x32xf32, #tpu.memory_space<vmem>>, vector<16x32xf32>
    %c0_9 = arith.constant 0 : index
    %c0_10 = arith.constant 0 : index
    %c0_11 = arith.constant 0 : index
    %11 = vector.load %arg10[%c0_9, %c0_10, %c0_11] : memref<2x6x32xf32, #tpu.memory_space<vmem>>, vector<1x6x32xf32>
    %12 = vector.shape_cast %11 : vector<1x6x32xf32> to vector<6x32xf32>
    %c0_12 = arith.constant 0 : index
    %c0_13 = arith.constant 0 : index
    %c0_14 = arith.constant 0 : index
    %c0_15 = arith.constant 0 : index
    %13 = vector.load %arg6[%c0_12, %c0_13, %c0_14, %c0_15] : memref<2x2x32x96xbf16, #tpu.memory_space<vmem>>, vector<1x1x32x96xbf16>
    %14 = vector.shape_cast %13 : vector<1x1x32x96xbf16> to vector<32x96xbf16>
    %c0_16 = arith.constant 0 : index
    %c0_17 = arith.constant 0 : index
    %c0_18 = arith.constant 0 : index
    %c0_19 = arith.constant 0 : index
    %15 = vector.load %arg7[%c0_16, %c0_17, %c0_18, %c0_19] : memref<2x2x1x96xf32, #tpu.memory_space<vmem>>, vector<1x1x1x96xf32>
    %16 = vector.shape_cast %15 : vector<1x1x1x96xf32> to vector<1x96xf32>
    %c0_20 = arith.constant 0 : index
    %c0_21 = arith.constant 0 : index
    %c0_22 = arith.constant 0 : index
    %c0_23 = arith.constant 0 : index
    %17 = vector.load %arg8[%c0_20, %c0_21, %c0_22, %c0_23] : memref<2x2x32x32xbf16, #tpu.memory_space<vmem>>, vector<1x1x32x32xbf16>
    %18 = vector.shape_cast %17 : vector<1x1x32x32xbf16> to vector<32x32xbf16>
    %c0_24 = arith.constant 0 : index
    %c0_25 = arith.constant 0 : index
    %c0_26 = arith.constant 0 : index
    %c0_27 = arith.constant 0 : index
    %19 = vector.load %arg9[%c0_24, %c0_25, %c0_26, %c0_27] : memref<2x2x1x32xf32, #tpu.memory_space<vmem>>, vector<1x1x1x32xf32>
    %20 = vector.shape_cast %19 : vector<1x1x1x32xf32> to vector<1x32xf32>
    %21 = arith.truncf %7 : vector<16x32xf32> to vector<16x32xbf16>
    %cst_28 = arith.constant dense<0.000000e+00> : vector<16x96xf32>
    %22 = tpu.matmul %21, %14, %cst_28 {dimension_numbers = #tpu.dot_dimension_numbers<[1], [0], [0], [1], [0, 0, 1, 1], [], []>} : vector<16x32xbf16>, vector<32x96xbf16>, vector<16x96xf32> -> vector<16x96xf32>
    %23 = vector.broadcast %16 : vector<1x96xf32> to vector<16x96xf32>
    %24 = arith.addf %22, %23 : vector<16x96xf32>
    %25 = vector.extract_strided_slice %24 {offsets = [0, 0], sizes = [16, 32], strides = [1, 1]} : vector<16x96xf32> to vector<16x32xf32>
    %26 = vector.extract_strided_slice %24 {offsets = [0, 32], sizes = [16, 32], strides = [1, 1]} : vector<16x96xf32> to vector<16x32xf32>
    %27 = vector.extract_strided_slice %24 {offsets = [0, 64], sizes = [16, 32], strides = [1, 1]} : vector<16x96xf32> to vector<16x32xf32>
    %28 = vector.extract_strided_slice %25 {offsets = [0, 0], sizes = [16, 8], strides = [1, 1]} : vector<16x32xf32> to vector<16x8xf32>
    %29 = vector.extract_strided_slice %25 {offsets = [0, 8], sizes = [16, 8], strides = [1, 1]} : vector<16x32xf32> to vector<16x8xf32>
    %30 = vector.extract_strided_slice %25 {offsets = [0, 16], sizes = [16, 8], strides = [1, 1]} : vector<16x32xf32> to vector<16x8xf32>
    %31 = vector.extract_strided_slice %25 {offsets = [0, 24], sizes = [16, 8], strides = [1, 1]} : vector<16x32xf32> to vector<16x8xf32>
    %32 = vector.shape_cast %28 : vector<16x8xf32> to vector<1x16x8xf32>
    %33 = vector.shape_cast %29 : vector<16x8xf32> to vector<1x16x8xf32>
    %34 = vector.shape_cast %30 : vector<16x8xf32> to vector<1x16x8xf32>
    %35 = vector.shape_cast %31 : vector<16x8xf32> to vector<1x16x8xf32>
    %36 = tpu.concatenate %32, %33, %34, %35 in 0 : vector<1x16x8xf32>, vector<1x16x8xf32>, vector<1x16x8xf32>, vector<1x16x8xf32> -> vector<4x16x8xf32>
    %37 = arith.truncf %36 : vector<4x16x8xf32> to vector<4x16x8xbf16>
    %38 = vector.extract_strided_slice %26 {offsets = [0, 0], sizes = [16, 8], strides = [1, 1]} : vector<16x32xf32> to vector<16x8xf32>
    %39 = vector.extract_strided_slice %26 {offsets = [0, 8], sizes = [16, 8], strides = [1, 1]} : vector<16x32xf32> to vector<16x8xf32>
    %40 = vector.extract_strided_slice %26 {offsets = [0, 16], sizes = [16, 8], strides = [1, 1]} : vector<16x32xf32> to vector<16x8xf32>
    %41 = vector.extract_strided_slice %26 {offsets = [0, 24], sizes = [16, 8], strides = [1, 1]} : vector<16x32xf32> to vector<16x8xf32>
    %42 = vector.shape_cast %38 : vector<16x8xf32> to vector<1x16x8xf32>
    %43 = vector.shape_cast %39 : vector<16x8xf32> to vector<1x16x8xf32>
    %44 = vector.shape_cast %40 : vector<16x8xf32> to vector<1x16x8xf32>
    %45 = vector.shape_cast %41 : vector<16x8xf32> to vector<1x16x8xf32>
    %46 = tpu.concatenate %42, %43, %44, %45 in 0 : vector<1x16x8xf32>, vector<1x16x8xf32>, vector<1x16x8xf32>, vector<1x16x8xf32> -> vector<4x16x8xf32>
    %47 = arith.truncf %46 : vector<4x16x8xf32> to vector<4x16x8xbf16>
    %48 = vector.extract_strided_slice %27 {offsets = [0, 0], sizes = [16, 8], strides = [1, 1]} : vector<16x32xf32> to vector<16x8xf32>
    %49 = vector.extract_strided_slice %27 {offsets = [0, 8], sizes = [16, 8], strides = [1, 1]} : vector<16x32xf32> to vector<16x8xf32>
    %50 = vector.extract_strided_slice %27 {offsets = [0, 16], sizes = [16, 8], strides = [1, 1]} : vector<16x32xf32> to vector<16x8xf32>
    %51 = vector.extract_strided_slice %27 {offsets = [0, 24], sizes = [16, 8], strides = [1, 1]} : vector<16x32xf32> to vector<16x8xf32>
    %52 = vector.shape_cast %48 : vector<16x8xf32> to vector<1x16x8xf32>
    %53 = vector.shape_cast %49 : vector<16x8xf32> to vector<1x16x8xf32>
    %54 = vector.shape_cast %50 : vector<16x8xf32> to vector<1x16x8xf32>
    %55 = vector.shape_cast %51 : vector<16x8xf32> to vector<1x16x8xf32>
    %56 = tpu.concatenate %52, %53, %54, %55 in 0 : vector<1x16x8xf32>, vector<1x16x8xf32>, vector<1x16x8xf32>, vector<1x16x8xf32> -> vector<4x16x8xf32>
    %57 = arith.truncf %56 : vector<4x16x8xf32> to vector<4x16x8xbf16>
    "tpu.trace_start"() <{level = 10 : i32, message = "hqd,hkd->hqk"}> : () -> ()
    %cst_29 = arith.constant dense<0.000000e+00> : vector<4x16x16xf32>
    %58 = tpu.matmul %37, %47, %cst_29 {dimension_numbers = #tpu.dot_dimension_numbers<[2], [2], [1], [1], [0, 0, 0, 1, 1, 1], [0], [0]>} : vector<4x16x8xbf16>, vector<4x16x8xbf16>, vector<4x16x16xf32> -> vector<4x16x16xf32>
    "tpu.trace_stop"() : () -> ()
    %cst_30 = arith.constant 0.353553385 : f32
    %59 = vector.broadcast %cst_30 : f32 to vector<4x16x16xf32>
    %60 = arith.mulf %58, %59 : vector<4x16x16xf32>
    %61 = vector.shape_cast %9 : vector<16x16xf32> to vector<1x16x16xf32>
    %62 = vector.broadcast %61 : vector<1x16x16xf32> to vector<4x16x16xf32>
    %63 = arith.addf %60, %62 : vector<4x16x16xf32>
    %cst_31 = arith.constant dense<0xFF800000> : vector<4x16xf32>
    %64 = vector.multi_reduction <maximumf>, %63, %cst_31 [2] : vector<4x16x16xf32> to vector<4x16xf32>
    %65 = vector.shape_cast %64 : vector<4x16xf32> to vector<4x16x1xf32>
    %66 = vector.broadcast %65 : vector<4x16x1xf32> to vector<4x16x16xf32>
    %67 = arith.subf %63, %66 : vector<4x16x16xf32>
    %68 = math.exp %67 : vector<4x16x16xf32>
    %cst_32 = arith.constant dense<0.000000e+00> : vector<4x16xf32>
    %69 = vector.multi_reduction <add>, %68, %cst_32 [2] : vector<4x16x16xf32> to vector<4x16xf32>
    %70 = vector.shape_cast %69 : vector<4x16xf32> to vector<4x16x1xf32>
    %71 = tpu.reciprocal %70 {approx = true} : vector<4x16x1xf32> -> vector<4x16x1xf32>
    %72 = vector.broadcast %71 : vector<4x16x1xf32> to vector<4x16x16xf32>
    %73 = arith.mulf %68, %72 : vector<4x16x16xf32>
    %74 = arith.truncf %73 : vector<4x16x16xf32> to vector<4x16x16xbf16>
    "tpu.trace_start"() <{level = 10 : i32, message = "hqk,hkd->hqd"}> : () -> ()
    %cst_33 = arith.constant dense<0.000000e+00> : vector<4x16x8xf32>
    %75 = tpu.matmul %74, %57, %cst_33 {dimension_numbers = #tpu.dot_dimension_numbers<[2], [1], [1], [2], [0, 0, 0, 1, 1, 2], [0], [0]>} : vector<4x16x16xbf16>, vector<4x16x8xbf16>, vector<4x16x8xf32> -> vector<4x16x8xf32>
    "tpu.trace_stop"() : () -> ()
    %76 = vector.extract_strided_slice %75 {offsets = [0, 0, 0], sizes = [1, 16, 8], strides = [1, 1, 1]} : vector<4x16x8xf32> to vector<1x16x8xf32>
    %77 = vector.shape_cast %76 : vector<1x16x8xf32> to vector<16x8xf32>
    %78 = vector.extract_strided_slice %75 {offsets = [1, 0, 0], sizes = [1, 16, 8], strides = [1, 1, 1]} : vector<4x16x8xf32> to vector<1x16x8xf32>
    %79 = vector.shape_cast %78 : vector<1x16x8xf32> to vector<16x8xf32>
    %80 = vector.extract_strided_slice %75 {offsets = [2, 0, 0], sizes = [1, 16, 8], strides = [1, 1, 1]} : vector<4x16x8xf32> to vector<1x16x8xf32>
    %81 = vector.shape_cast %80 : vector<1x16x8xf32> to vector<16x8xf32>
    %82 = vector.extract_strided_slice %75 {offsets = [3, 0, 0], sizes = [1, 16, 8], strides = [1, 1, 1]} : vector<4x16x8xf32> to vector<1x16x8xf32>
    %83 = vector.shape_cast %82 : vector<1x16x8xf32> to vector<16x8xf32>
    %84 = tpu.concatenate %77, %79, %81, %83 in 1 : vector<16x8xf32>, vector<16x8xf32>, vector<16x8xf32>, vector<16x8xf32> -> vector<16x32xf32>
    %85 = arith.truncf %84 : vector<16x32xf32> to vector<16x32xbf16>
    %cst_34 = arith.constant dense<0.000000e+00> : vector<16x32xf32>
    %86 = tpu.matmul %85, %18, %cst_34 {dimension_numbers = #tpu.dot_dimension_numbers<[1], [0], [0], [1], [0, 0, 1, 1], [], []>} : vector<16x32xbf16>, vector<32x32xbf16>, vector<16x32xf32> -> vector<16x32xf32>
    %87 = vector.broadcast %20 : vector<1x32xf32> to vector<16x32xf32>
    %88 = arith.addf %86, %87 : vector<16x32xf32>
    %89 = arith.addf %7, %88 : vector<16x32xf32>
    %90 = vector.extract_strided_slice %12 {offsets = [0, 0], sizes = [1, 32], strides = [1, 1]} : vector<6x32xf32> to vector<1x32xf32>
    %91 = vector.extract_strided_slice %12 {offsets = [1, 0], sizes = [1, 32], strides = [1, 1]} : vector<6x32xf32> to vector<1x32xf32>
    %cst_35 = arith.constant dense<0.000000e+00> : vector<16xf32>
    %92 = vector.multi_reduction <add>, %89, %cst_35 [1] : vector<16x32xf32> to vector<16xf32>
    %93 = vector.shape_cast %92 : vector<16xf32> to vector<16x1xf32>
    %cst_36 = arith.constant 3.200000e+01 : f32
    %94 = vector.broadcast %cst_36 : f32 to vector<16x1xf32>
    %95 = arith.divf %93, %94 : vector<16x1xf32>
    %96 = vector.broadcast %95 : vector<16x1xf32> to vector<16x32xf32>
    %97 = arith.subf %89, %96 : vector<16x32xf32>
    %98 = arith.mulf %97, %97 : vector<16x32xf32>
    %cst_37 = arith.constant dense<0.000000e+00> : vector<16xf32>
    %99 = vector.multi_reduction <add>, %98, %cst_37 [1] : vector<16x32xf32> to vector<16xf32>
    %100 = vector.shape_cast %99 : vector<16xf32> to vector<16x1xf32>
    %cst_38 = arith.constant 3.200000e+01 : f32
    %101 = vector.broadcast %cst_38 : f32 to vector<16x1xf32>
    %102 = arith.divf %100, %101 : vector<16x1xf32>
    %103 = vector.broadcast %95 : vector<16x1xf32> to vector<16x32xf32>
    %104 = arith.subf %89, %103 : vector<16x32xf32>
    %cst_39 = arith.constant 9.99999974E-6 : f32
    %105 = vector.broadcast %cst_39 : f32 to vector<16x1xf32>
    %106 = arith.addf %102, %105 : vector<16x1xf32>
    %107 = math.rsqrt %106 : vector<16x1xf32>
    %108 = vector.broadcast %107 : vector<16x1xf32> to vector<16x32xf32>
    %109 = arith.mulf %104, %108 : vector<16x32xf32>
    %110 = vector.broadcast %90 : vector<1x32xf32> to vector<16x32xf32>
    %111 = arith.mulf %109, %110 : vector<16x32xf32>
    %112 = vector.broadcast %91 : vector<1x32xf32> to vector<16x32xf32>
    %113 = arith.addf %111, %112 : vector<16x32xf32>
    %c0_40 = arith.constant 0 : index
    %c1 = arith.constant 1 : index
    %c0_41 = arith.constant 0 : index
    %c0_42 = arith.constant 0 : index
    %114 = vector.load %arg6[%c0_40, %c1, %c0_41, %c0_42] : memref<2x2x32x96xbf16, #tpu.memory_space<vmem>>, vector<1x1x32x96xbf16>
    %115 = vector.shape_cast %114 : vector<1x1x32x96xbf16> to vector<32x96xbf16>
    %c0_43 = arith.constant 0 : index
    %c1_44 = arith.constant 1 : index
    %c0_45 = arith.constant 0 : index
    %c0_46 = arith.constant 0 : index
    %116 = vector.load %arg7[%c0_43, %c1_44, %c0_45, %c0_46] : memref<2x2x1x96xf32, #tpu.memory_space<vmem>>, vector<1x1x1x96xf32>
    %117 = vector.shape_cast %116 : vector<1x1x1x96xf32> to vector<1x96xf32>
    %c0_47 = arith.constant 0 : index
    %c1_48 = arith.constant 1 : index
    %c0_49 = arith.constant 0 : index
    %c0_50 = arith.constant 0 : index
    %118 = vector.load %arg8[%c0_47, %c1_48, %c0_49, %c0_50] : memref<2x2x32x32xbf16, #tpu.memory_space<vmem>>, vector<1x1x32x32xbf16>
    %119 = vector.shape_cast %118 : vector<1x1x32x32xbf16> to vector<32x32xbf16>
    %c0_51 = arith.constant 0 : index
    %c1_52 = arith.constant 1 : index
    %c0_53 = arith.constant 0 : index
    %c0_54 = arith.constant 0 : index
    %120 = vector.load %arg9[%c0_51, %c1_52, %c0_53, %c0_54] : memref<2x2x1x32xf32, #tpu.memory_space<vmem>>, vector<1x1x1x32xf32>
    %121 = vector.shape_cast %120 : vector<1x1x1x32xf32> to vector<1x32xf32>
    %122 = arith.truncf %113 : vector<16x32xf32> to vector<16x32xbf16>
    %123 = arith.truncf %8 : vector<32x32xf32> to vector<32x32xbf16>
    %124 = vector.extract_strided_slice %115 {offsets = [0, 0], sizes = [32, 32], strides = [1, 1]} : vector<32x96xbf16> to vector<32x32xbf16>
    %cst_55 = arith.constant dense<0.000000e+00> : vector<16x32xf32>
    %125 = tpu.matmul %122, %124, %cst_55 {dimension_numbers = #tpu.dot_dimension_numbers<[1], [0], [0], [1], [0, 0, 1, 1], [], []>} : vector<16x32xbf16>, vector<32x32xbf16>, vector<16x32xf32> -> vector<16x32xf32>
    %126 = vector.extract_strided_slice %117 {offsets = [0, 0], sizes = [1, 32], strides = [1, 1]} : vector<1x96xf32> to vector<1x32xf32>
    %127 = vector.broadcast %126 : vector<1x32xf32> to vector<16x32xf32>
    %128 = arith.addf %125, %127 : vector<16x32xf32>
    %129 = vector.extract_strided_slice %115 {offsets = [0, 32], sizes = [32, 64], strides = [1, 1]} : vector<32x96xbf16> to vector<32x64xbf16>
    %cst_56 = arith.constant dense<0.000000e+00> : vector<32x64xf32>
    %130 = tpu.matmul %123, %129, %cst_56 {dimension_numbers = #tpu.dot_dimension_numbers<[1], [0], [0], [1], [0, 0, 1, 1], [], []>} : vector<32x32xbf16>, vector<32x64xbf16>, vector<32x64xf32> -> vector<32x64xf32>
    %131 = vector.extract_strided_slice %117 {offsets = [0, 32], sizes = [1, 64], strides = [1, 1]} : vector<1x96xf32> to vector<1x64xf32>
    %132 = vector.broadcast %131 : vector<1x64xf32> to vector<32x64xf32>
    %133 = arith.addf %130, %132 : vector<32x64xf32>
    %134 = vector.extract_strided_slice %133 {offsets = [0, 0], sizes = [32, 32], strides = [1, 1]} : vector<32x64xf32> to vector<32x32xf32>
    %135 = vector.extract_strided_slice %133 {offsets = [0, 32], sizes = [32, 32], strides = [1, 1]} : vector<32x64xf32> to vector<32x32xf32>
    %136 = vector.extract_strided_slice %128 {offsets = [0, 0], sizes = [16, 8], strides = [1, 1]} : vector<16x32xf32> to vector<16x8xf32>
    %137 = vector.extract_strided_slice %128 {offsets = [0, 8], sizes = [16, 8], strides = [1, 1]} : vector<16x32xf32> to vector<16x8xf32>
    %138 = vector.extract_strided_slice %128 {offsets = [0, 16], sizes = [16, 8], strides = [1, 1]} : vector<16x32xf32> to vector<16x8xf32>
    %139 = vector.extract_strided_slice %128 {offsets = [0, 24], sizes = [16, 8], strides = [1, 1]} : vector<16x32xf32> to vector<16x8xf32>
    %140 = vector.shape_cast %136 : vector<16x8xf32> to vector<1x16x8xf32>
    %141 = vector.shape_cast %137 : vector<16x8xf32> to vector<1x16x8xf32>
    %142 = vector.shape_cast %138 : vector<16x8xf32> to vector<1x16x8xf32>
    %143 = vector.shape_cast %139 : vector<16x8xf32> to vector<1x16x8xf32>
    %144 = tpu.concatenate %140, %141, %142, %143 in 0 : vector<1x16x8xf32>, vector<1x16x8xf32>, vector<1x16x8xf32>, vector<1x16x8xf32> -> vector<4x16x8xf32>
    %145 = arith.truncf %144 : vector<4x16x8xf32> to vector<4x16x8xbf16>
    %146 = vector.extract_strided_slice %134 {offsets = [0, 0], sizes = [32, 8], strides = [1, 1]} : vector<32x32xf32> to vector<32x8xf32>
    %147 = vector.extract_strided_slice %134 {offsets = [0, 8], sizes = [32, 8], strides = [1, 1]} : vector<32x32xf32> to vector<32x8xf32>
    %148 = vector.extract_strided_slice %134 {offsets = [0, 16], sizes = [32, 8], strides = [1, 1]} : vector<32x32xf32> to vector<32x8xf32>
    %149 = vector.extract_strided_slice %134 {offsets = [0, 24], sizes = [32, 8], strides = [1, 1]} : vector<32x32xf32> to vector<32x8xf32>
    %150 = vector.shape_cast %146 : vector<32x8xf32> to vector<1x32x8xf32>
    %151 = vector.shape_cast %147 : vector<32x8xf32> to vector<1x32x8xf32>
    %152 = vector.shape_cast %148 : vector<32x8xf32> to vector<1x32x8xf32>
    %153 = vector.shape_cast %149 : vector<32x8xf32> to vector<1x32x8xf32>
    %154 = tpu.concatenate %150, %151, %152, %153 in 0 : vector<1x32x8xf32>, vector<1x32x8xf32>, vector<1x32x8xf32>, vector<1x32x8xf32> -> vector<4x32x8xf32>
    %155 = arith.truncf %154 : vector<4x32x8xf32> to vector<4x32x8xbf16>
    %156 = vector.extract_strided_slice %135 {offsets = [0, 0], sizes = [32, 8], strides = [1, 1]} : vector<32x32xf32> to vector<32x8xf32>
    %157 = vector.extract_strided_slice %135 {offsets = [0, 8], sizes = [32, 8], strides = [1, 1]} : vector<32x32xf32> to vector<32x8xf32>
    %158 = vector.extract_strided_slice %135 {offsets = [0, 16], sizes = [32, 8], strides = [1, 1]} : vector<32x32xf32> to vector<32x8xf32>
    %159 = vector.extract_strided_slice %135 {offsets = [0, 24], sizes = [32, 8], strides = [1, 1]} : vector<32x32xf32> to vector<32x8xf32>
    %160 = vector.shape_cast %156 : vector<32x8xf32> to vector<1x32x8xf32>
    %161 = vector.shape_cast %157 : vector<32x8xf32> to vector<1x32x8xf32>
    %162 = vector.shape_cast %158 : vector<32x8xf32> to vector<1x32x8xf32>
    %163 = vector.shape_cast %159 : vector<32x8xf32> to vector<1x32x8xf32>
    %164 = tpu.concatenate %160, %161, %162, %163 in 0 : vector<1x32x8xf32>, vector<1x32x8xf32>, vector<1x32x8xf32>, vector<1x32x8xf32> -> vector<4x32x8xf32>
    %165 = arith.truncf %164 : vector<4x32x8xf32> to vector<4x32x8xbf16>
    "tpu.trace_start"() <{level = 10 : i32, message = "hqd,hkd->hqk"}> : () -> ()
    %cst_57 = arith.constant dense<0.000000e+00> : vector<4x16x32xf32>
    %166 = tpu.matmul %145, %155, %cst_57 {dimension_numbers = #tpu.dot_dimension_numbers<[2], [2], [1], [1], [0, 0, 0, 1, 1, 1], [0], [0]>} : vector<4x16x8xbf16>, vector<4x32x8xbf16>, vector<4x16x32xf32> -> vector<4x16x32xf32>
    "tpu.trace_stop"() : () -> ()
    %cst_58 = arith.constant 0.353553385 : f32
    %167 = vector.broadcast %cst_58 : f32 to vector<4x16x32xf32>
    %168 = arith.mulf %166, %167 : vector<4x16x32xf32>
    %169 = vector.shape_cast %10 : vector<16x32xf32> to vector<1x16x32xf32>
    %170 = vector.broadcast %169 : vector<1x16x32xf32> to vector<4x16x32xf32>
    %171 = arith.addf %168, %170 : vector<4x16x32xf32>
    %cst_59 = arith.constant dense<0xFF800000> : vector<4x16xf32>
    %172 = vector.multi_reduction <maximumf>, %171, %cst_59 [2] : vector<4x16x32xf32> to vector<4x16xf32>
    %173 = vector.shape_cast %172 : vector<4x16xf32> to vector<4x16x1xf32>
    %174 = vector.broadcast %173 : vector<4x16x1xf32> to vector<4x16x32xf32>
    %175 = arith.subf %171, %174 : vector<4x16x32xf32>
    %176 = math.exp %175 : vector<4x16x32xf32>
    %cst_60 = arith.constant dense<0.000000e+00> : vector<4x16xf32>
    %177 = vector.multi_reduction <add>, %176, %cst_60 [2] : vector<4x16x32xf32> to vector<4x16xf32>
    %178 = vector.shape_cast %177 : vector<4x16xf32> to vector<4x16x1xf32>
    %179 = tpu.reciprocal %178 {approx = true} : vector<4x16x1xf32> -> vector<4x16x1xf32>
    %180 = vector.broadcast %179 : vector<4x16x1xf32> to vector<4x16x32xf32>
    %181 = arith.mulf %176, %180 : vector<4x16x32xf32>
    %182 = arith.truncf %181 : vector<4x16x32xf32> to vector<4x16x32xbf16>
    "tpu.trace_start"() <{level = 10 : i32, message = "hqk,hkd->hqd"}> : () -> ()
    %cst_61 = arith.constant dense<0.000000e+00> : vector<4x16x8xf32>
    %183 = tpu.matmul %182, %165, %cst_61 {dimension_numbers = #tpu.dot_dimension_numbers<[2], [1], [1], [2], [0, 0, 0, 1, 1, 2], [0], [0]>} : vector<4x16x32xbf16>, vector<4x32x8xbf16>, vector<4x16x8xf32> -> vector<4x16x8xf32>
    "tpu.trace_stop"() : () -> ()
    %184 = vector.extract_strided_slice %183 {offsets = [0, 0, 0], sizes = [1, 16, 8], strides = [1, 1, 1]} : vector<4x16x8xf32> to vector<1x16x8xf32>
    %185 = vector.shape_cast %184 : vector<1x16x8xf32> to vector<16x8xf32>
    %186 = vector.extract_strided_slice %183 {offsets = [1, 0, 0], sizes = [1, 16, 8], strides = [1, 1, 1]} : vector<4x16x8xf32> to vector<1x16x8xf32>
    %187 = vector.shape_cast %186 : vector<1x16x8xf32> to vector<16x8xf32>
    %188 = vector.extract_strided_slice %183 {offsets = [2, 0, 0], sizes = [1, 16, 8], strides = [1, 1, 1]} : vector<4x16x8xf32> to vector<1x16x8xf32>
    %189 = vector.shape_cast %188 : vector<1x16x8xf32> to vector<16x8xf32>
    %190 = vector.extract_strided_slice %183 {offsets = [3, 0, 0], sizes = [1, 16, 8], strides = [1, 1, 1]} : vector<4x16x8xf32> to vector<1x16x8xf32>
    %191 = vector.shape_cast %190 : vector<1x16x8xf32> to vector<16x8xf32>
    %192 = tpu.concatenate %185, %187, %189, %191 in 1 : vector<16x8xf32>, vector<16x8xf32>, vector<16x8xf32>, vector<16x8xf32> -> vector<16x32xf32>
    %193 = arith.truncf %192 : vector<16x32xf32> to vector<16x32xbf16>
    %cst_62 = arith.constant dense<0.000000e+00> : vector<16x32xf32>
    %194 = tpu.matmul %193, %119, %cst_62 {dimension_numbers = #tpu.dot_dimension_numbers<[1], [0], [0], [1], [0, 0, 1, 1], [], []>} : vector<16x32xbf16>, vector<32x32xbf16>, vector<16x32xf32> -> vector<16x32xf32>
    %195 = vector.broadcast %121 : vector<1x32xf32> to vector<16x32xf32>
    %196 = arith.addf %194, %195 : vector<16x32xf32>
    %197 = arith.addf %113, %196 : vector<16x32xf32>
    %198 = vector.extract_strided_slice %12 {offsets = [2, 0], sizes = [1, 32], strides = [1, 1]} : vector<6x32xf32> to vector<1x32xf32>
    %199 = vector.extract_strided_slice %12 {offsets = [3, 0], sizes = [1, 32], strides = [1, 1]} : vector<6x32xf32> to vector<1x32xf32>
    %cst_63 = arith.constant dense<0.000000e+00> : vector<16xf32>
    %200 = vector.multi_reduction <add>, %197, %cst_63 [1] : vector<16x32xf32> to vector<16xf32>
    %201 = vector.shape_cast %200 : vector<16xf32> to vector<16x1xf32>
    %cst_64 = arith.constant 3.200000e+01 : f32
    %202 = vector.broadcast %cst_64 : f32 to vector<16x1xf32>
    %203 = arith.divf %201, %202 : vector<16x1xf32>
    %204 = vector.broadcast %203 : vector<16x1xf32> to vector<16x32xf32>
    %205 = arith.subf %197, %204 : vector<16x32xf32>
    %206 = arith.mulf %205, %205 : vector<16x32xf32>
    %cst_65 = arith.constant dense<0.000000e+00> : vector<16xf32>
    %207 = vector.multi_reduction <add>, %206, %cst_65 [1] : vector<16x32xf32> to vector<16xf32>
    %208 = vector.shape_cast %207 : vector<16xf32> to vector<16x1xf32>
    %cst_66 = arith.constant 3.200000e+01 : f32
    %209 = vector.broadcast %cst_66 : f32 to vector<16x1xf32>
    %210 = arith.divf %208, %209 : vector<16x1xf32>
    %211 = vector.broadcast %203 : vector<16x1xf32> to vector<16x32xf32>
    %212 = arith.subf %197, %211 : vector<16x32xf32>
    %cst_67 = arith.constant 9.99999974E-6 : f32
    %213 = vector.broadcast %cst_67 : f32 to vector<16x1xf32>
    %214 = arith.addf %210, %213 : vector<16x1xf32>
    %215 = math.rsqrt %214 : vector<16x1xf32>
    %216 = vector.broadcast %215 : vector<16x1xf32> to vector<16x32xf32>
    %217 = arith.mulf %212, %216 : vector<16x32xf32>
    %218 = vector.broadcast %198 : vector<1x32xf32> to vector<16x32xf32>
    %219 = arith.mulf %217, %218 : vector<16x32xf32>
    %220 = vector.broadcast %199 : vector<1x32xf32> to vector<16x32xf32>
    %221 = arith.addf %219, %220 : vector<16x32xf32>
    %222 = arith.truncf %221 : vector<16x32xf32> to vector<16x32xbf16>
    %c0_68 = arith.constant 0 : index
    %c0_69 = arith.constant 0 : index
    %c0_70 = arith.constant 0 : index
    %223 = vector.load %arg11[%c0_68, %c0_69, %c0_70] : memref<2x32x64xbf16, #tpu.memory_space<vmem>>, vector<1x32x64xbf16>
    %224 = vector.shape_cast %223 : vector<1x32x64xbf16> to vector<32x64xbf16>
    %cst_71 = arith.constant dense<0.000000e+00> : vector<16x64xf32>
    %225 = tpu.matmul %222, %224, %cst_71 {dimension_numbers = #tpu.dot_dimension_numbers<[1], [0], [0], [1], [0, 0, 1, 1], [], []>} : vector<16x32xbf16>, vector<32x64xbf16>, vector<16x64xf32> -> vector<16x64xf32>
    %c0_72 = arith.constant 0 : index
    %c0_73 = arith.constant 0 : index
    %c0_74 = arith.constant 0 : index
    %226 = vector.load %arg12[%c0_72, %c0_73, %c0_74] : memref<2x1x64xf32, #tpu.memory_space<vmem>>, vector<1x1x64xf32>
    %227 = vector.shape_cast %226 : vector<1x1x64xf32> to vector<1x64xf32>
    %228 = vector.broadcast %227 : vector<1x64xf32> to vector<16x64xf32>
    %229 = arith.addf %225, %228 : vector<16x64xf32>
    %cst_75 = arith.constant 0.000000e+00 : f32
    %230 = vector.broadcast %cst_75 : f32 to vector<16x64xf32>
    %231 = arith.maximumf %229, %230 : vector<16x64xf32>
    %232 = arith.truncf %231 : vector<16x64xf32> to vector<16x64xbf16>
    %c0_76 = arith.constant 0 : index
    %c0_77 = arith.constant 0 : index
    %c0_78 = arith.constant 0 : index
    %233 = vector.load %arg13[%c0_76, %c0_77, %c0_78] : memref<2x64x32xbf16, #tpu.memory_space<vmem>>, vector<1x64x32xbf16>
    %234 = vector.shape_cast %233 : vector<1x64x32xbf16> to vector<64x32xbf16>
    %cst_79 = arith.constant dense<0.000000e+00> : vector<16x32xf32>
    %235 = tpu.matmul %232, %234, %cst_79 {dimension_numbers = #tpu.dot_dimension_numbers<[1], [0], [0], [1], [0, 0, 1, 1], [], []>} : vector<16x64xbf16>, vector<64x32xbf16>, vector<16x32xf32> -> vector<16x32xf32>
    %c0_80 = arith.constant 0 : index
    %c0_81 = arith.constant 0 : index
    %c0_82 = arith.constant 0 : index
    %236 = vector.load %arg14[%c0_80, %c0_81, %c0_82] : memref<2x1x32xf32, #tpu.memory_space<vmem>>, vector<1x1x32xf32>
    %237 = vector.shape_cast %236 : vector<1x1x32xf32> to vector<1x32xf32>
    %238 = vector.broadcast %237 : vector<1x32xf32> to vector<16x32xf32>
    %239 = arith.addf %235, %238 : vector<16x32xf32>
    %240 = arith.addf %221, %239 : vector<16x32xf32>
    %241 = vector.extract_strided_slice %12 {offsets = [4, 0], sizes = [1, 32], strides = [1, 1]} : vector<6x32xf32> to vector<1x32xf32>
    %242 = vector.extract_strided_slice %12 {offsets = [5, 0], sizes = [1, 32], strides = [1, 1]} : vector<6x32xf32> to vector<1x32xf32>
    %cst_83 = arith.constant dense<0.000000e+00> : vector<16xf32>
    %243 = vector.multi_reduction <add>, %240, %cst_83 [1] : vector<16x32xf32> to vector<16xf32>
    %244 = vector.shape_cast %243 : vector<16xf32> to vector<16x1xf32>
    %cst_84 = arith.constant 3.200000e+01 : f32
    %245 = vector.broadcast %cst_84 : f32 to vector<16x1xf32>
    %246 = arith.divf %244, %245 : vector<16x1xf32>
    %247 = vector.broadcast %246 : vector<16x1xf32> to vector<16x32xf32>
    %248 = arith.subf %240, %247 : vector<16x32xf32>
    %249 = arith.mulf %248, %248 : vector<16x32xf32>
    %cst_85 = arith.constant dense<0.000000e+00> : vector<16xf32>
    %250 = vector.multi_reduction <add>, %249, %cst_85 [1] : vector<16x32xf32> to vector<16xf32>
    %251 = vector.shape_cast %250 : vector<16xf32> to vector<16x1xf32>
    %cst_86 = arith.constant 3.200000e+01 : f32
    %252 = vector.broadcast %cst_86 : f32 to vector<16x1xf32>
    %253 = arith.divf %251, %252 : vector<16x1xf32>
    %254 = vector.broadcast %246 : vector<16x1xf32> to vector<16x32xf32>
    %255 = arith.subf %240, %254 : vector<16x32xf32>
    %cst_87 = arith.constant 9.99999974E-6 : f32
    %256 = vector.broadcast %cst_87 : f32 to vector<16x1xf32>
    %257 = arith.addf %253, %256 : vector<16x1xf32>
    %258 = math.rsqrt %257 : vector<16x1xf32>
    %259 = vector.broadcast %258 : vector<16x1xf32> to vector<16x32xf32>
    %260 = arith.mulf %255, %259 : vector<16x32xf32>
    %261 = vector.broadcast %241 : vector<1x32xf32> to vector<16x32xf32>
    %262 = arith.mulf %260, %261 : vector<16x32xf32>
    %263 = vector.broadcast %242 : vector<1x32xf32> to vector<16x32xf32>
    %264 = arith.addf %262, %263 : vector<16x32xf32>
    %c1_88 = arith.constant 1 : index
    %c0_89 = arith.constant 0 : index
    %c0_90 = arith.constant 0 : index
    %265 = vector.load %arg10[%c1_88, %c0_89, %c0_90] : memref<2x6x32xf32, #tpu.memory_space<vmem>>, vector<1x6x32xf32>
    %266 = vector.shape_cast %265 : vector<1x6x32xf32> to vector<6x32xf32>
    %c1_91 = arith.constant 1 : index
    %c0_92 = arith.constant 0 : index
    %c0_93 = arith.constant 0 : index
    %c0_94 = arith.constant 0 : index
    %267 = vector.load %arg6[%c1_91, %c0_92, %c0_93, %c0_94] : memref<2x2x32x96xbf16, #tpu.memory_space<vmem>>, vector<1x1x32x96xbf16>
    %268 = vector.shape_cast %267 : vector<1x1x32x96xbf16> to vector<32x96xbf16>
    %c1_95 = arith.constant 1 : index
    %c0_96 = arith.constant 0 : index
    %c0_97 = arith.constant 0 : index
    %c0_98 = arith.constant 0 : index
    %269 = vector.load %arg7[%c1_95, %c0_96, %c0_97, %c0_98] : memref<2x2x1x96xf32, #tpu.memory_space<vmem>>, vector<1x1x1x96xf32>
    %270 = vector.shape_cast %269 : vector<1x1x1x96xf32> to vector<1x96xf32>
    %c1_99 = arith.constant 1 : index
    %c0_100 = arith.constant 0 : index
    %c0_101 = arith.constant 0 : index
    %c0_102 = arith.constant 0 : index
    %271 = vector.load %arg8[%c1_99, %c0_100, %c0_101, %c0_102] : memref<2x2x32x32xbf16, #tpu.memory_space<vmem>>, vector<1x1x32x32xbf16>
    %272 = vector.shape_cast %271 : vector<1x1x32x32xbf16> to vector<32x32xbf16>
    %c1_103 = arith.constant 1 : index
    %c0_104 = arith.constant 0 : index
    %c0_105 = arith.constant 0 : index
    %c0_106 = arith.constant 0 : index
    %273 = vector.load %arg9[%c1_103, %c0_104, %c0_105, %c0_106] : memref<2x2x1x32xf32, #tpu.memory_space<vmem>>, vector<1x1x1x32xf32>
    %274 = vector.shape_cast %273 : vector<1x1x1x32xf32> to vector<1x32xf32>
    %275 = arith.truncf %264 : vector<16x32xf32> to vector<16x32xbf16>
    %cst_107 = arith.constant dense<0.000000e+00> : vector<16x96xf32>
    %276 = tpu.matmul %275, %268, %cst_107 {dimension_numbers = #tpu.dot_dimension_numbers<[1], [0], [0], [1], [0, 0, 1, 1], [], []>} : vector<16x32xbf16>, vector<32x96xbf16>, vector<16x96xf32> -> vector<16x96xf32>
    %277 = vector.broadcast %270 : vector<1x96xf32> to vector<16x96xf32>
    %278 = arith.addf %276, %277 : vector<16x96xf32>
    %279 = vector.extract_strided_slice %278 {offsets = [0, 0], sizes = [16, 32], strides = [1, 1]} : vector<16x96xf32> to vector<16x32xf32>
    %280 = vector.extract_strided_slice %278 {offsets = [0, 32], sizes = [16, 32], strides = [1, 1]} : vector<16x96xf32> to vector<16x32xf32>
    %281 = vector.extract_strided_slice %278 {offsets = [0, 64], sizes = [16, 32], strides = [1, 1]} : vector<16x96xf32> to vector<16x32xf32>
    %282 = vector.extract_strided_slice %279 {offsets = [0, 0], sizes = [16, 8], strides = [1, 1]} : vector<16x32xf32> to vector<16x8xf32>
    %283 = vector.extract_strided_slice %279 {offsets = [0, 8], sizes = [16, 8], strides = [1, 1]} : vector<16x32xf32> to vector<16x8xf32>
    %284 = vector.extract_strided_slice %279 {offsets = [0, 16], sizes = [16, 8], strides = [1, 1]} : vector<16x32xf32> to vector<16x8xf32>
    %285 = vector.extract_strided_slice %279 {offsets = [0, 24], sizes = [16, 8], strides = [1, 1]} : vector<16x32xf32> to vector<16x8xf32>
    %286 = vector.shape_cast %282 : vector<16x8xf32> to vector<1x16x8xf32>
    %287 = vector.shape_cast %283 : vector<16x8xf32> to vector<1x16x8xf32>
    %288 = vector.shape_cast %284 : vector<16x8xf32> to vector<1x16x8xf32>
    %289 = vector.shape_cast %285 : vector<16x8xf32> to vector<1x16x8xf32>
    %290 = tpu.concatenate %286, %287, %288, %289 in 0 : vector<1x16x8xf32>, vector<1x16x8xf32>, vector<1x16x8xf32>, vector<1x16x8xf32> -> vector<4x16x8xf32>
    %291 = arith.truncf %290 : vector<4x16x8xf32> to vector<4x16x8xbf16>
    %292 = vector.extract_strided_slice %280 {offsets = [0, 0], sizes = [16, 8], strides = [1, 1]} : vector<16x32xf32> to vector<16x8xf32>
    %293 = vector.extract_strided_slice %280 {offsets = [0, 8], sizes = [16, 8], strides = [1, 1]} : vector<16x32xf32> to vector<16x8xf32>
    %294 = vector.extract_strided_slice %280 {offsets = [0, 16], sizes = [16, 8], strides = [1, 1]} : vector<16x32xf32> to vector<16x8xf32>
    %295 = vector.extract_strided_slice %280 {offsets = [0, 24], sizes = [16, 8], strides = [1, 1]} : vector<16x32xf32> to vector<16x8xf32>
    %296 = vector.shape_cast %292 : vector<16x8xf32> to vector<1x16x8xf32>
    %297 = vector.shape_cast %293 : vector<16x8xf32> to vector<1x16x8xf32>
    %298 = vector.shape_cast %294 : vector<16x8xf32> to vector<1x16x8xf32>
    %299 = vector.shape_cast %295 : vector<16x8xf32> to vector<1x16x8xf32>
    %300 = tpu.concatenate %296, %297, %298, %299 in 0 : vector<1x16x8xf32>, vector<1x16x8xf32>, vector<1x16x8xf32>, vector<1x16x8xf32> -> vector<4x16x8xf32>
    %301 = arith.truncf %300 : vector<4x16x8xf32> to vector<4x16x8xbf16>
    %302 = vector.extract_strided_slice %281 {offsets = [0, 0], sizes = [16, 8], strides = [1, 1]} : vector<16x32xf32> to vector<16x8xf32>
    %303 = vector.extract_strided_slice %281 {offsets = [0, 8], sizes = [16, 8], strides = [1, 1]} : vector<16x32xf32> to vector<16x8xf32>
    %304 = vector.extract_strided_slice %281 {offsets = [0, 16], sizes = [16, 8], strides = [1, 1]} : vector<16x32xf32> to vector<16x8xf32>
    %305 = vector.extract_strided_slice %281 {offsets = [0, 24], sizes = [16, 8], strides = [1, 1]} : vector<16x32xf32> to vector<16x8xf32>
    %306 = vector.shape_cast %302 : vector<16x8xf32> to vector<1x16x8xf32>
    %307 = vector.shape_cast %303 : vector<16x8xf32> to vector<1x16x8xf32>
    %308 = vector.shape_cast %304 : vector<16x8xf32> to vector<1x16x8xf32>
    %309 = vector.shape_cast %305 : vector<16x8xf32> to vector<1x16x8xf32>
    %310 = tpu.concatenate %306, %307, %308, %309 in 0 : vector<1x16x8xf32>, vector<1x16x8xf32>, vector<1x16x8xf32>, vector<1x16x8xf32> -> vector<4x16x8xf32>
    %311 = arith.truncf %310 : vector<4x16x8xf32> to vector<4x16x8xbf16>
    "tpu.trace_start"() <{level = 10 : i32, message = "hqd,hkd->hqk"}> : () -> ()
    %cst_108 = arith.constant dense<0.000000e+00> : vector<4x16x16xf32>
    %312 = tpu.matmul %291, %301, %cst_108 {dimension_numbers = #tpu.dot_dimension_numbers<[2], [2], [1], [1], [0, 0, 0, 1, 1, 1], [0], [0]>} : vector<4x16x8xbf16>, vector<4x16x8xbf16>, vector<4x16x16xf32> -> vector<4x16x16xf32>
    "tpu.trace_stop"() : () -> ()
    %cst_109 = arith.constant 0.353553385 : f32
    %313 = vector.broadcast %cst_109 : f32 to vector<4x16x16xf32>
    %314 = arith.mulf %312, %313 : vector<4x16x16xf32>
    %315 = vector.shape_cast %9 : vector<16x16xf32> to vector<1x16x16xf32>
    %316 = vector.broadcast %315 : vector<1x16x16xf32> to vector<4x16x16xf32>
    %317 = arith.addf %314, %316 : vector<4x16x16xf32>
    %cst_110 = arith.constant dense<0xFF800000> : vector<4x16xf32>
    %318 = vector.multi_reduction <maximumf>, %317, %cst_110 [2] : vector<4x16x16xf32> to vector<4x16xf32>
    %319 = vector.shape_cast %318 : vector<4x16xf32> to vector<4x16x1xf32>
    %320 = vector.broadcast %319 : vector<4x16x1xf32> to vector<4x16x16xf32>
    %321 = arith.subf %317, %320 : vector<4x16x16xf32>
    %322 = math.exp %321 : vector<4x16x16xf32>
    %cst_111 = arith.constant dense<0.000000e+00> : vector<4x16xf32>
    %323 = vector.multi_reduction <add>, %322, %cst_111 [2] : vector<4x16x16xf32> to vector<4x16xf32>
    %324 = vector.shape_cast %323 : vector<4x16xf32> to vector<4x16x1xf32>
    %325 = tpu.reciprocal %324 {approx = true} : vector<4x16x1xf32> -> vector<4x16x1xf32>
    %326 = vector.broadcast %325 : vector<4x16x1xf32> to vector<4x16x16xf32>
    %327 = arith.mulf %322, %326 : vector<4x16x16xf32>
    %328 = arith.truncf %327 : vector<4x16x16xf32> to vector<4x16x16xbf16>
    "tpu.trace_start"() <{level = 10 : i32, message = "hqk,hkd->hqd"}> : () -> ()
    %cst_112 = arith.constant dense<0.000000e+00> : vector<4x16x8xf32>
    %329 = tpu.matmul %328, %311, %cst_112 {dimension_numbers = #tpu.dot_dimension_numbers<[2], [1], [1], [2], [0, 0, 0, 1, 1, 2], [0], [0]>} : vector<4x16x16xbf16>, vector<4x16x8xbf16>, vector<4x16x8xf32> -> vector<4x16x8xf32>
    "tpu.trace_stop"() : () -> ()
    %330 = vector.extract_strided_slice %329 {offsets = [0, 0, 0], sizes = [1, 16, 8], strides = [1, 1, 1]} : vector<4x16x8xf32> to vector<1x16x8xf32>
    %331 = vector.shape_cast %330 : vector<1x16x8xf32> to vector<16x8xf32>
    %332 = vector.extract_strided_slice %329 {offsets = [1, 0, 0], sizes = [1, 16, 8], strides = [1, 1, 1]} : vector<4x16x8xf32> to vector<1x16x8xf32>
    %333 = vector.shape_cast %332 : vector<1x16x8xf32> to vector<16x8xf32>
    %334 = vector.extract_strided_slice %329 {offsets = [2, 0, 0], sizes = [1, 16, 8], strides = [1, 1, 1]} : vector<4x16x8xf32> to vector<1x16x8xf32>
    %335 = vector.shape_cast %334 : vector<1x16x8xf32> to vector<16x8xf32>
    %336 = vector.extract_strided_slice %329 {offsets = [3, 0, 0], sizes = [1, 16, 8], strides = [1, 1, 1]} : vector<4x16x8xf32> to vector<1x16x8xf32>
    %337 = vector.shape_cast %336 : vector<1x16x8xf32> to vector<16x8xf32>
    %338 = tpu.concatenate %331, %333, %335, %337 in 1 : vector<16x8xf32>, vector<16x8xf32>, vector<16x8xf32>, vector<16x8xf32> -> vector<16x32xf32>
    %339 = arith.truncf %338 : vector<16x32xf32> to vector<16x32xbf16>
    %cst_113 = arith.constant dense<0.000000e+00> : vector<16x32xf32>
    %340 = tpu.matmul %339, %272, %cst_113 {dimension_numbers = #tpu.dot_dimension_numbers<[1], [0], [0], [1], [0, 0, 1, 1], [], []>} : vector<16x32xbf16>, vector<32x32xbf16>, vector<16x32xf32> -> vector<16x32xf32>
    %341 = vector.broadcast %274 : vector<1x32xf32> to vector<16x32xf32>
    %342 = arith.addf %340, %341 : vector<16x32xf32>
    %343 = arith.addf %264, %342 : vector<16x32xf32>
    %344 = vector.extract_strided_slice %266 {offsets = [0, 0], sizes = [1, 32], strides = [1, 1]} : vector<6x32xf32> to vector<1x32xf32>
    %345 = vector.extract_strided_slice %266 {offsets = [1, 0], sizes = [1, 32], strides = [1, 1]} : vector<6x32xf32> to vector<1x32xf32>
    %cst_114 = arith.constant dense<0.000000e+00> : vector<16xf32>
    %346 = vector.multi_reduction <add>, %343, %cst_114 [1] : vector<16x32xf32> to vector<16xf32>
    %347 = vector.shape_cast %346 : vector<16xf32> to vector<16x1xf32>
    %cst_115 = arith.constant 3.200000e+01 : f32
    %348 = vector.broadcast %cst_115 : f32 to vector<16x1xf32>
    %349 = arith.divf %347, %348 : vector<16x1xf32>
    %350 = vector.broadcast %349 : vector<16x1xf32> to vector<16x32xf32>
    %351 = arith.subf %343, %350 : vector<16x32xf32>
    %352 = arith.mulf %351, %351 : vector<16x32xf32>
    %cst_116 = arith.constant dense<0.000000e+00> : vector<16xf32>
    %353 = vector.multi_reduction <add>, %352, %cst_116 [1] : vector<16x32xf32> to vector<16xf32>
    %354 = vector.shape_cast %353 : vector<16xf32> to vector<16x1xf32>
    %cst_117 = arith.constant 3.200000e+01 : f32
    %355 = vector.broadcast %cst_117 : f32 to vector<16x1xf32>
    %356 = arith.divf %354, %355 : vector<16x1xf32>
    %357 = vector.broadcast %349 : vector<16x1xf32> to vector<16x32xf32>
    %358 = arith.subf %343, %357 : vector<16x32xf32>
    %cst_118 = arith.constant 9.99999974E-6 : f32
    %359 = vector.broadcast %cst_118 : f32 to vector<16x1xf32>
    %360 = arith.addf %356, %359 : vector<16x1xf32>
    %361 = math.rsqrt %360 : vector<16x1xf32>
    %362 = vector.broadcast %361 : vector<16x1xf32> to vector<16x32xf32>
    %363 = arith.mulf %358, %362 : vector<16x32xf32>
    %364 = vector.broadcast %344 : vector<1x32xf32> to vector<16x32xf32>
    %365 = arith.mulf %363, %364 : vector<16x32xf32>
    %366 = vector.broadcast %345 : vector<1x32xf32> to vector<16x32xf32>
    %367 = arith.addf %365, %366 : vector<16x32xf32>
    %c1_119 = arith.constant 1 : index
    %c1_120 = arith.constant 1 : index
    %c0_121 = arith.constant 0 : index
    %c0_122 = arith.constant 0 : index
    %368 = vector.load %arg6[%c1_119, %c1_120, %c0_121, %c0_122] : memref<2x2x32x96xbf16, #tpu.memory_space<vmem>>, vector<1x1x32x96xbf16>
    %369 = vector.shape_cast %368 : vector<1x1x32x96xbf16> to vector<32x96xbf16>
    %c1_123 = arith.constant 1 : index
    %c1_124 = arith.constant 1 : index
    %c0_125 = arith.constant 0 : index
    %c0_126 = arith.constant 0 : index
    %370 = vector.load %arg7[%c1_123, %c1_124, %c0_125, %c0_126] : memref<2x2x1x96xf32, #tpu.memory_space<vmem>>, vector<1x1x1x96xf32>
    %371 = vector.shape_cast %370 : vector<1x1x1x96xf32> to vector<1x96xf32>
    %c1_127 = arith.constant 1 : index
    %c1_128 = arith.constant 1 : index
    %c0_129 = arith.constant 0 : index
    %c0_130 = arith.constant 0 : index
    %372 = vector.load %arg8[%c1_127, %c1_128, %c0_129, %c0_130] : memref<2x2x32x32xbf16, #tpu.memory_space<vmem>>, vector<1x1x32x32xbf16>
    %373 = vector.shape_cast %372 : vector<1x1x32x32xbf16> to vector<32x32xbf16>
    %c1_131 = arith.constant 1 : index
    %c1_132 = arith.constant 1 : index
    %c0_133 = arith.constant 0 : index
    %c0_134 = arith.constant 0 : index
    %374 = vector.load %arg9[%c1_131, %c1_132, %c0_133, %c0_134] : memref<2x2x1x32xf32, #tpu.memory_space<vmem>>, vector<1x1x1x32xf32>
    %375 = vector.shape_cast %374 : vector<1x1x1x32xf32> to vector<1x32xf32>
    %376 = arith.truncf %367 : vector<16x32xf32> to vector<16x32xbf16>
    %377 = arith.truncf %8 : vector<32x32xf32> to vector<32x32xbf16>
    %378 = vector.extract_strided_slice %369 {offsets = [0, 0], sizes = [32, 32], strides = [1, 1]} : vector<32x96xbf16> to vector<32x32xbf16>
    %cst_135 = arith.constant dense<0.000000e+00> : vector<16x32xf32>
    %379 = tpu.matmul %376, %378, %cst_135 {dimension_numbers = #tpu.dot_dimension_numbers<[1], [0], [0], [1], [0, 0, 1, 1], [], []>} : vector<16x32xbf16>, vector<32x32xbf16>, vector<16x32xf32> -> vector<16x32xf32>
    %380 = vector.extract_strided_slice %371 {offsets = [0, 0], sizes = [1, 32], strides = [1, 1]} : vector<1x96xf32> to vector<1x32xf32>
    %381 = vector.broadcast %380 : vector<1x32xf32> to vector<16x32xf32>
    %382 = arith.addf %379, %381 : vector<16x32xf32>
    %383 = vector.extract_strided_slice %369 {offsets = [0, 32], sizes = [32, 64], strides = [1, 1]} : vector<32x96xbf16> to vector<32x64xbf16>
    %cst_136 = arith.constant dense<0.000000e+00> : vector<32x64xf32>
    %384 = tpu.matmul %377, %383, %cst_136 {dimension_numbers = #tpu.dot_dimension_numbers<[1], [0], [0], [1], [0, 0, 1, 1], [], []>} : vector<32x32xbf16>, vector<32x64xbf16>, vector<32x64xf32> -> vector<32x64xf32>
    %385 = vector.extract_strided_slice %371 {offsets = [0, 32], sizes = [1, 64], strides = [1, 1]} : vector<1x96xf32> to vector<1x64xf32>
    %386 = vector.broadcast %385 : vector<1x64xf32> to vector<32x64xf32>
    %387 = arith.addf %384, %386 : vector<32x64xf32>
    %388 = vector.extract_strided_slice %387 {offsets = [0, 0], sizes = [32, 32], strides = [1, 1]} : vector<32x64xf32> to vector<32x32xf32>
    %389 = vector.extract_strided_slice %387 {offsets = [0, 32], sizes = [32, 32], strides = [1, 1]} : vector<32x64xf32> to vector<32x32xf32>
    %390 = vector.extract_strided_slice %382 {offsets = [0, 0], sizes = [16, 8], strides = [1, 1]} : vector<16x32xf32> to vector<16x8xf32>
    %391 = vector.extract_strided_slice %382 {offsets = [0, 8], sizes = [16, 8], strides = [1, 1]} : vector<16x32xf32> to vector<16x8xf32>
    %392 = vector.extract_strided_slice %382 {offsets = [0, 16], sizes = [16, 8], strides = [1, 1]} : vector<16x32xf32> to vector<16x8xf32>
    %393 = vector.extract_strided_slice %382 {offsets = [0, 24], sizes = [16, 8], strides = [1, 1]} : vector<16x32xf32> to vector<16x8xf32>
    %394 = vector.shape_cast %390 : vector<16x8xf32> to vector<1x16x8xf32>
    %395 = vector.shape_cast %391 : vector<16x8xf32> to vector<1x16x8xf32>
    %396 = vector.shape_cast %392 : vector<16x8xf32> to vector<1x16x8xf32>
    %397 = vector.shape_cast %393 : vector<16x8xf32> to vector<1x16x8xf32>
    %398 = tpu.concatenate %394, %395, %396, %397 in 0 : vector<1x16x8xf32>, vector<1x16x8xf32>, vector<1x16x8xf32>, vector<1x16x8xf32> -> vector<4x16x8xf32>
    %399 = arith.truncf %398 : vector<4x16x8xf32> to vector<4x16x8xbf16>
    %400 = vector.extract_strided_slice %388 {offsets = [0, 0], sizes = [32, 8], strides = [1, 1]} : vector<32x32xf32> to vector<32x8xf32>
    %401 = vector.extract_strided_slice %388 {offsets = [0, 8], sizes = [32, 8], strides = [1, 1]} : vector<32x32xf32> to vector<32x8xf32>
    %402 = vector.extract_strided_slice %388 {offsets = [0, 16], sizes = [32, 8], strides = [1, 1]} : vector<32x32xf32> to vector<32x8xf32>
    %403 = vector.extract_strided_slice %388 {offsets = [0, 24], sizes = [32, 8], strides = [1, 1]} : vector<32x32xf32> to vector<32x8xf32>
    %404 = vector.shape_cast %400 : vector<32x8xf32> to vector<1x32x8xf32>
    %405 = vector.shape_cast %401 : vector<32x8xf32> to vector<1x32x8xf32>
    %406 = vector.shape_cast %402 : vector<32x8xf32> to vector<1x32x8xf32>
    %407 = vector.shape_cast %403 : vector<32x8xf32> to vector<1x32x8xf32>
    %408 = tpu.concatenate %404, %405, %406, %407 in 0 : vector<1x32x8xf32>, vector<1x32x8xf32>, vector<1x32x8xf32>, vector<1x32x8xf32> -> vector<4x32x8xf32>
    %409 = arith.truncf %408 : vector<4x32x8xf32> to vector<4x32x8xbf16>
    %410 = vector.extract_strided_slice %389 {offsets = [0, 0], sizes = [32, 8], strides = [1, 1]} : vector<32x32xf32> to vector<32x8xf32>
    %411 = vector.extract_strided_slice %389 {offsets = [0, 8], sizes = [32, 8], strides = [1, 1]} : vector<32x32xf32> to vector<32x8xf32>
    %412 = vector.extract_strided_slice %389 {offsets = [0, 16], sizes = [32, 8], strides = [1, 1]} : vector<32x32xf32> to vector<32x8xf32>
    %413 = vector.extract_strided_slice %389 {offsets = [0, 24], sizes = [32, 8], strides = [1, 1]} : vector<32x32xf32> to vector<32x8xf32>
    %414 = vector.shape_cast %410 : vector<32x8xf32> to vector<1x32x8xf32>
    %415 = vector.shape_cast %411 : vector<32x8xf32> to vector<1x32x8xf32>
    %416 = vector.shape_cast %412 : vector<32x8xf32> to vector<1x32x8xf32>
    %417 = vector.shape_cast %413 : vector<32x8xf32> to vector<1x32x8xf32>
    %418 = tpu.concatenate %414, %415, %416, %417 in 0 : vector<1x32x8xf32>, vector<1x32x8xf32>, vector<1x32x8xf32>, vector<1x32x8xf32> -> vector<4x32x8xf32>
    %419 = arith.truncf %418 : vector<4x32x8xf32> to vector<4x32x8xbf16>
    "tpu.trace_start"() <{level = 10 : i32, message = "hqd,hkd->hqk"}> : () -> ()
    %cst_137 = arith.constant dense<0.000000e+00> : vector<4x16x32xf32>
    %420 = tpu.matmul %399, %409, %cst_137 {dimension_numbers = #tpu.dot_dimension_numbers<[2], [2], [1], [1], [0, 0, 0, 1, 1, 1], [0], [0]>} : vector<4x16x8xbf16>, vector<4x32x8xbf16>, vector<4x16x32xf32> -> vector<4x16x32xf32>
    "tpu.trace_stop"() : () -> ()
    %cst_138 = arith.constant 0.353553385 : f32
    %421 = vector.broadcast %cst_138 : f32 to vector<4x16x32xf32>
    %422 = arith.mulf %420, %421 : vector<4x16x32xf32>
    %423 = vector.shape_cast %10 : vector<16x32xf32> to vector<1x16x32xf32>
    %424 = vector.broadcast %423 : vector<1x16x32xf32> to vector<4x16x32xf32>
    %425 = arith.addf %422, %424 : vector<4x16x32xf32>
    %cst_139 = arith.constant dense<0xFF800000> : vector<4x16xf32>
    %426 = vector.multi_reduction <maximumf>, %425, %cst_139 [2] : vector<4x16x32xf32> to vector<4x16xf32>
    %427 = vector.shape_cast %426 : vector<4x16xf32> to vector<4x16x1xf32>
    %428 = vector.broadcast %427 : vector<4x16x1xf32> to vector<4x16x32xf32>
    %429 = arith.subf %425, %428 : vector<4x16x32xf32>
    %430 = math.exp %429 : vector<4x16x32xf32>
    %cst_140 = arith.constant dense<0.000000e+00> : vector<4x16xf32>
    %431 = vector.multi_reduction <add>, %430, %cst_140 [2] : vector<4x16x32xf32> to vector<4x16xf32>
    %432 = vector.shape_cast %431 : vector<4x16xf32> to vector<4x16x1xf32>
    %433 = tpu.reciprocal %432 {approx = true} : vector<4x16x1xf32> -> vector<4x16x1xf32>
    %434 = vector.broadcast %433 : vector<4x16x1xf32> to vector<4x16x32xf32>
    %435 = arith.mulf %430, %434 : vector<4x16x32xf32>
    %436 = arith.truncf %435 : vector<4x16x32xf32> to vector<4x16x32xbf16>
    "tpu.trace_start"() <{level = 10 : i32, message = "hqk,hkd->hqd"}> : () -> ()
    %cst_141 = arith.constant dense<0.000000e+00> : vector<4x16x8xf32>
    %437 = tpu.matmul %436, %419, %cst_141 {dimension_numbers = #tpu.dot_dimension_numbers<[2], [1], [1], [2], [0, 0, 0, 1, 1, 2], [0], [0]>} : vector<4x16x32xbf16>, vector<4x32x8xbf16>, vector<4x16x8xf32> -> vector<4x16x8xf32>
    "tpu.trace_stop"() : () -> ()
    %438 = vector.extract_strided_slice %437 {offsets = [0, 0, 0], sizes = [1, 16, 8], strides = [1, 1, 1]} : vector<4x16x8xf32> to vector<1x16x8xf32>
    %439 = vector.shape_cast %438 : vector<1x16x8xf32> to vector<16x8xf32>
    %440 = vector.extract_strided_slice %437 {offsets = [1, 0, 0], sizes = [1, 16, 8], strides = [1, 1, 1]} : vector<4x16x8xf32> to vector<1x16x8xf32>
    %441 = vector.shape_cast %440 : vector<1x16x8xf32> to vector<16x8xf32>
    %442 = vector.extract_strided_slice %437 {offsets = [2, 0, 0], sizes = [1, 16, 8], strides = [1, 1, 1]} : vector<4x16x8xf32> to vector<1x16x8xf32>
    %443 = vector.shape_cast %442 : vector<1x16x8xf32> to vector<16x8xf32>
    %444 = vector.extract_strided_slice %437 {offsets = [3, 0, 0], sizes = [1, 16, 8], strides = [1, 1, 1]} : vector<4x16x8xf32> to vector<1x16x8xf32>
    %445 = vector.shape_cast %444 : vector<1x16x8xf32> to vector<16x8xf32>
    %446 = tpu.concatenate %439, %441, %443, %445 in 1 : vector<16x8xf32>, vector<16x8xf32>, vector<16x8xf32>, vector<16x8xf32> -> vector<16x32xf32>
    %447 = arith.truncf %446 : vector<16x32xf32> to vector<16x32xbf16>
    %cst_142 = arith.constant dense<0.000000e+00> : vector<16x32xf32>
    %448 = tpu.matmul %447, %373, %cst_142 {dimension_numbers = #tpu.dot_dimension_numbers<[1], [0], [0], [1], [0, 0, 1, 1], [], []>} : vector<16x32xbf16>, vector<32x32xbf16>, vector<16x32xf32> -> vector<16x32xf32>
    %449 = vector.broadcast %375 : vector<1x32xf32> to vector<16x32xf32>
    %450 = arith.addf %448, %449 : vector<16x32xf32>
    %451 = arith.addf %367, %450 : vector<16x32xf32>
    %452 = vector.extract_strided_slice %266 {offsets = [2, 0], sizes = [1, 32], strides = [1, 1]} : vector<6x32xf32> to vector<1x32xf32>
    %453 = vector.extract_strided_slice %266 {offsets = [3, 0], sizes = [1, 32], strides = [1, 1]} : vector<6x32xf32> to vector<1x32xf32>
    %cst_143 = arith.constant dense<0.000000e+00> : vector<16xf32>
    %454 = vector.multi_reduction <add>, %451, %cst_143 [1] : vector<16x32xf32> to vector<16xf32>
    %455 = vector.shape_cast %454 : vector<16xf32> to vector<16x1xf32>
    %cst_144 = arith.constant 3.200000e+01 : f32
    %456 = vector.broadcast %cst_144 : f32 to vector<16x1xf32>
    %457 = arith.divf %455, %456 : vector<16x1xf32>
    %458 = vector.broadcast %457 : vector<16x1xf32> to vector<16x32xf32>
    %459 = arith.subf %451, %458 : vector<16x32xf32>
    %460 = arith.mulf %459, %459 : vector<16x32xf32>
    %cst_145 = arith.constant dense<0.000000e+00> : vector<16xf32>
    %461 = vector.multi_reduction <add>, %460, %cst_145 [1] : vector<16x32xf32> to vector<16xf32>
    %462 = vector.shape_cast %461 : vector<16xf32> to vector<16x1xf32>
    %cst_146 = arith.constant 3.200000e+01 : f32
    %463 = vector.broadcast %cst_146 : f32 to vector<16x1xf32>
    %464 = arith.divf %462, %463 : vector<16x1xf32>
    %465 = vector.broadcast %457 : vector<16x1xf32> to vector<16x32xf32>
    %466 = arith.subf %451, %465 : vector<16x32xf32>
    %cst_147 = arith.constant 9.99999974E-6 : f32
    %467 = vector.broadcast %cst_147 : f32 to vector<16x1xf32>
    %468 = arith.addf %464, %467 : vector<16x1xf32>
    %469 = math.rsqrt %468 : vector<16x1xf32>
    %470 = vector.broadcast %469 : vector<16x1xf32> to vector<16x32xf32>
    %471 = arith.mulf %466, %470 : vector<16x32xf32>
    %472 = vector.broadcast %452 : vector<1x32xf32> to vector<16x32xf32>
    %473 = arith.mulf %471, %472 : vector<16x32xf32>
    %474 = vector.broadcast %453 : vector<1x32xf32> to vector<16x32xf32>
    %475 = arith.addf %473, %474 : vector<16x32xf32>
    %476 = arith.truncf %475 : vector<16x32xf32> to vector<16x32xbf16>
    %c1_148 = arith.constant 1 : index
    %c0_149 = arith.constant 0 : index
    %c0_150 = arith.constant 0 : index
    %477 = vector.load %arg11[%c1_148, %c0_149, %c0_150] : memref<2x32x64xbf16, #tpu.memory_space<vmem>>, vector<1x32x64xbf16>
    %478 = vector.shape_cast %477 : vector<1x32x64xbf16> to vector<32x64xbf16>
    %cst_151 = arith.constant dense<0.000000e+00> : vector<16x64xf32>
    %479 = tpu.matmul %476, %478, %cst_151 {dimension_numbers = #tpu.dot_dimension_numbers<[1], [0], [0], [1], [0, 0, 1, 1], [], []>} : vector<16x32xbf16>, vector<32x64xbf16>, vector<16x64xf32> -> vector<16x64xf32>
    %c1_152 = arith.constant 1 : index
    %c0_153 = arith.constant 0 : index
    %c0_154 = arith.constant 0 : index
    %480 = vector.load %arg12[%c1_152, %c0_153, %c0_154] : memref<2x1x64xf32, #tpu.memory_space<vmem>>, vector<1x1x64xf32>
    %481 = vector.shape_cast %480 : vector<1x1x64xf32> to vector<1x64xf32>
    %482 = vector.broadcast %481 : vector<1x64xf32> to vector<16x64xf32>
    %483 = arith.addf %479, %482 : vector<16x64xf32>
    %cst_155 = arith.constant 0.000000e+00 : f32
    %484 = vector.broadcast %cst_155 : f32 to vector<16x64xf32>
    %485 = arith.maximumf %483, %484 : vector<16x64xf32>
    %486 = arith.truncf %485 : vector<16x64xf32> to vector<16x64xbf16>
    %c1_156 = arith.constant 1 : index
    %c0_157 = arith.constant 0 : index
    %c0_158 = arith.constant 0 : index
    %487 = vector.load %arg13[%c1_156, %c0_157, %c0_158] : memref<2x64x32xbf16, #tpu.memory_space<vmem>>, vector<1x64x32xbf16>
    %488 = vector.shape_cast %487 : vector<1x64x32xbf16> to vector<64x32xbf16>
    %cst_159 = arith.constant dense<0.000000e+00> : vector<16x32xf32>
    %489 = tpu.matmul %486, %488, %cst_159 {dimension_numbers = #tpu.dot_dimension_numbers<[1], [0], [0], [1], [0, 0, 1, 1], [], []>} : vector<16x64xbf16>, vector<64x32xbf16>, vector<16x32xf32> -> vector<16x32xf32>
    %c1_160 = arith.constant 1 : index
    %c0_161 = arith.constant 0 : index
    %c0_162 = arith.constant 0 : index
    %490 = vector.load %arg14[%c1_160, %c0_161, %c0_162] : memref<2x1x32xf32, #tpu.memory_space<vmem>>, vector<1x1x32xf32>
    %491 = vector.shape_cast %490 : vector<1x1x32xf32> to vector<1x32xf32>
    %492 = vector.broadcast %491 : vector<1x32xf32> to vector<16x32xf32>
    %493 = arith.addf %489, %492 : vector<16x32xf32>
    %494 = arith.addf %475, %493 : vector<16x32xf32>
    %495 = vector.extract_strided_slice %266 {offsets = [4, 0], sizes = [1, 32], strides = [1, 1]} : vector<6x32xf32> to vector<1x32xf32>
    %496 = vector.extract_strided_slice %266 {offsets = [5, 0], sizes = [1, 32], strides = [1, 1]} : vector<6x32xf32> to vector<1x32xf32>
    %cst_163 = arith.constant dense<0.000000e+00> : vector<16xf32>
    %497 = vector.multi_reduction <add>, %494, %cst_163 [1] : vector<16x32xf32> to vector<16xf32>
    %498 = vector.shape_cast %497 : vector<16xf32> to vector<16x1xf32>
    %cst_164 = arith.constant 3.200000e+01 : f32
    %499 = vector.broadcast %cst_164 : f32 to vector<16x1xf32>
    %500 = arith.divf %498, %499 : vector<16x1xf32>
    %501 = vector.broadcast %500 : vector<16x1xf32> to vector<16x32xf32>
    %502 = arith.subf %494, %501 : vector<16x32xf32>
    %503 = arith.mulf %502, %502 : vector<16x32xf32>
    %cst_165 = arith.constant dense<0.000000e+00> : vector<16xf32>
    %504 = vector.multi_reduction <add>, %503, %cst_165 [1] : vector<16x32xf32> to vector<16xf32>
    %505 = vector.shape_cast %504 : vector<16xf32> to vector<16x1xf32>
    %cst_166 = arith.constant 3.200000e+01 : f32
    %506 = vector.broadcast %cst_166 : f32 to vector<16x1xf32>
    %507 = arith.divf %505, %506 : vector<16x1xf32>
    %508 = vector.broadcast %500 : vector<16x1xf32> to vector<16x32xf32>
    %509 = arith.subf %494, %508 : vector<16x32xf32>
    %cst_167 = arith.constant 9.99999974E-6 : f32
    %510 = vector.broadcast %cst_167 : f32 to vector<16x1xf32>
    %511 = arith.addf %507, %510 : vector<16x1xf32>
    %512 = math.rsqrt %511 : vector<16x1xf32>
    %513 = vector.broadcast %512 : vector<16x1xf32> to vector<16x32xf32>
    %514 = arith.mulf %509, %513 : vector<16x32xf32>
    %515 = vector.broadcast %495 : vector<1x32xf32> to vector<16x32xf32>
    %516 = arith.mulf %514, %515 : vector<16x32xf32>
    %517 = vector.broadcast %496 : vector<1x32xf32> to vector<16x32xf32>
    %518 = arith.addf %516, %517 : vector<16x32xf32>
    %519 = arith.truncf %518 : vector<16x32xf32> to vector<16x32xbf16>
    %c0_168 = arith.constant 0 : index
    %c0_169 = arith.constant 0 : index
    %520 = vector.load %arg15[%c0_168, %c0_169] : memref<32x128xbf16, #tpu.memory_space<vmem>>, vector<32x128xbf16>
    %cst_170 = arith.constant dense<0.000000e+00> : vector<16x128xf32>
    %521 = tpu.matmul %519, %520, %cst_170 {dimension_numbers = #tpu.dot_dimension_numbers<[1], [0], [0], [1], [0, 0, 1, 1], [], []>} : vector<16x32xbf16>, vector<32x128xbf16>, vector<16x128xf32> -> vector<16x128xf32>
    %c0_171 = arith.constant 0 : index
    %c0_172 = arith.constant 0 : index
    %522 = vector.load %arg16[%c0_171, %c0_172] : memref<1x128xf32, #tpu.memory_space<vmem>>, vector<1x128xf32>
    %523 = vector.broadcast %522 : vector<1x128xf32> to vector<16x128xf32>
    %524 = arith.addf %521, %523 : vector<16x128xf32>
    %c0_173 = arith.constant 0 : index
    %c0_174 = arith.constant 0 : index
    %525 = vector.load %arg17[%c0_173, %c0_174] : memref<16x128xf32, #tpu.memory_space<vmem>>, vector<16x128xf32>
    tpu.vector_store %arg17[%c0_173, %c0_174], %524 {strides = array<i32>} : memref<16x128xf32, #tpu.memory_space<vmem>>, vector<16x128xf32>,
    return
  }
  func.func @transform_0(%arg0: i32) -> (i32, i32) {
    %c0_i32 = arith.constant 0 : i32
    %c0_i32_0 = arith.constant 0 : i32
    %c0_i32_1 = arith.constant 0 : i32
    return %c0_i32, %c0_i32_0 : i32, i32
  }
  func.func @transform_1(%arg0: i32) -> (i32, i32) {
    %c0_i32 = arith.constant 0 : i32
    %c0_i32_0 = arith.constant 0 : i32
    %c0_i32_1 = arith.constant 0 : i32
    return %c0_i32, %c0_i32_0 : i32, i32
  }
  func.func @transform_2(%arg0: i32) -> (i32, i32) {
    %c0_i32 = arith.constant 0 : i32
    %c0_i32_0 = arith.constant 0 : i32
    %c0_i32_1 = arith.constant 0 : i32
    return %c0_i32, %c0_i32_0 : i32, i32
  }
  func.func @transform_3(%arg0: i32) -> (i32, i32) {
    %c0_i32 = arith.constant 0 : i32
    %c0_i32_0 = arith.constant 0 : i32
    %c0_i32_1 = arith.constant 0 : i32
    return %c0_i32, %c0_i32_0 : i32, i32
  }
  func.func @transform_4(%arg0: i32) -> (i32, i32) {
    %c0_i32 = arith.constant 0 : i32
    %c0_i32_0 = arith.constant 0 : i32
    %c0_i32_1 = arith.constant 0 : i32
    return %c0_i32, %c0_i32_0 : i32, i32
  }
  func.func @transform_5(%arg0: i32) -> (i32, i32, i32, i32) {
    %c0_i32 = arith.constant 0 : i32
    %c0_i32_0 = arith.constant 0 : i32
    %c0_i32_1 = arith.constant 0 : i32
    %c0_i32_2 = arith.constant 0 : i32
    %c0_i32_3 = arith.constant 0 : i32
    return %c0_i32, %c0_i32_0, %c0_i32_1, %c0_i32_2 : i32, i32, i32, i32
  }
  func.func @transform_6(%arg0: i32) -> (i32, i32, i32, i32) {
    %c0_i32 = arith.constant 0 : i32
    %c0_i32_0 = arith.constant 0 : i32
    %c0_i32_1 = arith.constant 0 : i32
    %c0_i32_2 = arith.constant 0 : i32
    %c0_i32_3 = arith.constant 0 : i32
    return %c0_i32, %c0_i32_0, %c0_i32_1, %c0_i32_2 : i32, i32, i32, i32
  }
  func.func @transform_7(%arg0: i32) -> (i32, i32, i32, i32) {
    %c0_i32 = arith.constant 0 : i32
    %c0_i32_0 = arith.constant 0 : i32
    %c0_i32_1 = arith.constant 0 : i32
    %c0_i32_2 = arith.constant 0 : i32
    %c0_i32_3 = arith.constant 0 : i32
    return %c0_i32, %c0_i32_0, %c0_i32_1, %c0_i32_2 : i32, i32, i32, i32
  }
  func.func @transform_8(%arg0: i32) -> (i32, i32, i32, i32) {
    %c0_i32 = arith.constant 0 : i32
    %c0_i32_0 = arith.constant 0 : i32
    %c0_i32_1 = arith.constant 0 : i32
    %c0_i32_2 = arith.constant 0 : i32
    %c0_i32_3 = arith.constant 0 : i32
    return %c0_i32, %c0_i32_0, %c0_i32_1, %c0_i32_2 : i32, i32, i32, i32
  }
  func.func @transform_9(%arg0: i32) -> (i32, i32, i32) {
    %c0_i32 = arith.constant 0 : i32
    %c0_i32_0 = arith.constant 0 : i32
    %c0_i32_1 = arith.constant 0 : i32
    %c0_i32_2 = arith.constant 0 : i32
    return %c0_i32, %c0_i32_0, %c0_i32_1 : i32, i32, i32
  }
  func.func @transform_10(%arg0: i32) -> (i32, i32, i32) {
    %c0_i32 = arith.constant 0 : i32
    %c0_i32_0 = arith.constant 0 : i32
    %c0_i32_1 = arith.constant 0 : i32
    %c0_i32_2 = arith.constant 0 : i32
    return %c0_i32, %c0_i32_0, %c0_i32_1 : i32, i32, i32
  }
  func.func @transform_11(%arg0: i32) -> (i32, i32, i32) {
    %c0_i32 = arith.constant 0 : i32
    %c0_i32_0 = arith.constant 0 : i32
    %c0_i32_1 = arith.constant 0 : i32
    %c0_i32_2 = arith.constant 0 : i32
    return %c0_i32, %c0_i32_0, %c0_i32_1 : i32, i32, i32
  }
  func.func @transform_12(%arg0: i32) -> (i32, i32, i32) {
    %c0_i32 = arith.constant 0 : i32
    %c0_i32_0 = arith.constant 0 : i32
    %c0_i32_1 = arith.constant 0 : i32
    %c0_i32_2 = arith.constant 0 : i32
    return %c0_i32, %c0_i32_0, %c0_i32_1 : i32, i32, i32
  }
  func.func @transform_13(%arg0: i32) -> (i32, i32, i32) {
    %c0_i32 = arith.constant 0 : i32
    %c0_i32_0 = arith.constant 0 : i32
    %c0_i32_1 = arith.constant 0 : i32
    %c0_i32_2 = arith.constant 0 : i32
    return %c0_i32, %c0_i32_0, %c0_i32_1 : i32, i32, i32
  }
  func.func @transform_14(%arg0: i32) -> (i32, i32) {
    %c0_i32 = arith.constant 0 : i32
    %c0_i32_0 = arith.constant 0 : i32
    %c0_i32_1 = arith.constant 0 : i32
    return %c0_i32, %c0_i32_0 : i32, i32
  }
  func.func @transform_15(%arg0: i32) -> (i32, i32) {
    %c0_i32 = arith.constant 0 : i32
    %c0_i32_0 = arith.constant 0 : i32
    %c0_i32_1 = arith.constant 0 : i32
    return %c0_i32, %c0_i32_0 : i32, i32
  }
  func.func @transform_16(%arg0: i32) -> (i32, i32) {
    %c0_i32 = arith.constant 0 : i32
    %c0_i32_0 = arith.constant 0 : i32
    %c0_i32_1 = arith.constant 0 : i32
    return %c0_i32, %c0_i32_0 : i32, i32
  }
}

</mosaic_0001>

<llo_original>
// kernel: eq.15
$region0: #{eq.15}
  %s0 = inlined_call_operand.vmem [shape: s32[2,8], index: 0, kind: input, shape index: {}]
  %s1 = inlined_call_operand.vmem [shape: s32[16], index: 1, kind: output, shape index: {}]
  $region1: #{eq.15} parent=0
    #allocation0 [shape = 'u8[4096]{0}', space=vmem, size = 0x1000, scoped, tag = 'scoped mem for output reshape']
    #allocation1 [shape = 'u8[4096]{0}', space=vmem, size = 0x1000, scoped, tag = 'scoped mem for input reshape']
    %s3 = sshllo.u32 0, 2
    %v4 = vld [vmem:[%s0] sm:%s3]
    %5 = vst [vmem:[#allocation1] sm:%s3] %v4
    %v6 = vld [vmem:[#allocation1] sm:$0x1]
    %vm7 = vcmask 64512
    %8 = vst.msk [vmem:[#allocation0] sm:$0x1] %vm7, %v6
    %s9 = scalar_lea.vmem [#allocation1], 1
    %v10 = vld [vmem:[%s9] sm:$0x1]
    %11 = vrot.lane.b32.xlu0 %v10, 8
    %v12 = vpop.permute.xlu0 %11
    %vm13 = vcmask 130112
    %14 = vst.msk [vmem:[#allocation0] sm:$0x1] %vm13, %v12
    %s16 = sshllo.u32 0, 1
    %v18 = vld [vmem:[#allocation0] sm:%s16]
    %s19 = sshllo.u32 0, 1
    %20 = vst [vmem:[%s1] sm:%s19] %v18

// kernel: eq.25
$region0: #{eq.25}
  %s0 = inlined_call_operand.vmem [shape: s32[2,16], index: 0, kind: input, shape index: {}]
  %s1 = inlined_call_operand.vmem [shape: s32[32], index: 1, kind: output, shape index: {}]
  $region1: #{eq.25} parent=0
    #allocation0 [shape = 'u8[4096]{0}', space=vmem, size = 0x1000, scoped, tag = 'scoped mem for output reshape']
    #allocation1 [shape = 'u8[4096]{0}', space=vmem, size = 0x1000, scoped, tag = 'scoped mem for input reshape']
    %s3 = sshllo.u32 0, 2
    %v4 = vld [vmem:[%s0] sm:%s3]
    %5 = vst [vmem:[#allocation1] sm:%s3] %v4
    %v6 = vld [vmem:[#allocation1] sm:$0x1]
    %vm7 = vcmask 130048
    %8 = vst.msk [vmem:[#allocation0] sm:$0x1] %vm7, %v6
    %s9 = scalar_lea.vmem [#allocation1], 1
    %v10 = vld [vmem:[%s9] sm:$0x1]
    %11 = vrot.lane.b32.xlu0 %v10, 16
    %v12 = vpop.permute.xlu0 %11
    %vm13 = vcmask 261248
    %14 = vst.msk [vmem:[#allocation0] sm:$0x1] %vm13, %v12
    %s16 = sshllo.u32 0, 1
    %v18 = vld [vmem:[#allocation0] sm:%s16]
    %s19 = sshllo.u32 0, 1
    %20 = vst [vmem:[%s1] sm:%s19] %v18

// kernel: tile.8
$region0: #{tile.8}
  #allocation0 [shape = 's32[1]{0}', space=sflag, size = 0x4, scoped, tag = 'scoped memory for tile.8']
  %s0 = inlined_call_operand.vmem [shape: f32[8,16], index: 0, kind: input, shape index: {}]
  %s1 = inlined_call_operand.vmem [shape: f32[2,8,2,16], index: 1, kind: output, shape index: {}]
  // Predicated region
  $region2: #{tile.8} parent=0 // pred_check
    _
  $region3: #{tile.8} parent=0 // pred_check_branch
    %3 = sbr.rel (0) target = $region5
  $region4: #{tile.8} parent=0 // pred_region
    _
  $region5: #{tile.8} parent=0 // pred_fallthru
    _
  %v4 = vld [vmem:[%s0] ss:$0 sm:$0xff]
  %5 = vst [vmem:[%s1] sm:$0x3] %v4
  %s6 = scalar_lea.vmem %s1, 16
  %7 = vst [vmem:[%s6] sm:$0x3] %v4
  %s8 = scalar_lea.vmem %s0, 1
  %v9 = vld [vmem:[%s8] ss:$0 sm:$0xff]
  %s10 = scalar_lea.vmem %s1, 2
  %11 = vst [vmem:[%s10] sm:$0x3] %v9
  %s12 = scalar_lea.vmem %s1, 18
  %13 = vst [vmem:[%s12] sm:$0x3] %v9
  %s14 = scalar_lea.vmem %s0, 2
  %v15 = vld [vmem:[%s14] ss:$0 sm:$0xff]
  %s16 = scalar_lea.vmem %s1, 4
  %17 = vst [vmem:[%s16] sm:$0x3] %v15
  %s18 = scalar_lea.vmem %s1, 20
  %19 = vst [vmem:[%s18] sm:$0x3] %v15
  %s20 = scalar_lea.vmem %s0, 3
  %v21 = vld [vmem:[%s20] ss:$0 sm:$0xff]
  %s22 = scalar_lea.vmem %s1, 6
  %23 = vst [vmem:[%s22] sm:$0x3] %v21
  %s24 = scalar_lea.vmem %s1, 22
  %25 = vst [vmem:[%s24] sm:$0x3] %v21
  %s26 = scalar_lea.vmem %s0, 4
  %v27 = vld [vmem:[%s26] ss:$0 sm:$0xff]
  %s28 = scalar_lea.vmem %s1, 8
  %29 = vst [vmem:[%s28] sm:$0x3] %v27
  %s30 = scalar_lea.vmem %s1, 24
  %31 = vst [vmem:[%s30] sm:$0x3] %v27
  %s32 = scalar_lea.vmem %s0, 5
  %v33 = vld [vmem:[%s32] ss:$0 sm:$0xff]
  %s34 = scalar_lea.vmem %s1, 10
  %35 = vst [vmem:[%s34] sm:$0x3] %v33
  %s36 = scalar_lea.vmem %s1, 26
  %37 = vst [vmem:[%s36] sm:$0x3] %v33
  %s38 = scalar_lea.vmem %s0, 6
  %v39 = vld [vmem:[%s38] ss:$0 sm:$0xff]
  %s40 = scalar_lea.vmem %s1, 12
  %41 = vst [vmem:[%s40] sm:$0x3] %v39
  %s42 = scalar_lea.vmem %s1, 28
  %43 = vst [vmem:[%s42] sm:$0x3] %v39
  %s44 = scalar_lea.vmem %s0, 7
  %v45 = vld [vmem:[%s44] ss:$0 sm:$0xff]
  %s46 = scalar_lea.vmem %s1, 14
  %47 = vst [vmem:[%s46] sm:$0x3] %v45
  %s48 = scalar_lea.vmem %s1, 30
  %49 = vst [vmem:[%s48] sm:$0x3] %v45

// kernel: tile.9
$region0: #{tile.9}
  %s0 = inlined_call_operand.vmem [shape: f32[2,8,2,16], index: 0, kind: input, shape index: {}]
  %s1 = inlined_call_operand.vmem [shape: f32[16,32], index: 1, kind: output, shape index: {}]
  $region1: #{tile.9} parent=0
    #allocation0 [shape = 'u8[65536]{0}', space=vmem, size = 0x10000, scoped, tag = 'scoped mem for input reshape']
    %s3 = sshllo.u32 0, 2
    %s4 = smul.addr 2, 15
    %s5 = scalar_lea.vmem %s0, %s4
    %v6 = vld [vmem:[%s5] sm:%s3]
    %s7 = scalar_lea.vmem [#allocation0], 120
    %8 = vst [vmem:[%s7] sm:%s3] %v6
    %s9 = smul.addr 2, 14
    %s10 = scalar_lea.vmem %s0, %s9
    %v11 = vld [vmem:[%s10] sm:%s3]
    %s12 = scalar_lea.vmem [#allocation0], 112
    %13 = vst [vmem:[%s12] sm:%s3] %v11
    %s14 = smul.addr 2, 13
    %s15 = scalar_lea.vmem %s0, %s14
    %v16 = vld [vmem:[%s15] sm:%s3]
    %s17 = scalar_lea.vmem [#allocation0], 104
    %18 = vst [vmem:[%s17] sm:%s3] %v16
    %s19 = smul.addr 2, 12
    %s20 = scalar_lea.vmem %s0, %s19
    %v21 = vld [vmem:[%s20] sm:%s3]
    %s22 = scalar_lea.vmem [#allocation0], 96
    %23 = vst [vmem:[%s22] sm:%s3] %v21
    %s24 = smul.addr 2, 11
    %s25 = scalar_lea.vmem %s0, %s24
    %v26 = vld [vmem:[%s25] sm:%s3]
    %s27 = scalar_lea.vmem [#allocation0], 88
    %28 = vst [vmem:[%s27] sm:%s3] %v26
    %s29 = smul.addr 2, 10
    %s30 = scalar_lea.vmem %s0, %s29
    %v31 = vld [vmem:[%s30] sm:%s3]
    %s32 = scalar_lea.vmem [#allocation0], 80
    %33 = vst [vmem:[%s32] sm:%s3] %v31
    %s34 = smul.addr 2, 9
    %s35 = scalar_lea.vmem %s0, %s34
    %v36 = vld [vmem:[%s35] sm:%s3]
    %s37 = scalar_lea.vmem [#allocation0], 72
    %38 = vst [vmem:[%s37] sm:%s3] %v36
    %s39 = smul.addr 2, 8
    %s40 = scalar_lea.vmem %s0, %s39
    %v41 = vld [vmem:[%s40] sm:%s3]
    %s42 = scalar_lea.vmem [#allocation0], 64
    %43 = vst [vmem:[%s42] sm:%s3] %v41
    %s44 = smul.addr 2, 7
    %s45 = scalar_lea.vmem %s0, %s44
    %v46 = vld [vmem:[%s45] sm:%s3]
    %s47 = scalar_lea.vmem [#allocation0], 56
    %48 = vst [vmem:[%s47] sm:%s3] %v46
    %s49 = smul.addr 2, 6
    %s50 = scalar_lea.vmem %s0, %s49
    %v51 = vld [vmem:[%s50] sm:%s3]
    %s52 = scalar_lea.vmem [#allocation0], 48
    %53 = vst [vmem:[%s52] sm:%s3] %v51
    %s54 = smul.addr 2, 5
    %s55 = scalar_lea.vmem %s0, %s54
    %v56 = vld [vmem:[%s55] sm:%s3]
    %s57 = scalar_lea.vmem [#allocation0], 40
    %58 = vst [vmem:[%s57] sm:%s3] %v56
    %s59 = smul.addr 2, 4
    %s60 = scalar_lea.vmem %s0, %s59
    %v61 = vld [vmem:[%s60] sm:%s3]
    %s62 = scalar_lea.vmem [#allocation0], 32
    %63 = vst [vmem:[%s62] sm:%s3] %v61
    %s64 = smul.addr 2, 3
    %s65 = scalar_lea.vmem %s0, %s64
    %v66 = vld [vmem:[%s65] sm:%s3]
    %s67 = scalar_lea.vmem [#allocation0], 24
    %68 = vst [vmem:[%s67] sm:%s3] %v66
    %s69 = smul.addr 2, 2
    %s70 = scalar_lea.vmem %s0, %s69
    %v71 = vld [vmem:[%s70] sm:%s3]
    %s72 = scalar_lea.vmem [#allocation0], 16
    %73 = vst [vmem:[%s72] sm:%s3] %v71
    %s74 = scalar_lea.vmem %s0, 2
    %v75 = vld [vmem:[%s74] sm:%s3]
    %s76 = scalar_lea.vmem [#allocation0], 8
    %77 = vst [vmem:[%s76] sm:%s3] %v75
    %v78 = vld [vmem:[%s0] sm:%s3]
    %79 = vst [vmem:[#allocation0] sm:%s3] %v78
    %v80 = vld [vmem:[#allocation0] ss:$8 sm:$0xf]
    %v81 = vld [vmem:[#allocation0] ss:$8 sm:$0xf0]
    %vm82 = vcmask 1047556
    %v83 = vsel %vm82, %v81, %v80
    %vm84 = vcmask 130048
    %85 = vst.msk [vmem:[%s1] sm:$0xff] %vm84, %v83
    %s86 = scalar_lea.vmem [#allocation0], 64
    %v87 = vld [vmem:[%s86] ss:$8 sm:$0xf]
    %s88 = scalar_lea.vmem [#allocation0], 64
    %v89 = vld [vmem:[%s88] ss:$8 sm:$0xf0]
    %vm90 = vcmask 1047556
    %v91 = vsel %vm90, %v89, %v87
    %vm92 = vcmask 130048
    %s93 = scalar_lea.vmem %s1, 8
    %94 = vst.msk [vmem:[%s93] sm:$0xff] %vm92, %v91
    %s95 = scalar_lea.vmem [#allocation0], 1
    %v96 = vld [vmem:[%s95] ss:$8 sm:$0xf]
    %s97 = scalar_lea.vmem [#allocation0], 1
    %v98 = vld [vmem:[%s97] ss:$8 sm:$0xf0]
    %vm99 = vcmask 1047556
    %v100 = vsel %vm99, %v98, %v96
    %101 = vrot.lane.b32.xlu0 %v100, 16
    %v102 = vpop.permute.xlu0 %101
    %vm103 = vcmask 261248
    %104 = vst.msk [vmem:[%s1] sm:$0xff] %vm103, %v102
    %s105 = scalar_lea.vmem [#allocation0], 65
    %v106 = vld [vmem:[%s105] ss:$8 sm:$0xf]
    %s107 = scalar_lea.vmem [#allocation0], 65
    %v108 = vld [vmem:[%s107] ss:$8 sm:$0xf0]
    %vm109 = vcmask 1047556
    %v110 = vsel %vm109, %v108, %v106
    %111 = vrot.lane.b32.xlu0 %v110, 16
    %v112 = vpop.permute.xlu0 %111
    %vm113 = vcmask 261248
    %s114 = scalar_lea.vmem %s1, 8
    %115 = vst.msk [vmem:[%s114] sm:$0xff] %vm113, %v112

// kernel: decoder_forward.1
$region0: #{decoder_forward.1}
  #allocation0 [shape = 'u32[]', space=smem, size = 0x4, offset = 0x4, fixed_abs, tag = 'smem constant byte address 0x4 - core index']
  #allocation1 [shape = 'u32[144,128]{1,0:T(1,128)}', space=vmem, size = 0x12000, scoped, tag = 'internal scratch']
  %s0 = inlined_call_operand.vmem [shape: s32[16,1], index: 0, kind: input, shape index: {}]
  %s1 = inlined_call_operand.vmem [shape: f32[32,32], index: 1, kind: input, shape index: {}]
  %s2 = inlined_call_operand.vmem [shape: f32[16,16], index: 2, kind: input, shape index: {}]
  %s3 = inlined_call_operand.vmem [shape: f32[16,32], index: 3, kind: input, shape index: {}]
  %s4 = inlined_call_operand.vmem [shape: f32[128,32], index: 4, kind: input, shape index: {}]
  %s5 = inlined_call_operand.vmem [shape: bf16[2,2,32,96], index: 5, kind: input, shape index: {}]
  %s6 = inlined_call_operand.vmem [shape: f32[2,2,1,96], index: 6, kind: input, shape index: {}]
  %s7 = inlined_call_operand.vmem [shape: bf16[2,2,32,32], index: 7, kind: input, shape index: {}]
  %s8 = inlined_call_operand.vmem [shape: f32[2,2,1,32], index: 8, kind: input, shape index: {}]
  %s9 = inlined_call_operand.vmem [shape: f32[2,6,32], index: 9, kind: input, shape index: {}]
  %s10 = inlined_call_operand.vmem [shape: bf16[2,32,64], index: 10, kind: input, shape index: {}]
  %s11 = inlined_call_operand.vmem [shape: f32[2,1,64], index: 11, kind: input, shape index: {}]
  %s12 = inlined_call_operand.vmem [shape: bf16[2,64,32], index: 12, kind: input, shape index: {}]
  %s13 = inlined_call_operand.vmem [shape: f32[2,1,32], index: 13, kind: input, shape index: {}]
  %s14 = inlined_call_operand.vmem [shape: bf16[32,128], index: 14, kind: input, shape index: {}]
  %s15 = inlined_call_operand.vmem [shape: f32[1,128], index: 15, kind: input, shape index: {}]
  %s16 = inlined_call_operand.hbm [shape: f32[16,128], index: 16, kind: output, shape index: {}]
  %s17 = sld [smem:[#allocation0]]
  $region74: #{decoder_forward.1} parent=0
    _
  %s19 = ssub.s32 1, %s17
  %s20 = scalar_select 0, %s19, %s17
  $region1: #{decoder_forward.1} parent=0
    #allocation2 [shape = 'u8[8192]{0}', space=vmem, size = 0x2000, scoped, tag = 'output window, operand 0, single buffered']
    #allocation3 [shape = 's32[1]{0}', space=sflag, size = 0x4, scoped, tag = 'scoped memory for decoder_forward.1']
    %21 = vsyncpa [#allocation3], 0
    // Predicated region
    $region2: #{decoder_forward.1} parent=1 // pred_check
      _
    $region3: #{decoder_forward.1} parent=1 // pred_check_branch
      %23 = sbr.rel (0) target = $region5
    $region4: #{decoder_forward.1} parent=1 // pred_region
      _
    $region5: #{decoder_forward.1} parent=1 // pred_fallthru
      _
    // Predicated region
    $region6: #{decoder_forward.1} parent=1 // pred_check
      _
    $region7: #{decoder_forward.1} parent=1 // pred_check_branch
      %25 = sbr.rel (0) target = $region9
    $region8: #{decoder_forward.1} parent=1 // pred_region
      _
    $region9: #{decoder_forward.1} parent=1 // pred_fallthru
      _
    // Predicated region
    $region10: #{decoder_forward.1} parent=1 // pred_check
      _
    $region11: #{decoder_forward.1} parent=1 // pred_check_branch
      %27 = sbr.rel (0) target = $region13
    $region12: #{decoder_forward.1} parent=1 // pred_region
      _
    $region13: #{decoder_forward.1} parent=1 // pred_fallthru
      _
    // Predicated region
    $region14: #{decoder_forward.1} parent=1 // pred_check
      _
    $region15: #{decoder_forward.1} parent=1 // pred_check_branch
      %29 = sbr.rel (0) target = $region17
    $region16: #{decoder_forward.1} parent=1 // pred_region
      _
    $region17: #{decoder_forward.1} parent=1 // pred_fallthru
      _
    // Predicated region
    $region18: #{decoder_forward.1} parent=1 // pred_check
      _
    $region19: #{decoder_forward.1} parent=1 // pred_check_branch
      %31 = sbr.rel (0) target = $region21
    $region20: #{decoder_forward.1} parent=1 // pred_region
      _
    $region21: #{decoder_forward.1} parent=1 // pred_fallthru
      _
    // Predicated region
    $region22: #{decoder_forward.1} parent=1 // pred_check
      _
    $region23: #{decoder_forward.1} parent=1 // pred_check_branch
      %33 = sbr.rel (0) target = $region25
    $region24: #{decoder_forward.1} parent=1 // pred_region
      _
    $region25: #{decoder_forward.1} parent=1 // pred_fallthru
      _
    // Predicated region
    $region26: #{decoder_forward.1} parent=1 // pred_check
      _
    $region27: #{decoder_forward.1} parent=1 // pred_check_branch
      %35 = sbr.rel (0) target = $region29
    $region28: #{decoder_forward.1} parent=1 // pred_region
      _
    $region29: #{decoder_forward.1} parent=1 // pred_fallthru
      _
    // Predicated region
    $region30: #{decoder_forward.1} parent=1 // pred_check
      _
    $region31: #{decoder_forward.1} parent=1 // pred_check_branch
      %37 = sbr.rel (0) target = $region33
    $region32: #{decoder_forward.1} parent=1 // pred_region
      _
    $region33: #{decoder_forward.1} parent=1 // pred_fallthru
      _
    // Predicated region
    $region34: #{decoder_forward.1} parent=1 // pred_check
      _
    $region35: #{decoder_forward.1} parent=1 // pred_check_branch
      %39 = sbr.rel (0) target = $region37
    $region36: #{decoder_forward.1} parent=1 // pred_region
      _
    $region37: #{decoder_forward.1} parent=1 // pred_fallthru
      _
    // Predicated region
    $region38: #{decoder_forward.1} parent=1 // pred_check
      _
    $region39: #{decoder_forward.1} parent=1 // pred_check_branch
      %41 = sbr.rel (0) target = $region41
    $region40: #{decoder_forward.1} parent=1 // pred_region
      _
    $region41: #{decoder_forward.1} parent=1 // pred_fallthru
      _
    // Predicated region
    $region42: #{decoder_forward.1} parent=1 // pred_check
      _
    $region43: #{decoder_forward.1} parent=1 // pred_check_branch
      %43 = sbr.rel (0) target = $region45
    $region44: #{decoder_forward.1} parent=1 // pred_region
      _
    $region45: #{decoder_forward.1} parent=1 // pred_fallthru
      _
    // Predicated region
    $region46: #{decoder_forward.1} parent=1 // pred_check
      _
    $region47: #{decoder_forward.1} parent=1 // pred_check_branch
      %45 = sbr.rel (0) target = $region49
    $region48: #{decoder_forward.1} parent=1 // pred_region
      _
    $region49: #{decoder_forward.1} parent=1 // pred_fallthru
      _
    // Predicated region
    $region50: #{decoder_forward.1} parent=1 // pred_check
      _
    $region51: #{decoder_forward.1} parent=1 // pred_check_branch
      %47 = sbr.rel (0) target = $region53
    $region52: #{decoder_forward.1} parent=1 // pred_region
      _
    $region53: #{decoder_forward.1} parent=1 // pred_fallthru
      _
    // Predicated region
    $region54: #{decoder_forward.1} parent=1 // pred_check
      _
    $region55: #{decoder_forward.1} parent=1 // pred_check_branch
      %49 = sbr.rel (0) target = $region57
    $region56: #{decoder_forward.1} parent=1 // pred_region
      _
    $region57: #{decoder_forward.1} parent=1 // pred_fallthru
      _
    // Predicated region
    $region58: #{decoder_forward.1} parent=1 // pred_check
      _
    $region59: #{decoder_forward.1} parent=1 // pred_check_branch
      %51 = sbr.rel (0) target = $region61
    $region60: #{decoder_forward.1} parent=1 // pred_region
      _
    $region61: #{decoder_forward.1} parent=1 // pred_fallthru
      _
    // Predicated region
    $region62: #{decoder_forward.1} parent=1 // pred_check
      _
    $region63: #{decoder_forward.1} parent=1 // pred_check_branch
      %53 = sbr.rel (0) target = $region65
    $region64: #{decoder_forward.1} parent=1 // pred_region
      _
    $region65: #{decoder_forward.1} parent=1 // pred_fallthru
      _
    %v55 = vld [vmem:[%s0] sm:$0xff]
    %v56 = vld [vmem:[%s0 + $0x8] sm:$0xff]
    %v57 = vlaneseq
    %v58 = vand.u32 %v57, 127
    %59 = vset.pattern.permute.xlu0 0
    %60 = vperm.xlu0 %59, %v55
    %v61 = vpop.permute.xlu0 %60
    %62 = vset.pattern.permute.xlu0 0
    %63 = vperm.xlu0 %62, %v56
    %v64 = vpop.permute.xlu0 %63
    %vm65 = vcmp.eq.s32.totalorder %v58, %v61
    %vm66 = vcmp.eq.s32.totalorder %v58, %v64
    %v67 = vsel %vm65, 1, 0
    %v68 = vsel %vm66, 1, 0
    %v69 = vcvt.s32.f32 %v67
    %v70 = vcvt.s32.f32 %v68
    %v71 = vld [vmem:[%s4] sm:$0xff]
    %v72 = vld [vmem:[%s4 + $0x8] sm:$0xff]
    %v73 = vld [vmem:[%s4 + $0x10] sm:$0xff]
    %v74 = vld [vmem:[%s4 + $0x18] sm:$0xff]
    %v75 = vld [vmem:[%s4 + $0x20] sm:$0xff]
    %v76 = vld [vmem:[%s4 + $0x28] sm:$0xff]
    %v77 = vld [vmem:[%s4 + $0x30] sm:$0xff]
    %v78 = vld [vmem:[%s4 + $0x38] sm:$0xff]
    %v79 = vld [vmem:[%s4 + $0x40] sm:$0xff]
    %v80 = vld [vmem:[%s4 + $0x48] sm:$0xff]
    %v81 = vld [vmem:[%s4 + $0x50] sm:$0xff]
    %v82 = vld [vmem:[%s4 + $0x58] sm:$0xff]
    %v83 = vld [vmem:[%s4 + $0x60] sm:$0xff]
    %v84 = vld [vmem:[%s4 + $0x68] sm:$0xff]
    %v85 = vld [vmem:[%s4 + $0x70] sm:$0xff]
    %v86 = vld [vmem:[%s4 + $0x78] sm:$0xff]
    %87 = vmatprep.subr.mxu0 0.0
    %88 = vmatpush1.msra.mxu0 %v71
    %89 = vmatprep.subr.mxu0 0.0
    %90 = vmatpush1.msra.mxu0 %v72
    %91 = vmatprep.subr.mxu0 0.0
    %92 = vmatpush1.msra.mxu0 %v73
    %93 = vmatprep.subr.mxu0 0.0
    %94 = vmatpush1.msra.mxu0 %v74
    %95 = vmatprep.subr.mxu0 0.0
    %96 = vmatpush1.msra.mxu0 %v75
    %97 = vmatprep.subr.mxu0 0.0
    %98 = vmatpush1.msra.mxu0 %v76
    %99 = vmatprep.subr.mxu0 0.0
    %100 = vmatpush1.msra.mxu0 %v77
    %101 = vmatprep.subr.mxu0 0.0
    %102 = vmatpush1.msra.mxu0 %v78
    %103 = vmatprep.subr.mxu0 0.0
    %104 = vmatpush1.msra.mxu0 %v79
    %105 = vmatprep.subr.mxu0 0.0
    %106 = vmatpush1.msra.mxu0 %v80
    %107 = vmatprep.subr.mxu0 0.0
    %108 = vmatpush1.msra.mxu0 %v81
    %109 = vmatprep.subr.mxu0 0.0
    %110 = vmatpush1.msra.mxu0 %v82
    %111 = vmatprep.subr.mxu0 0.0
    %112 = vmatpush1.msra.mxu0 %v83
    %113 = vmatprep.subr.mxu0 0.0
    %114 = vmatpush1.msra.mxu0 %v84
    %115 = vmatprep.subr.mxu0 0.0
    %116 = vmatpush1.msra.mxu0 %v85
    %117 = vmatprep.subr.mxu0 0.0
    %118 = vmatpush1.msra.mxu0 %v86
    %119 = vmatprep.subr.mxu0 0.0
    %120 = vmatpush1.msra.mxu0 0.0
    %121 = vmatprep.subr.mxu0 0.0
    %122 = vmatpush1.msra.mxu0 0.0
    %123 = vmatprep.subr.mxu0 0.0
    %124 = vmatpush1.msra.mxu0 0.0
    %125 = vmatprep.subr.mxu0 0.0
    %126 = vmatpush1.msra.mxu0 0.0
    %127 = vmatprep.subr.mxu0 0.0
    %128 = vmatpush1.msra.mxu0 0.0
    %129 = vmatprep.subr.mxu0 0.0
    %130 = vmatpush1.msra.mxu0 0.0
    %131 = vmatprep.subr.mxu0 0.0
    %132 = vmatpush1.msra.mxu0 0.0
    %133 = vmatprep.subr.mxu0 0.0
    %134 = vmatpush1.msra.mxu0 0.0
    %135 = vmatprep.subr.mxu0 0.0
    %136 = vmatpush1.msra.mxu0 0.0
    %137 = vmatprep.subr.mxu0 0.0
    %138 = vmatpush1.msra.mxu0 0.0
    %139 = vmatprep.subr.mxu0 0.0
    %140 = vmatpush1.msra.mxu0 0.0
    %141 = vmatprep.subr.mxu0 0.0
    %142 = vmatpush1.msra.mxu0 0.0
    %143 = vmatprep.subr.mxu0 0.0
    %144 = vmatpush1.msra.mxu0 0.0
    %145 = vmatprep.subr.mxu0 0.0
    %146 = vmatpush1.msra.mxu0 0.0
    %147 = vmatprep.subr.mxu0 0.0
    %148 = vmatpush1.msra.mxu0 0.0
    %149 = vmatprep.subr.mxu0 0.0
    %150 = vmatpush1.msra.mxu0 0.0
    %151 = vmatprep.mubr.f32.mxu0 0.0
    %152 = vmatmul.mubr.f32.gmra.mrb[0].mxu0 %v69
    %v153 = vpop.f32.mrb[0].mxu0
    %v154 = vadd.f32 0.0, %v153
    %v155 = vpop.f32.mrb[0].mxu0
    %156 = vmatprep.mubr.f32.mxu0 0.0
    %157 = vmatmul.mubr.f32.gmra.mrb[0].mxu0 %v70
    %v158 = vpop.f32.mrb[0].mxu0
    %v159 = vadd.f32 0.0, %v158
    %v160 = vpop.f32.mrb[0].mxu0
    %161 = vdwg.mxu0
    %v162 = vld [vmem:[%s1] sm:$0xff]
    %v163 = vld [vmem:[%s1 + $0x8] sm:$0xff]
    %v164 = vld [vmem:[%s1 + $0x10] sm:$0xff]
    %v165 = vld [vmem:[%s1 + $0x18] sm:$0xff]
    %v166 = vld [vmem:[%s2] sm:$0xff]
    %v167 = vld [vmem:[%s2 + $0x8] sm:$0xff]
    %v168 = vld [vmem:[%s3] sm:$0xff]
    %v169 = vld [vmem:[%s3 + $0x8] sm:$0xff]
    %v170 = vld [vmem:[%s9] sm:$0x3f]
    %v171 = vld [vmem:[%s5] sm:$0xf]
    %v172 = vld [vmem:[%s5 + $0x4] sm:$0xf]
    %v173 = vld [vmem:[%s5 + $0x8] sm:$0xf]
    %v174 = vld [vmem:[%s5 + $0xc] sm:$0xf]
    %v175 = vld [vmem:[%s6] sm:$0x1]
    %v176 = vld [vmem:[%s7] sm:$0xf]
    %v177 = vld [vmem:[%s7 + $0x4] sm:$0xf]
    %v178 = vld [vmem:[%s7 + $0x8] sm:$0xf]
    %v179 = vld [vmem:[%s7 + $0xc] sm:$0xf]
    %v180 = vld [vmem:[%s8] sm:$0x1]
    %v181 = vpack.c.bf16 %v159, %v154
    %v183 = vlaneseq
    %v184 = vshrl.u32 %v183, 7
    %v185 = vsub.s32 0, %v184
    %v186 = vrot.slane %v175, %v185
    %v192 = vunpack.c.l.b16 %v171
    %v193 = vunpack.c.l.b16 %v172
    %v194 = vunpack.c.l.b16 %v173
    %v195 = vunpack.c.l.b16 %v174
    %v196 = vpack.c.b16 %v193, %v192
    %v197 = vpack.c.b16 %v195, %v194
    %vm200 = vcmask 261120
    %v202 = vsel %vm200, %v181, 0
    %204 = vmatprep.subr.bf16.mxu0 0
    %205 = vmatpush1.bf16.msra.mxu0 %v196
    %206 = vmatprep.subr.bf16.mxu0 0
    %207 = vmatpush1.bf16.msra.mxu0 %v197
    %208 = vmatprep.subr.bf16.mxu0 0
    %209 = vmatpush1.bf16.msra.mxu0 0
    %210 = vmatprep.subr.bf16.mxu0 0
    %211 = vmatpush1.bf16.msra.mxu0 0
    %212 = vmatprep.subr.bf16.mxu0 0
    %213 = vmatpush1.bf16.msra.mxu0 0
    %214 = vmatprep.subr.bf16.mxu0 0
    %215 = vmatpush1.bf16.msra.mxu0 0
    %216 = vmatprep.subr.bf16.mxu0 0
    %217 = vmatpush1.bf16.msra.mxu0 0
    %218 = vmatprep.subr.bf16.mxu0 0
    %219 = vmatpush1.bf16.msra.mxu0 0
    %220 = vmatprep.subr.bf16.mxu0 0
    %221 = vmatpush1.bf16.msra.mxu0 0
    %222 = vmatprep.subr.bf16.mxu0 0
    %223 = vmatpush1.bf16.msra.mxu0 0
    %224 = vmatprep.subr.bf16.mxu0 0
    %225 = vmatpush1.bf16.msra.mxu0 0
    %226 = vmatprep.subr.bf16.mxu0 0
    %227 = vmatpush1.bf16.msra.mxu0 0
    %228 = vmatprep.subr.bf16.mxu0 0
    %229 = vmatpush1.bf16.msra.mxu0 0
    %230 = vmatprep.subr.bf16.mxu0 0
    %231 = vmatpush1.bf16.msra.mxu0 0
    %232 = vmatprep.subr.bf16.mxu0 0
    %233 = vmatpush1.bf16.msra.mxu0 0
    %234 = vmatprep.subr.bf16.mxu0 0
    %235 = vmatpush1.bf16.msra.mxu0 0
    %236 = vmatprep.mubr.bf16.mxu0 0
    %237 = vmatmul.mubr.bf16.gmra.mrb[0].mxu0 %v202
    %v238 = vpop.f32.mrb[0].mxu0
    %v239 = vadd.f32 %v186, %v238
    %v240 = vpop.f32.mrb[0].mxu0
    %v241 = vpop.f32.mrb[0].mxu0
    %v242 = vadd.f32 %v186, %v241
    %v243 = vpop.f32.mrb[0].mxu0
    %244 = vdwg.mxu0
    %247 = vrot.lane.b32.xlu0 %v239, 120
    %v248 = vpop.permute.xlu0 %247
    %249 = vrot.lane.b32.xlu0 %v242, 120
    %v250 = vpop.permute.xlu0 %249
    %253 = vrot.lane.b32.xlu0 %v239, 112
    %v254 = vpop.permute.xlu0 %253
    %255 = vrot.lane.b32.xlu0 %v242, 112
    %v256 = vpop.permute.xlu0 %255
    %259 = vrot.lane.b32.xlu0 %v239, 104
    %v260 = vpop.permute.xlu0 %259
    %261 = vrot.lane.b32.xlu0 %v242, 104
    %v262 = vpop.permute.xlu0 %261
    %v265 = vpack.c.bf16 %v242, %v239
    %v266 = vpack.c.bf16 %v250, %v248
    %v267 = vpack.c.bf16 %v256, %v254
    %v268 = vpack.c.bf16 %v262, %v260
    %270 = vrot.lane.b32.xlu0 %v265, 96
    %v271 = vpop.permute.xlu0 %270
    %vm272 = vcmask 64512
    %v274 = vsel %vm272, %v265, 0
    %v277 = vsel %vm272, %v271, 0
    %279 = vmatprep.subr.bf16.mxu0 0
    %280 = vmatpush1.bf16.xpose.msra.mxu0 %v277
    %281 = vmatprep.subr.bf16.mxu0 0
    %282 = vmatpush1.bf16.xpose.msra.mxu0 0
    %283 = vmatprep.subr.bf16.mxu0 0
    %284 = vmatpush1.bf16.xpose.msra.mxu0 0
    %285 = vmatprep.subr.bf16.mxu0 0
    %286 = vmatpush1.bf16.xpose.msra.mxu0 0
    %287 = vmatprep.subr.bf16.mxu0 0
    %288 = vmatpush1.bf16.xpose.msra.mxu0 0
    %289 = vmatprep.subr.bf16.mxu0 0
    %290 = vmatpush1.bf16.xpose.msra.mxu0 0
    %291 = vmatprep.subr.bf16.mxu0 0
    %292 = vmatpush1.bf16.xpose.msra.mxu0 0
    %293 = vmatprep.subr.bf16.mxu0 0
    %294 = vmatpush1.bf16.xpose.msra.mxu0 0
    %295 = vmatprep.subr.bf16.mxu0 0
    %296 = vmatpush1.bf16.xpose.msra.mxu0 0
    %297 = vmatprep.subr.bf16.mxu0 0
    %298 = vmatpush1.bf16.xpose.msra.mxu0 0
    %299 = vmatprep.subr.bf16.mxu0 0
    %300 = vmatpush1.bf16.xpose.msra.mxu0 0
    %301 = vmatprep.subr.bf16.mxu0 0
    %302 = vmatpush1.bf16.xpose.msra.mxu0 0
    %303 = vmatprep.subr.bf16.mxu0 0
    %304 = vmatpush1.bf16.xpose.msra.mxu0 0
    %305 = vmatprep.subr.bf16.mxu0 0
    %306 = vmatpush1.bf16.xpose.msra.mxu0 0
    %307 = vmatprep.subr.bf16.mxu0 0
    %308 = vmatpush1.bf16.xpose.msra.mxu0 0
    %309 = vmatprep.subr.bf16.mxu0 0
    %310 = vmatpush1.bf16.xpose.msra.mxu0 0
    %311 = vmatprep.mubr.bf16.mxu0 0
    %312 = vmatmul.mubr.bf16.gmra.mrb[0].mxu0 %v274
    %v313 = vpop.f32.mrb[0].mxu0
    %v314 = vadd.f32 0.0, %v313
    %v315 = vpop.f32.mrb[0].mxu0
    %v316 = vpop.f32.mrb[0].mxu0
    %v317 = vadd.f32 0.0, %v316
    %v318 = vpop.f32.mrb[0].mxu0
    %319 = vdwg.mxu0
    %321 = vrot.lane.b32.xlu0 %v266, 96
    %v322 = vpop.permute.xlu0 %321
    %v324 = vsel %vm272, %v266, 0
    %v327 = vsel %vm272, %v322, 0
    %329 = vmatprep.subr.bf16.mxu0 0
    %330 = vmatpush1.bf16.xpose.msra.mxu0 %v327
    %331 = vmatprep.subr.bf16.mxu0 0
    %332 = vmatpush1.bf16.xpose.msra.mxu0 0
    %333 = vmatprep.subr.bf16.mxu0 0
    %334 = vmatpush1.bf16.xpose.msra.mxu0 0
    %335 = vmatprep.subr.bf16.mxu0 0
    %336 = vmatpush1.bf16.xpose.msra.mxu0 0
    %337 = vmatprep.subr.bf16.mxu0 0
    %338 = vmatpush1.bf16.xpose.msra.mxu0 0
    %339 = vmatprep.subr.bf16.mxu0 0
    %340 = vmatpush1.bf16.xpose.msra.mxu0 0
    %341 = vmatprep.subr.bf16.mxu0 0
    %342 = vmatpush1.bf16.xpose.msra.mxu0 0
    %343 = vmatprep.subr.bf16.mxu0 0
    %344 = vmatpush1.bf16.xpose.msra.mxu0 0
    %345 = vmatprep.subr.bf16.mxu0 0
    %346 = vmatpush1.bf16.xpose.msra.mxu0 0
    %347 = vmatprep.subr.bf16.mxu0 0
    %348 = vmatpush1.bf16.xpose.msra.mxu0 0
    %349 = vmatprep.subr.bf16.mxu0 0
    %350 = vmatpush1.bf16.xpose.msra.mxu0 0
    %351 = vmatprep.subr.bf16.mxu0 0
    %352 = vmatpush1.bf16.xpose.msra.mxu0 0
    %353 = vmatprep.subr.bf16.mxu0 0
    %354 = vmatpush1.bf16.xpose.msra.mxu0 0
    %355 = vmatprep.subr.bf16.mxu0 0
    %356 = vmatpush1.bf16.xpose.msra.mxu0 0
    %357 = vmatprep.subr.bf16.mxu0 0
    %358 = vmatpush1.bf16.xpose.msra.mxu0 0
    %359 = vmatprep.subr.bf16.mxu0 0
    %360 = vmatpush1.bf16.xpose.msra.mxu0 0
    %361 = vmatprep.mubr.bf16.mxu0 0
    %362 = vmatmul.mubr.bf16.gmra.mrb[0].mxu0 %v324
    %v363 = vpop.f32.mrb[0].mxu0
    %v364 = vadd.f32 0.0, %v363
    %v365 = vpop.f32.mrb[0].mxu0
    %v366 = vpop.f32.mrb[0].mxu0
    %v367 = vadd.f32 0.0, %v366
    %v368 = vpop.f32.mrb[0].mxu0
    %369 = vdwg.mxu0
    %371 = vrot.lane.b32.xlu0 %v267, 96
    %v372 = vpop.permute.xlu0 %371
    %v374 = vsel %vm272, %v267, 0
    %v377 = vsel %vm272, %v372, 0
    %379 = vmatprep.subr.bf16.mxu0 0
    %380 = vmatpush1.bf16.xpose.msra.mxu0 %v377
    %381 = vmatprep.subr.bf16.mxu0 0
    %382 = vmatpush1.bf16.xpose.msra.mxu0 0
    %383 = vmatprep.subr.bf16.mxu0 0
    %384 = vmatpush1.bf16.xpose.msra.mxu0 0
    %385 = vmatprep.subr.bf16.mxu0 0
    %386 = vmatpush1.bf16.xpose.msra.mxu0 0
    %387 = vmatprep.subr.bf16.mxu0 0
    %388 = vmatpush1.bf16.xpose.msra.mxu0 0
    %389 = vmatprep.subr.bf16.mxu0 0
    %390 = vmatpush1.bf16.xpose.msra.mxu0 0
    %391 = vmatprep.subr.bf16.mxu0 0
    %392 = vmatpush1.bf16.xpose.msra.mxu0 0
    %393 = vmatprep.subr.bf16.mxu0 0
    %394 = vmatpush1.bf16.xpose.msra.mxu0 0
    %395 = vmatprep.subr.bf16.mxu0 0
    %396 = vmatpush1.bf16.xpose.msra.mxu0 0
    %397 = vmatprep.subr.bf16.mxu0 0
    %398 = vmatpush1.bf16.xpose.msra.mxu0 0
    %399 = vmatprep.subr.bf16.mxu0 0
    %400 = vmatpush1.bf16.xpose.msra.mxu0 0
    %401 = vmatprep.subr.bf16.mxu0 0
    %402 = vmatpush1.bf16.xpose.msra.mxu0 0
    %403 = vmatprep.subr.bf16.mxu0 0
    %404 = vmatpush1.bf16.xpose.msra.mxu0 0
    %405 = vmatprep.subr.bf16.mxu0 0
    %406 = vmatpush1.bf16.xpose.msra.mxu0 0
    %407 = vmatprep.subr.bf16.mxu0 0
    %408 = vmatpush1.bf16.xpose.msra.mxu0 0
    %409 = vmatprep.subr.bf16.mxu0 0
    %410 = vmatpush1.bf16.xpose.msra.mxu0 0
    %411 = vmatprep.mubr.bf16.mxu0 0
    %412 = vmatmul.mubr.bf16.gmra.mrb[0].mxu0 %v374
    %v413 = vpop.f32.mrb[0].mxu0
    %v414 = vadd.f32 0.0, %v413
    %v415 = vpop.f32.mrb[0].mxu0
    %v416 = vpop.f32.mrb[0].mxu0
    %v417 = vadd.f32 0.0, %v416
    %v418 = vpop.f32.mrb[0].mxu0
    %419 = vdwg.mxu0
    %421 = vrot.lane.b32.xlu0 %v268, 96
    %v422 = vpop.permute.xlu0 %421
    %v424 = vsel %vm272, %v268, 0
    %v427 = vsel %vm272, %v422, 0
    %429 = vmatprep.subr.bf16.mxu0 0
    %430 = vmatpush1.bf16.xpose.msra.mxu0 %v427
    %431 = vmatprep.subr.bf16.mxu0 0
    %432 = vmatpush1.bf16.xpose.msra.mxu0 0
    %433 = vmatprep.subr.bf16.mxu0 0
    %434 = vmatpush1.bf16.xpose.msra.mxu0 0
    %435 = vmatprep.subr.bf16.mxu0 0
    %436 = vmatpush1.bf16.xpose.msra.mxu0 0
    %437 = vmatprep.subr.bf16.mxu0 0
    %438 = vmatpush1.bf16.xpose.msra.mxu0 0
    %439 = vmatprep.subr.bf16.mxu0 0
    %440 = vmatpush1.bf16.xpose.msra.mxu0 0
    %441 = vmatprep.subr.bf16.mxu0 0
    %442 = vmatpush1.bf16.xpose.msra.mxu0 0
    %443 = vmatprep.subr.bf16.mxu0 0
    %444 = vmatpush1.bf16.xpose.msra.mxu0 0
    %445 = vmatprep.subr.bf16.mxu0 0
    %446 = vmatpush1.bf16.xpose.msra.mxu0 0
    %447 = vmatprep.subr.bf16.mxu0 0
    %448 = vmatpush1.bf16.xpose.msra.mxu0 0
    %449 = vmatprep.subr.bf16.mxu0 0
    %450 = vmatpush1.bf16.xpose.msra.mxu0 0
    %451 = vmatprep.subr.bf16.mxu0 0
    %452 = vmatpush1.bf16.xpose.msra.mxu0 0
    %453 = vmatprep.subr.bf16.mxu0 0
    %454 = vmatpush1.bf16.xpose.msra.mxu0 0
    %455 = vmatprep.subr.bf16.mxu0 0
    %456 = vmatpush1.bf16.xpose.msra.mxu0 0
    %457 = vmatprep.subr.bf16.mxu0 0
    %458 = vmatpush1.bf16.xpose.msra.mxu0 0
    %459 = vmatprep.subr.bf16.mxu0 0
    %460 = vmatpush1.bf16.xpose.msra.mxu0 0
    %461 = vmatprep.mubr.bf16.mxu0 0
    %462 = vmatmul.mubr.bf16.gmra.mrb[0].mxu0 %v424
    %v463 = vpop.f32.mrb[0].mxu0
    %v464 = vadd.f32 0.0, %v463
    %v465 = vpop.f32.mrb[0].mxu0
    %v466 = vpop.f32.mrb[0].mxu0
    %v467 = vadd.f32 0.0, %v466
    %v468 = vpop.f32.mrb[0].mxu0
    %469 = vdwg.mxu0
    %v470 = vmul.f32 %v314, 0.35355338
    %v471 = vmul.f32 %v317, 0.35355338
    %v472 = vmul.f32 %v364, 0.35355338
    %v473 = vmul.f32 %v367, 0.35355338
    %v474 = vmul.f32 %v414, 0.35355338
    %v475 = vmul.f32 %v417, 0.35355338
    %v476 = vmul.f32 %v464, 0.35355338
    %v477 = vmul.f32 %v467, 0.35355338
    %v478 = vadd.f32 %v470, %v166
    %v479 = vadd.f32 %v471, %v167
    %v480 = vadd.f32 %v472, %v166
    %v481 = vadd.f32 %v473, %v167
    %v482 = vadd.f32 %v474, %v166
    %v483 = vadd.f32 %v475, %v167
    %v484 = vadd.f32 %v476, %v166
    %v485 = vadd.f32 %v477, %v167
    %vm486 = vcmask 130048
    %v487 = vsel %vm486, %v478, -inf
    %488 = vmax.xlane.f32.xlu0 %v487
    %v489 = vpop.xlane.xlu0 %488
    %v490 = vsel %vm486, %v479, -inf
    %491 = vmax.xlane.f32.xlu0 %v490
    %v492 = vpop.xlane.xlu0 %491
    %v493 = vsel %vm486, %v480, -inf
    %494 = vmax.xlane.f32.xlu0 %v493
    %v495 = vpop.xlane.xlu0 %494
    %v496 = vsel %vm486, %v481, -inf
    %497 = vmax.xlane.f32.xlu0 %v496
    %v498 = vpop.xlane.xlu0 %497
    %v499 = vsel %vm486, %v482, -inf
    %500 = vmax.xlane.f32.xlu0 %v499
    %v501 = vpop.xlane.xlu0 %500
    %v502 = vsel %vm486, %v483, -inf
    %503 = vmax.xlane.f32.xlu0 %v502
    %v504 = vpop.xlane.xlu0 %503
    %v505 = vsel %vm486, %v484, -inf
    %506 = vmax.xlane.f32.xlu0 %v505
    %v507 = vpop.xlane.xlu0 %506
    %v508 = vsel %vm486, %v485, -inf
    %509 = vmax.xlane.f32.xlu0 %v508
    %v510 = vpop.xlane.xlu0 %509
    %v511 = vsub.f32 %v478, %v489
    %v512 = vsub.f32 %v479, %v492
    %v513 = vsub.f32 %v480, %v495
    %v514 = vsub.f32 %v481, %v498
    %v515 = vsub.f32 %v482, %v501
    %v516 = vsub.f32 %v483, %v504
    %v517 = vsub.f32 %v484, %v507
    %v518 = vsub.f32 %v485, %v510
    %v519 = vmul.f32 %v511, 1.442695
    %v520 = vpow.pop %v519
    %v521 = vmul.f32 %v512, 1.442695
    %v522 = vpow.pop %v521
    %v523 = vmul.f32 %v513, 1.442695
    %v524 = vpow.pop %v523
    %v525 = vmul.f32 %v514, 1.442695
    %v526 = vpow.pop %v525
    %v527 = vmul.f32 %v515, 1.442695
    %v528 = vpow.pop %v527
    %v529 = vmul.f32 %v516, 1.442695
    %v530 = vpow.pop %v529
    %v531 = vmul.f32 %v517, 1.442695
    %v532 = vpow.pop %v531
    %v533 = vmul.f32 %v518, 1.442695
    %v534 = vpow.pop %v533
    %v535 = vsel %vm486, %v520, 0.0
    %536 = vadd.xlane.f32.xlu0 %v535
    %v537 = vpop.xlane.xlu0 %536
    %v538 = vsel %vm486, %v522, 0.0
    %539 = vadd.xlane.f32.xlu0 %v538
    %v540 = vpop.xlane.xlu0 %539
    %v541 = vsel %vm486, %v524, 0.0
    %542 = vadd.xlane.f32.xlu0 %v541
    %v543 = vpop.xlane.xlu0 %542
    %v544 = vsel %vm486, %v526, 0.0
    %545 = vadd.xlane.f32.xlu0 %v544
    %v546 = vpop.xlane.xlu0 %545
    %v547 = vsel %vm486, %v528, 0.0
    %548 = vadd.xlane.f32.xlu0 %v547
    %v549 = vpop.xlane.xlu0 %548
    %v550 = vsel %vm486, %v530, 0.0
    %551 = vadd.xlane.f32.xlu0 %v550
    %v552 = vpop.xlane.xlu0 %551
    %v553 = vsel %vm486, %v532, 0.0
    %554 = vadd.xlane.f32.xlu0 %v553
    %v555 = vpop.xlane.xlu0 %554
    %v556 = vsel %vm486, %v534, 0.0
    %557 = vadd.xlane.f32.xlu0 %v556
    %v558 = vpop.xlane.xlu0 %557
    %v559 = vrcp.pop %v537
    %v560 = vrcp.pop %v540
    %v561 = vrcp.pop %v543
    %v562 = vrcp.pop %v546
    %v563 = vrcp.pop %v549
    %v564 = vrcp.pop %v552
    %v565 = vrcp.pop %v555
    %v566 = vrcp.pop %v558
    %v567 = vmul.f32 %v520, %v559
    %v568 = vmul.f32 %v522, %v560
    %v569 = vmul.f32 %v524, %v561
    %v570 = vmul.f32 %v526, %v562
    %v571 = vmul.f32 %v528, %v563
    %v572 = vmul.f32 %v530, %v564
    %v573 = vmul.f32 %v532, %v565
    %v574 = vmul.f32 %v534, %v566
    %v575 = vpack.c.bf16 %v568, %v567
    %v576 = vpack.c.bf16 %v570, %v569
    %v577 = vpack.c.bf16 %v572, %v571
    %v578 = vpack.c.bf16 %v574, %v573
    %579 = vrot.lane.b32.xlu0 %v265, 64
    %v580 = vpop.permute.xlu0 %579
    %v583 = vsel %vm486, %v575, 0
    %585 = vmatprep.subr.bf16.mxu0 0
    %586 = vmatpush1.bf16.msra.mxu0 %v580
    %587 = vmatprep.subr.bf16.mxu0 0
    %588 = vmatpush1.bf16.msra.mxu0 0
    %589 = vmatprep.subr.bf16.mxu0 0
    %590 = vmatpush1.bf16.msra.mxu0 0
    %591 = vmatprep.subr.bf16.mxu0 0
    %592 = vmatpush1.bf16.msra.mxu0 0
    %593 = vmatprep.subr.bf16.mxu0 0
    %594 = vmatpush1.bf16.msra.mxu0 0
    %595 = vmatprep.subr.bf16.mxu0 0
    %596 = vmatpush1.bf16.msra.mxu0 0
    %597 = vmatprep.subr.bf16.mxu0 0
    %598 = vmatpush1.bf16.msra.mxu0 0
    %599 = vmatprep.subr.bf16.mxu0 0
    %600 = vmatpush1.bf16.msra.mxu0 0
    %601 = vmatprep.subr.bf16.mxu0 0
    %602 = vmatpush1.bf16.msra.mxu0 0
    %603 = vmatprep.subr.bf16.mxu0 0
    %604 = vmatpush1.bf16.msra.mxu0 0
    %605 = vmatprep.subr.bf16.mxu0 0
    %606 = vmatpush1.bf16.msra.mxu0 0
    %607 = vmatprep.subr.bf16.mxu0 0
    %608 = vmatpush1.bf16.msra.mxu0 0
    %609 = vmatprep.subr.bf16.mxu0 0
    %610 = vmatpush1.bf16.msra.mxu0 0
    %611 = vmatprep.subr.bf16.mxu0 0
    %612 = vmatpush1.bf16.msra.mxu0 0
    %613 = vmatprep.subr.bf16.mxu0 0
    %614 = vmatpush1.bf16.msra.mxu0 0
    %615 = vmatprep.subr.bf16.mxu0 0
    %616 = vmatpush1.bf16.msra.mxu0 0
    %617 = vmatprep.mubr.bf16.mxu0 0
    %618 = vmatmul.mubr.bf16.gmra.mrb[0].mxu0 %v583
    %v619 = vpop.f32.mrb[0].mxu0
    %v620 = vadd.f32 0.0, %v619
    %v621 = vpop.f32.mrb[0].mxu0
    %v622 = vpop.f32.mrb[0].mxu0
    %v623 = vadd.f32 0.0, %v622
    %v624 = vpop.f32.mrb[0].mxu0
    %625 = vdwg.mxu0
    %626 = vrot.lane.b32.xlu0 %v266, 64
    %v627 = vpop.permute.xlu0 %626
    %v630 = vsel %vm486, %v576, 0
    %632 = vmatprep.subr.bf16.mxu0 0
    %633 = vmatpush1.bf16.msra.mxu0 %v627
    %634 = vmatprep.subr.bf16.mxu0 0
    %635 = vmatpush1.bf16.msra.mxu0 0
    %636 = vmatprep.subr.bf16.mxu0 0
    %637 = vmatpush1.bf16.msra.mxu0 0
    %638 = vmatprep.subr.bf16.mxu0 0
    %639 = vmatpush1.bf16.msra.mxu0 0
    %640 = vmatprep.subr.bf16.mxu0 0
    %641 = vmatpush1.bf16.msra.mxu0 0
    %642 = vmatprep.subr.bf16.mxu0 0
    %643 = vmatpush1.bf16.msra.mxu0 0
    %644 = vmatprep.subr.bf16.mxu0 0
    %645 = vmatpush1.bf16.msra.mxu0 0
    %646 = vmatprep.subr.bf16.mxu0 0
    %647 = vmatpush1.bf16.msra.mxu0 0
    %648 = vmatprep.subr.bf16.mxu0 0
    %649 = vmatpush1.bf16.msra.mxu0 0
    %650 = vmatprep.subr.bf16.mxu0 0
    %651 = vmatpush1.bf16.msra.mxu0 0
    %652 = vmatprep.subr.bf16.mxu0 0
    %653 = vmatpush1.bf16.msra.mxu0 0
    %654 = vmatprep.subr.bf16.mxu0 0
    %655 = vmatpush1.bf16.msra.mxu0 0
    %656 = vmatprep.subr.bf16.mxu0 0
    %657 = vmatpush1.bf16.msra.mxu0 0
    %658 = vmatprep.subr.bf16.mxu0 0
    %659 = vmatpush1.bf16.msra.mxu0 0
    %660 = vmatprep.subr.bf16.mxu0 0
    %661 = vmatpush1.bf16.msra.mxu0 0
    %662 = vmatprep.subr.bf16.mxu0 0
    %663 = vmatpush1.bf16.msra.mxu0 0
    %664 = vmatprep.mubr.bf16.mxu0 0
    %665 = vmatmul.mubr.bf16.gmra.mrb[0].mxu0 %v630
    %v666 = vpop.f32.mrb[0].mxu0
    %v667 = vadd.f32 0.0, %v666
    %v668 = vpop.f32.mrb[0].mxu0
    %v669 = vpop.f32.mrb[0].mxu0
    %v670 = vadd.f32 0.0, %v669
    %v671 = vpop.f32.mrb[0].mxu0
    %672 = vdwg.mxu0
    %673 = vrot.lane.b32.xlu0 %v267, 64
    %v674 = vpop.permute.xlu0 %673
    %v677 = vsel %vm486, %v577, 0
    %679 = vmatprep.subr.bf16.mxu0 0
    %680 = vmatpush1.bf16.msra.mxu0 %v674
    %681 = vmatprep.subr.bf16.mxu0 0
    %682 = vmatpush1.bf16.msra.mxu0 0
    %683 = vmatprep.subr.bf16.mxu0 0
    %684 = vmatpush1.bf16.msra.mxu0 0
    %685 = vmatprep.subr.bf16.mxu0 0
    %686 = vmatpush1.bf16.msra.mxu0 0
    %687 = vmatprep.subr.bf16.mxu0 0
    %688 = vmatpush1.bf16.msra.mxu0 0
    %689 = vmatprep.subr.bf16.mxu0 0
    %690 = vmatpush1.bf16.msra.mxu0 0
    %691 = vmatprep.subr.bf16.mxu0 0
    %692 = vmatpush1.bf16.msra.mxu0 0
    %693 = vmatprep.subr.bf16.mxu0 0
    %694 = vmatpush1.bf16.msra.mxu0 0
    %695 = vmatprep.subr.bf16.mxu0 0
    %696 = vmatpush1.bf16.msra.mxu0 0
    %697 = vmatprep.subr.bf16.mxu0 0
    %698 = vmatpush1.bf16.msra.mxu0 0
    %699 = vmatprep.subr.bf16.mxu0 0
    %700 = vmatpush1.bf16.msra.mxu0 0
    %701 = vmatprep.subr.bf16.mxu0 0
    %702 = vmatpush1.bf16.msra.mxu0 0
    %703 = vmatprep.subr.bf16.mxu0 0
    %704 = vmatpush1.bf16.msra.mxu0 0
    %705 = vmatprep.subr.bf16.mxu0 0
    %706 = vmatpush1.bf16.msra.mxu0 0
    %707 = vmatprep.subr.bf16.mxu0 0
    %708 = vmatpush1.bf16.msra.mxu0 0
    %709 = vmatprep.subr.bf16.mxu0 0
    %710 = vmatpush1.bf16.msra.mxu0 0
    %711 = vmatprep.mubr.bf16.mxu0 0
    %712 = vmatmul.mubr.bf16.gmra.mrb[0].mxu0 %v677
    %v713 = vpop.f32.mrb[0].mxu0
    %v714 = vadd.f32 0.0, %v713
    %v715 = vpop.f32.mrb[0].mxu0
    %v716 = vpop.f32.mrb[0].mxu0
    %v717 = vadd.f32 0.0, %v716
    %v718 = vpop.f32.mrb[0].mxu0
    %719 = vdwg.mxu0
    %720 = vrot.lane.b32.xlu0 %v268, 64
    %v721 = vpop.permute.xlu0 %720
    %v724 = vsel %vm486, %v578, 0
    %726 = vmatprep.subr.bf16.mxu0 0
    %727 = vmatpush1.bf16.msra.mxu0 %v721
    %728 = vmatprep.subr.bf16.mxu0 0
    %729 = vmatpush1.bf16.msra.mxu0 0
    %730 = vmatprep.subr.bf16.mxu0 0
    %731 = vmatpush1.bf16.msra.mxu0 0
    %732 = vmatprep.subr.bf16.mxu0 0
    %733 = vmatpush1.bf16.msra.mxu0 0
    %734 = vmatprep.subr.bf16.mxu0 0
    %735 = vmatpush1.bf16.msra.mxu0 0
    %736 = vmatprep.subr.bf16.mxu0 0
    %737 = vmatpush1.bf16.msra.mxu0 0
    %738 = vmatprep.subr.bf16.mxu0 0
    %739 = vmatpush1.bf16.msra.mxu0 0
    %740 = vmatprep.subr.bf16.mxu0 0
    %741 = vmatpush1.bf16.msra.mxu0 0
    %742 = vmatprep.subr.bf16.mxu0 0
    %743 = vmatpush1.bf16.msra.mxu0 0
    %744 = vmatprep.subr.bf16.mxu0 0
    %745 = vmatpush1.bf16.msra.mxu0 0
    %746 = vmatprep.subr.bf16.mxu0 0
    %747 = vmatpush1.bf16.msra.mxu0 0
    %748 = vmatprep.subr.bf16.mxu0 0
    %749 = vmatpush1.bf16.msra.mxu0 0
    %750 = vmatprep.subr.bf16.mxu0 0
    %751 = vmatpush1.bf16.msra.mxu0 0
    %752 = vmatprep.subr.bf16.mxu0 0
    %753 = vmatpush1.bf16.msra.mxu0 0
    %754 = vmatprep.subr.bf16.mxu0 0
    %755 = vmatpush1.bf16.msra.mxu0 0
    %756 = vmatprep.subr.bf16.mxu0 0
    %757 = vmatpush1.bf16.msra.mxu0 0
    %758 = vmatprep.mubr.bf16.mxu0 0
    %759 = vmatmul.mubr.bf16.gmra.mrb[0].mxu0 %v724
    %v760 = vpop.f32.mrb[0].mxu0
    %v761 = vadd.f32 0.0, %v760
    %v762 = vpop.f32.mrb[0].mxu0
    %v763 = vpop.f32.mrb[0].mxu0
    %v764 = vadd.f32 0.0, %v763
    %v765 = vpop.f32.mrb[0].mxu0
    %766 = vdwg.mxu0
    %769 = vrot.lane.b32.xlu0 %v667, 8
    %v770 = vpop.permute.xlu0 %769
    %771 = vrot.lane.b32.xlu0 %v670, 8
    %v772 = vpop.permute.xlu0 %771
    %777 = vrot.lane.b32.xlu0 %v714, 16
    %v778 = vpop.permute.xlu0 %777
    %779 = vrot.lane.b32.xlu0 %v717, 16
    %v780 = vpop.permute.xlu0 %779
    %785 = vrot.lane.b32.xlu0 %v761, 24
    %v786 = vpop.permute.xlu0 %785
    %787 = vrot.lane.b32.xlu0 %v764, 24
    %v788 = vpop.permute.xlu0 %787
    %v791 = vsel %vm272, %v620, %v770
    %v792 = vsel %vm272, %v623, %v772
    %v793 = vsel %vm486, %v791, %v778
    %v794 = vsel %vm486, %v792, %v780
    %vm795 = vcmask 195584
    %v796 = vsel %vm795, %v793, %v786
    %v797 = vsel %vm795, %v794, %v788
    %v798 = vpack.c.bf16 %v797, %v796
    %v800 = vlaneseq
    %v801 = vshrl.u32 %v800, 7
    %v802 = vsub.s32 0, %v801
    %v803 = vrot.slane %v180, %v802
    %v809 = vunpack.c.l.b16 %v176
    %v810 = vunpack.c.l.b16 %v177
    %v811 = vunpack.c.l.b16 %v178
    %v812 = vunpack.c.l.b16 %v179
    %v813 = vpack.c.b16 %v810, %v809
    %v814 = vpack.c.b16 %v812, %v811
    %v818 = vsel %vm200, %v798, 0
    %820 = vmatprep.subr.bf16.mxu0 0
    %821 = vmatpush1.bf16.msra.mxu0 %v813
    %822 = vmatprep.subr.bf16.mxu0 0
    %823 = vmatpush1.bf16.msra.mxu0 %v814
    %824 = vmatprep.subr.bf16.mxu0 0
    %825 = vmatpush1.bf16.msra.mxu0 0
    %826 = vmatprep.subr.bf16.mxu0 0
    %827 = vmatpush1.bf16.msra.mxu0 0
    %828 = vmatprep.subr.bf16.mxu0 0
    %829 = vmatpush1.bf16.msra.mxu0 0
    %830 = vmatprep.subr.bf16.mxu0 0
    %831 = vmatpush1.bf16.msra.mxu0 0
    %832 = vmatprep.subr.bf16.mxu0 0
    %833 = vmatpush1.bf16.msra.mxu0 0
    %834 = vmatprep.subr.bf16.mxu0 0
    %835 = vmatpush1.bf16.msra.mxu0 0
    %836 = vmatprep.subr.bf16.mxu0 0
    %837 = vmatpush1.bf16.msra.mxu0 0
    %838 = vmatprep.subr.bf16.mxu0 0
    %839 = vmatpush1.bf16.msra.mxu0 0
    %840 = vmatprep.subr.bf16.mxu0 0
    %841 = vmatpush1.bf16.msra.mxu0 0
    %842 = vmatprep.subr.bf16.mxu0 0
    %843 = vmatpush1.bf16.msra.mxu0 0
    %844 = vmatprep.subr.bf16.mxu0 0
    %845 = vmatpush1.bf16.msra.mxu0 0
    %846 = vmatprep.subr.bf16.mxu0 0
    %847 = vmatpush1.bf16.msra.mxu0 0
    %848 = vmatprep.subr.bf16.mxu0 0
    %849 = vmatpush1.bf16.msra.mxu0 0
    %850 = vmatprep.subr.bf16.mxu0 0
    %851 = vmatpush1.bf16.msra.mxu0 0
    %852 = vmatprep.mubr.bf16.mxu0 0
    %853 = vmatmul.mubr.bf16.gmra.mrb[0].mxu0 %v818
    %v854 = vpop.f32.mrb[0].mxu0
    %v855 = vadd.f32 %v803, %v854
    %v856 = vpop.f32.mrb[0].mxu0
    %v857 = vpop.f32.mrb[0].mxu0
    %v858 = vadd.f32 %v803, %v857
    %v859 = vpop.f32.mrb[0].mxu0
    %860 = vdwg.mxu0
    %v861 = vadd.f32 %v154, %v855
    %v862 = vadd.f32 %v159, %v858
    %v863 = vsel %vm200, %v861, 0.0
    %864 = vadd.xlane.f32.xlu0 %v863
    %v865 = vpop.xlane.xlu0 %864
    %v866 = vsel %vm200, %v862, 0.0
    %867 = vadd.xlane.f32.xlu0 %v866
    %v868 = vpop.xlane.xlu0 %867
    %v869 = vrcp.pop 32.0
    %v870 = vmul.f32 %v865, %v869
    %v871 = vmul.f32 %v868, %v869
    %v872 = vsub.f32 %v861, %v870
    %v873 = vsub.f32 %v862, %v871
    %v874 = vmul.f32 %v872, %v872
    %v875 = vmul.f32 %v873, %v873
    %v876 = vsel %vm200, %v874, 0.0
    %877 = vadd.xlane.f32.xlu0 %v876
    %v878 = vpop.xlane.xlu0 %877
    %v879 = vsel %vm200, %v875, 0.0
    %880 = vadd.xlane.f32.xlu0 %v879
    %v881 = vpop.xlane.xlu0 %880
    %v882 = vmul.f32 %v878, %v869
    %v883 = vmul.f32 %v881, %v869
    %v884 = vadd.f32 %v882, 1e-05
    %v885 = vadd.f32 %v883, 1e-05
    %v886 = vrsqrt.pop %v884
    %v887 = vrsqrt.pop %v885
    %v888 = vmul.f32 %v872, %v886
    %v889 = vmul.f32 %v873, %v887
    %v890 = vlaneseq
    %v891 = vshrl.u32 %v890, 7
    %v892 = vsub.s32 0, %v891
    %v893 = vrot.slane %v170, %v892
    %v894 = vmul.f32 %v888, %v893
    %v895 = vmul.f32 %v889, %v893
    %v896 = vlaneseq
    %v897 = vshrl.u32 %v896, 7
    %v898 = vsub.s32 1, %v897
    %v899 = vrot.slane %v170, %v898
    %v900 = vadd.f32 %v894, %v899
    %v901 = vadd.f32 %v895, %v899
    %s902 = scalar_lea.vmem %s5, 16
    %v903 = vld [vmem:[%s902] sm:$0xf]
    %v904 = vld [vmem:[%s902 + $0x4] sm:$0xf]
    %v905 = vld [vmem:[%s902 + $0x8] sm:$0xf]
    %v906 = vld [vmem:[%s902 + $0xc] sm:$0xf]
    %s907 = scalar_lea.vmem %s6, 1
    %v908 = vld [vmem:[%s907] sm:$0x1]
    %s909 = scalar_lea.vmem %s7, 16
    %v910 = vld [vmem:[%s909] sm:$0xf]
    %v911 = vld [vmem:[%s909 + $0x4] sm:$0xf]
    %v912 = vld [vmem:[%s909 + $0x8] sm:$0xf]
    %v913 = vld [vmem:[%s909 + $0xc] sm:$0xf]
    %s914 = scalar_lea.vmem %s8, 1
    %v915 = vld [vmem:[%s914] sm:$0x1]
    %v916 = vpack.c.bf16 %v901, %v900
    %v917 = vpack.c.bf16 %v163, %v162
    %v918 = vpack.c.bf16 %v165, %v164
    %v920 = vlaneseq
    %v921 = vshrl.u32 %v920, 7
    %v922 = vsub.s32 0, %v921
    %v923 = vrot.slane %v908, %v922
    %v929 = vunpack.c.l.b16 %v903
    %v930 = vunpack.c.l.b16 %v904
    %v931 = vunpack.c.l.b16 %v905
    %v932 = vunpack.c.l.b16 %v906
    %v933 = vpack.c.b16 %v930, %v929
    %v934 = vpack.c.b16 %v932, %v931
    %v938 = vsel %vm200, %v916, 0
    %940 = vmatprep.subr.bf16.mxu0 0
    %941 = vmatpush1.bf16.msra.mxu0 %v933
    %942 = vmatprep.subr.bf16.mxu0 0
    %943 = vmatpush1.bf16.msra.mxu0 %v934
    %944 = vmatprep.subr.bf16.mxu0 0
    %945 = vmatpush1.bf16.msra.mxu0 0
    %946 = vmatprep.subr.bf16.mxu0 0
    %947 = vmatpush1.bf16.msra.mxu0 0
    %948 = vmatprep.subr.bf16.mxu0 0
    %949 = vmatpush1.bf16.msra.mxu0 0
    %950 = vmatprep.subr.bf16.mxu0 0
    %951 = vmatpush1.bf16.msra.mxu0 0
    %952 = vmatprep.subr.bf16.mxu0 0
    %953 = vmatpush1.bf16.msra.mxu0 0
    %954 = vmatprep.subr.bf16.mxu0 0
    %955 = vmatpush1.bf16.msra.mxu0 0
    %956 = vmatprep.subr.bf16.mxu0 0
    %957 = vmatpush1.bf16.msra.mxu0 0
    %958 = vmatprep.subr.bf16.mxu0 0
    %959 = vmatpush1.bf16.msra.mxu0 0
    %960 = vmatprep.subr.bf16.mxu0 0
    %961 = vmatpush1.bf16.msra.mxu0 0
    %962 = vmatprep.subr.bf16.mxu0 0
    %963 = vmatpush1.bf16.msra.mxu0 0
    %964 = vmatprep.subr.bf16.mxu0 0
    %965 = vmatpush1.bf16.msra.mxu0 0
    %966 = vmatprep.subr.bf16.mxu0 0
    %967 = vmatpush1.bf16.msra.mxu0 0
    %968 = vmatprep.subr.bf16.mxu0 0
    %969 = vmatpush1.bf16.msra.mxu0 0
    %970 = vmatprep.subr.bf16.mxu0 0
    %971 = vmatpush1.bf16.msra.mxu0 0
    %972 = vmatprep.mubr.bf16.mxu0 0
    %973 = vmatmul.mubr.bf16.gmra.mrb[0].mxu0 %v938
    %v974 = vpop.f32.mrb[0].mxu0
    %v975 = vadd.f32 %v923, %v974
    %v976 = vpop.f32.mrb[0].mxu0
    %v977 = vpop.f32.mrb[0].mxu0
    %v978 = vadd.f32 %v923, %v977
    %v979 = vpop.f32.mrb[0].mxu0
    %980 = vdwg.mxu0
    %981 = vrot.lane.b32.xlu0 %v933, 96
    %v982 = vpop.permute.xlu0 %981
    %983 = vrot.lane.b32.xlu0 %v934, 96
    %v984 = vpop.permute.xlu0 %983
    %987 = vrot.lane.b32.xlu0 %v923, 96
    %v988 = vpop.permute.xlu0 %987
    %v991 = vsel %vm200, %v917, 0
    %v994 = vsel %vm200, %v918, 0
    %996 = vmatprep.subr.bf16.mxu0 0
    %997 = vmatpush1.bf16.msra.mxu0 %v982
    %998 = vmatprep.subr.bf16.mxu0 0
    %999 = vmatpush1.bf16.msra.mxu0 %v984
    %1000 = vmatprep.subr.bf16.mxu0 0
    %1001 = vmatpush1.bf16.msra.mxu0 0
    %1002 = vmatprep.subr.bf16.mxu0 0
    %1003 = vmatpush1.bf16.msra.mxu0 0
    %1004 = vmatprep.subr.bf16.mxu0 0
    %1005 = vmatpush1.bf16.msra.mxu0 0
    %1006 = vmatprep.subr.bf16.mxu0 0
    %1007 = vmatpush1.bf16.msra.mxu0 0
    %1008 = vmatprep.subr.bf16.mxu0 0
    %1009 = vmatpush1.bf16.msra.mxu0 0
    %1010 = vmatprep.subr.bf16.mxu0 0
    %1011 = vmatpush1.bf16.msra.mxu0 0
    %1012 = vmatprep.subr.bf16.mxu0 0
    %1013 = vmatpush1.bf16.msra.mxu0 0
    %1014 = vmatprep.subr.bf16.mxu0 0
    %1015 = vmatpush1.bf16.msra.mxu0 0
    %1016 = vmatprep.subr.bf16.mxu0 0
    %1017 = vmatpush1.bf16.msra.mxu0 0
    %1018 = vmatprep.subr.bf16.mxu0 0
    %1019 = vmatpush1.bf16.msra.mxu0 0
    %1020 = vmatprep.subr.bf16.mxu0 0
    %1021 = vmatpush1.bf16.msra.mxu0 0
    %1022 = vmatprep.subr.bf16.mxu0 0
    %1023 = vmatpush1.bf16.msra.mxu0 0
    %1024 = vmatprep.subr.bf16.mxu0 0
    %1025 = vmatpush1.bf16.msra.mxu0 0
    %1026 = vmatprep.subr.bf16.mxu0 0
    %1027 = vmatpush1.bf16.msra.mxu0 0
    %1028 = vmatprep.mubr.bf16.mxu0 0
    %1029 = vmatmul.mubr.bf16.gmra.mrb[0].mxu0 %v991
    %v1030 = vpop.f32.mrb[0].mxu0
    %v1031 = vadd.f32 %v988, %v1030
    %v1032 = vpop.f32.mrb[0].mxu0
    %v1033 = vpop.f32.mrb[0].mxu0
    %v1034 = vadd.f32 %v988, %v1033
    %v1035 = vpop.f32.mrb[0].mxu0
    %1036 = vmatprep.mubr.bf16.mxu0 0
    %1037 = vmatmul.mubr.bf16.gmra.mrb[0].mxu0 %v994
    %v1038 = vpop.f32.mrb[0].mxu0
    %v1039 = vadd.f32 %v988, %v1038
    %v1040 = vpop.f32.mrb[0].mxu0
    %v1041 = vpop.f32.mrb[0].mxu0
    %v1042 = vadd.f32 %v988, %v1041
    %v1043 = vpop.f32.mrb[0].mxu0
    %1044 = vdwg.mxu0
    %1047 = vrot.lane.b32.xlu0 %v975, 120
    %v1048 = vpop.permute.xlu0 %1047
    %1049 = vrot.lane.b32.xlu0 %v978, 120
    %v1050 = vpop.permute.xlu0 %1049
    %1053 = vrot.lane.b32.xlu0 %v975, 112
    %v1054 = vpop.permute.xlu0 %1053
    %1055 = vrot.lane.b32.xlu0 %v978, 112
    %v1056 = vpop.permute.xlu0 %1055
    %1059 = vrot.lane.b32.xlu0 %v975, 104
    %v1060 = vpop.permute.xlu0 %1059
    %1061 = vrot.lane.b32.xlu0 %v978, 104
    %v1062 = vpop.permute.xlu0 %1061
    %v1065 = vpack.c.bf16 %v978, %v975
    %v1066 = vpack.c.bf16 %v1050, %v1048
    %v1067 = vpack.c.bf16 %v1056, %v1054
    %v1068 = vpack.c.bf16 %v1062, %v1060
    %1073 = vrot.lane.b32.xlu0 %v1031, 120
    %v1074 = vpop.permute.xlu0 %1073
    %1075 = vrot.lane.b32.xlu0 %v1034, 120
    %v1076 = vpop.permute.xlu0 %1075
    %1077 = vrot.lane.b32.xlu0 %v1039, 120
    %v1078 = vpop.permute.xlu0 %1077
    %1079 = vrot.lane.b32.xlu0 %v1042, 120
    %v1080 = vpop.permute.xlu0 %1079
    %1085 = vrot.lane.b32.xlu0 %v1031, 112
    %v1086 = vpop.permute.xlu0 %1085
    %1087 = vrot.lane.b32.xlu0 %v1034, 112
    %v1088 = vpop.permute.xlu0 %1087
    %1089 = vrot.lane.b32.xlu0 %v1039, 112
    %v1090 = vpop.permute.xlu0 %1089
    %1091 = vrot.lane.b32.xlu0 %v1042, 112
    %v1092 = vpop.permute.xlu0 %1091
    %1097 = vrot.lane.b32.xlu0 %v1031, 104
    %v1098 = vpop.permute.xlu0 %1097
    %1099 = vrot.lane.b32.xlu0 %v1034, 104
    %v1100 = vpop.permute.xlu0 %1099
    %1101 = vrot.lane.b32.xlu0 %v1039, 104
    %v1102 = vpop.permute.xlu0 %1101
    %1103 = vrot.lane.b32.xlu0 %v1042, 104
    %v1104 = vpop.permute.xlu0 %1103
    %v1109 = vpack.c.bf16 %v1034, %v1031
    %v1110 = vpack.c.bf16 %v1042, %v1039
    %v1111 = vpack.c.bf16 %v1076, %v1074
    %v1112 = vpack.c.bf16 %v1080, %v1078
    %v1113 = vpack.c.bf16 %v1088, %v1086
    %v1114 = vpack.c.bf16 %v1092, %v1090
    %v1115 = vpack.c.bf16 %v1100, %v1098
    %v1116 = vpack.c.bf16 %v1104, %v1102
    %v1118 = vsel %vm272, %v1065, 0
    %v1121 = vsel %vm272, %v1109, 0
    %v1124 = vsel %vm272, %v1110, 0
    %1126 = vmatprep.subr.bf16.mxu0 0
    %1127 = vmatpush1.bf16.xpose.msra.mxu0 %v1121
    %1128 = vmatprep.subr.bf16.mxu0 0
    %1129 = vmatpush1.bf16.xpose.msra.mxu0 %v1124
    %1130 = vmatprep.subr.bf16.mxu0 0
    %1131 = vmatpush1.bf16.xpose.msra.mxu0 0
    %1132 = vmatprep.subr.bf16.mxu0 0
    %1133 = vmatpush1.bf16.xpose.msra.mxu0 0
    %1134 = vmatprep.subr.bf16.mxu0 0
    %1135 = vmatpush1.bf16.xpose.msra.mxu0 0
    %1136 = vmatprep.subr.bf16.mxu0 0
    %1137 = vmatpush1.bf16.xpose.msra.mxu0 0
    %1138 = vmatprep.subr.bf16.mxu0 0
    %1139 = vmatpush1.bf16.xpose.msra.mxu0 0
    %1140 = vmatprep.subr.bf16.mxu0 0
    %1141 = vmatpush1.bf16.xpose.msra.mxu0 0
    %1142 = vmatprep.subr.bf16.mxu0 0
    %1143 = vmatpush1.bf16.xpose.msra.mxu0 0
    %1144 = vmatprep.subr.bf16.mxu0 0
    %1145 = vmatpush1.bf16.xpose.msra.mxu0 0
    %1146 = vmatprep.subr.bf16.mxu0 0
    %1147 = vmatpush1.bf16.xpose.msra.mxu0 0
    %1148 = vmatprep.subr.bf16.mxu0 0
    %1149 = vmatpush1.bf16.xpose.msra.mxu0 0
    %1150 = vmatprep.subr.bf16.mxu0 0
    %1151 = vmatpush1.bf16.xpose.msra.mxu0 0
    %1152 = vmatprep.subr.bf16.mxu0 0
    %1153 = vmatpush1.bf16.xpose.msra.mxu0 0
    %1154 = vmatprep.subr.bf16.mxu0 0
    %1155 = vmatpush1.bf16.xpose.msra.mxu0 0
    %1156 = vmatprep.subr.bf16.mxu0 0
    %1157 = vmatpush1.bf16.xpose.msra.mxu0 0
    %1158 = vmatprep.mubr.bf16.mxu0 0
    %1159 = vmatmul.mubr.bf16.gmra.mrb[0].mxu0 %v1118
    %v1160 = vpop.f32.mrb[0].mxu0
    %v1161 = vadd.f32 0.0, %v1160
    %v1162 = vpop.f32.mrb[0].mxu0
    %v1163 = vpop.f32.mrb[0].mxu0
    %v1164 = vadd.f32 0.0, %v1163
    %v1165 = vpop.f32.mrb[0].mxu0
    %1166 = vdwg.mxu0
    %v1168 = vsel %vm272, %v1066, 0
    %v1171 = vsel %vm272, %v1111, 0
    %v1174 = vsel %vm272, %v1112, 0
    %1176 = vmatprep.subr.bf16.mxu0 0
    %1177 = vmatpush1.bf16.xpose.msra.mxu0 %v1171
    %1178 = vmatprep.subr.bf16.mxu0 0
    %1179 = vmatpush1.bf16.xpose.msra.mxu0 %v1174
    %1180 = vmatprep.subr.bf16.mxu0 0
    %1181 = vmatpush1.bf16.xpose.msra.mxu0 0
    %1182 = vmatprep.subr.bf16.mxu0 0
    %1183 = vmatpush1.bf16.xpose.msra.mxu0 0
    %1184 = vmatprep.subr.bf16.mxu0 0
    %1185 = vmatpush1.bf16.xpose.msra.mxu0 0
    %1186 = vmatprep.subr.bf16.mxu0 0
    %1187 = vmatpush1.bf16.xpose.msra.mxu0 0
    %1188 = vmatprep.subr.bf16.mxu0 0
    %1189 = vmatpush1.bf16.xpose.msra.mxu0 0
    %1190 = vmatprep.subr.bf16.mxu0 0
    %1191 = vmatpush1.bf16.xpose.msra.mxu0 0
    %1192 = vmatprep.subr.bf16.mxu0 0
    %1193 = vmatpush1.bf16.xpose.msra.mxu0 0
    %1194 = vmatprep.subr.bf16.mxu0 0
    %1195 = vmatpush1.bf16.xpose.msra.mxu0 0
    %1196 = vmatprep.subr.bf16.mxu0 0
    %1197 = vmatpush1.bf16.xpose.msra.mxu0 0
    %1198 = vmatprep.subr.bf16.mxu0 0
    %1199 = vmatpush1.bf16.xpose.msra.mxu0 0
    %1200 = vmatprep.subr.bf16.mxu0 0
    %1201 = vmatpush1.bf16.xpose.msra.mxu0 0
    %1202 = vmatprep.subr.bf16.mxu0 0
    %1203 = vmatpush1.bf16.xpose.msra.mxu0 0
    %1204 = vmatprep.subr.bf16.mxu0 0
    %1205 = vmatpush1.bf16.xpose.msra.mxu0 0
    %1206 = vmatprep.subr.bf16.mxu0 0
    %1207 = vmatpush1.bf16.xpose.msra.mxu0 0
    %1208 = vmatprep.mubr.bf16.mxu0 0
    %1209 = vmatmul.mubr.bf16.gmra.mrb[0].mxu0 %v1168
    %v1210 = vpop.f32.mrb[0].mxu0
    %v1211 = vadd.f32 0.0, %v1210
    %v1212 = vpop.f32.mrb[0].mxu0
    %v1213 = vpop.f32.mrb[0].mxu0
    %v1214 = vadd.f32 0.0, %v1213
    %v1215 = vpop.f32.mrb[0].mxu0
    %1216 = vdwg.mxu0
    %v1218 = vsel %vm272, %v1067, 0
    %v1221 = vsel %vm272, %v1113, 0
    %v1224 = vsel %vm272, %v1114, 0
    %1226 = vmatprep.subr.bf16.mxu0 0
    %1227 = vmatpush1.bf16.xpose.msra.mxu0 %v1221
    %1228 = vmatprep.subr.bf16.mxu0 0
    %1229 = vmatpush1.bf16.xpose.msra.mxu0 %v1224
    %1230 = vmatprep.subr.bf16.mxu0 0
    %1231 = vmatpush1.bf16.xpose.msra.mxu0 0
    %1232 = vmatprep.subr.bf16.mxu0 0
    %1233 = vmatpush1.bf16.xpose.msra.mxu0 0
    %1234 = vmatprep.subr.bf16.mxu0 0
    %1235 = vmatpush1.bf16.xpose.msra.mxu0 0
    %1236 = vmatprep.subr.bf16.mxu0 0
    %1237 = vmatpush1.bf16.xpose.msra.mxu0 0
    %1238 = vmatprep.subr.bf16.mxu0 0
    %1239 = vmatpush1.bf16.xpose.msra.mxu0 0
    %1240 = vmatprep.subr.bf16.mxu0 0
    %1241 = vmatpush1.bf16.xpose.msra.mxu0 0
    %1242 = vmatprep.subr.bf16.mxu0 0
    %1243 = vmatpush1.bf16.xpose.msra.mxu0 0
    %1244 = vmatprep.subr.bf16.mxu0 0
    %1245 = vmatpush1.bf16.xpose.msra.mxu0 0
    %1246 = vmatprep.subr.bf16.mxu0 0
    %1247 = vmatpush1.bf16.xpose.msra.mxu0 0
    %1248 = vmatprep.subr.bf16.mxu0 0
    %1249 = vmatpush1.bf16.xpose.msra.mxu0 0
    %1250 = vmatprep.subr.bf16.mxu0 0
    %1251 = vmatpush1.bf16.xpose.msra.mxu0 0
    %1252 = vmatprep.subr.bf16.mxu0 0
    %1253 = vmatpush1.bf16.xpose.msra.mxu0 0
    %1254 = vmatprep.subr.bf16.mxu0 0
    %1255 = vmatpush1.bf16.xpose.msra.mxu0 0
    %1256 = vmatprep.subr.bf16.mxu0 0
    %1257 = vmatpush1.bf16.xpose.msra.mxu0 0
    %1258 = vmatprep.mubr.bf16.mxu0 0
    %1259 = vmatmul.mubr.bf16.gmra.mrb[0].mxu0 %v1218
    %v1260 = vpop.f32.mrb[0].mxu0
    %v1261 = vadd.f32 0.0, %v1260
    %v1262 = vpop.f32.mrb[0].mxu0
    %v1263 = vpop.f32.mrb[0].mxu0
    %v1264 = vadd.f32 0.0, %v1263
    %v1265 = vpop.f32.mrb[0].mxu0
    %1266 = vdwg.mxu0
    %v1268 = vsel %vm272, %v1068, 0
    %v1271 = vsel %vm272, %v1115, 0
    %v1274 = vsel %vm272, %v1116, 0
    %1276 = vmatprep.subr.bf16.mxu0 0
    %1277 = vmatpush1.bf16.xpose.msra.mxu0 %v1271
    %1278 = vmatprep.subr.bf16.mxu0 0
    %1279 = vmatpush1.bf16.xpose.msra.mxu0 %v1274
    %1280 = vmatprep.subr.bf16.mxu0 0
    %1281 = vmatpush1.bf16.xpose.msra.mxu0 0
    %1282 = vmatprep.subr.bf16.mxu0 0
    %1283 = vmatpush1.bf16.xpose.msra.mxu0 0
    %1284 = vmatprep.subr.bf16.mxu0 0
    %1285 = vmatpush1.bf16.xpose.msra.mxu0 0
    %1286 = vmatprep.subr.bf16.mxu0 0
    %1287 = vmatpush1.bf16.xpose.msra.mxu0 0
    %1288 = vmatprep.subr.bf16.mxu0 0
    %1289 = vmatpush1.bf16.xpose.msra.mxu0 0
    %1290 = vmatprep.subr.bf16.mxu0 0
    %1291 = vmatpush1.bf16.xpose.msra.mxu0 0
    %1292 = vmatprep.subr.bf16.mxu0 0
    %1293 = vmatpush1.bf16.xpose.msra.mxu0 0
    %1294 = vmatprep.subr.bf16.mxu0 0
    %1295 = vmatpush1.bf16.xpose.msra.mxu0 0
    %1296 = vmatprep.subr.bf16.mxu0 0
    %1297 = vmatpush1.bf16.xpose.msra.mxu0 0
    %1298 = vmatprep.subr.bf16.mxu0 0
    %1299 = vmatpush1.bf16.xpose.msra.mxu0 0
    %1300 = vmatprep.subr.bf16.mxu0 0
    %1301 = vmatpush1.bf16.xpose.msra.mxu0 0
    %1302 = vmatprep.subr.bf16.mxu0 0
    %1303 = vmatpush1.bf16.xpose.msra.mxu0 0
    %1304 = vmatprep.subr.bf16.mxu0 0
    %1305 = vmatpush1.bf16.xpose.msra.mxu0 0
    %1306 = vmatprep.subr.bf16.mxu0 0
    %1307 = vmatpush1.bf16.xpose.msra.mxu0 0
    %1308 = vmatprep.mubr.bf16.mxu0 0
    %1309 = vmatmul.mubr.bf16.gmra.mrb[0].mxu0 %v1268
    %v1310 = vpop.f32.mrb[0].mxu0
    %v1311 = vadd.f32 0.0, %v1310
    %v1312 = vpop.f32.mrb[0].mxu0
    %v1313 = vpop.f32.mrb[0].mxu0
    %v1314 = vadd.f32 0.0, %v1313
    %v1315 = vpop.f32.mrb[0].mxu0
    %1316 = vdwg.mxu0
    %v1317 = vmul.f32 %v1161, 0.35355338
    %v1318 = vmul.f32 %v1164, 0.35355338
    %v1319 = vmul.f32 %v1211, 0.35355338
    %v1320 = vmul.f32 %v1214, 0.35355338
    %v1321 = vmul.f32 %v1261, 0.35355338
    %v1322 = vmul.f32 %v1264, 0.35355338
    %v1323 = vmul.f32 %v1311, 0.35355338
    %v1324 = vmul.f32 %v1314, 0.35355338
    %v1325 = vadd.f32 %v1317, %v168
    %v1326 = vadd.f32 %v1318, %v169
    %v1327 = vadd.f32 %v1319, %v168
    %v1328 = vadd.f32 %v1320, %v169
    %v1329 = vadd.f32 %v1321, %v168
    %v1330 = vadd.f32 %v1322, %v169
    %v1331 = vadd.f32 %v1323, %v168
    %v1332 = vadd.f32 %v1324, %v169
    %v1333 = vsel %vm200, %v1325, -inf
    %1334 = vmax.xlane.f32.xlu0 %v1333
    %v1335 = vpop.xlane.xlu0 %1334
    %v1336 = vsel %vm200, %v1326, -inf
    %1337 = vmax.xlane.f32.xlu0 %v1336
    %v1338 = vpop.xlane.xlu0 %1337
    %v1339 = vsel %vm200, %v1327, -inf
    %1340 = vmax.xlane.f32.xlu0 %v1339
    %v1341 = vpop.xlane.xlu0 %1340
    %v1342 = vsel %vm200, %v1328, -inf
    %1343 = vmax.xlane.f32.xlu0 %v1342
    %v1344 = vpop.xlane.xlu0 %1343
    %v1345 = vsel %vm200, %v1329, -inf
    %1346 = vmax.xlane.f32.xlu0 %v1345
    %v1347 = vpop.xlane.xlu0 %1346
    %v1348 = vsel %vm200, %v1330, -inf
    %1349 = vmax.xlane.f32.xlu0 %v1348
    %v1350 = vpop.xlane.xlu0 %1349
    %v1351 = vsel %vm200, %v1331, -inf
    %1352 = vmax.xlane.f32.xlu0 %v1351
    %v1353 = vpop.xlane.xlu0 %1352
    %v1354 = vsel %vm200, %v1332, -inf
    %1355 = vmax.xlane.f32.xlu0 %v1354
    %v1356 = vpop.xlane.xlu0 %1355
    %v1357 = vsub.f32 %v1325, %v1335
    %v1358 = vsub.f32 %v1326, %v1338
    %v1359 = vsub.f32 %v1327, %v1341
    %v1360 = vsub.f32 %v1328, %v1344
    %v1361 = vsub.f32 %v1329, %v1347
    %v1362 = vsub.f32 %v1330, %v1350
    %v1363 = vsub.f32 %v1331, %v1353
    %v1364 = vsub.f32 %v1332, %v1356
    %v1365 = vmul.f32 %v1357, 1.442695
    %v1366 = vpow.pop %v1365
    %v1367 = vmul.f32 %v1358, 1.442695
    %v1368 = vpow.pop %v1367
    %v1369 = vmul.f32 %v1359, 1.442695
    %v1370 = vpow.pop %v1369
    %v1371 = vmul.f32 %v1360, 1.442695
    %v1372 = vpow.pop %v1371
    %v1373 = vmul.f32 %v1361, 1.442695
    %v1374 = vpow.pop %v1373
    %v1375 = vmul.f32 %v1362, 1.442695
    %v1376 = vpow.pop %v1375
    %v1377 = vmul.f32 %v1363, 1.442695
    %v1378 = vpow.pop %v1377
    %v1379 = vmul.f32 %v1364, 1.442695
    %v1380 = vpow.pop %v1379
    %v1381 = vsel %vm200, %v1366, 0.0
    %1382 = vadd.xlane.f32.xlu0 %v1381
    %v1383 = vpop.xlane.xlu0 %1382
    %v1384 = vsel %vm200, %v1368, 0.0
    %1385 = vadd.xlane.f32.xlu0 %v1384
    %v1386 = vpop.xlane.xlu0 %1385
    %v1387 = vsel %vm200, %v1370, 0.0
    %1388 = vadd.xlane.f32.xlu0 %v1387
    %v1389 = vpop.xlane.xlu0 %1388
    %v1390 = vsel %vm200, %v1372, 0.0
    %1391 = vadd.xlane.f32.xlu0 %v1390
    %v1392 = vpop.xlane.xlu0 %1391
    %v1393 = vsel %vm200, %v1374, 0.0
    %1394 = vadd.xlane.f32.xlu0 %v1393
    %v1395 = vpop.xlane.xlu0 %1394
    %v1396 = vsel %vm200, %v1376, 0.0
    %1397 = vadd.xlane.f32.xlu0 %v1396
    %v1398 = vpop.xlane.xlu0 %1397
    %v1399 = vsel %vm200, %v1378, 0.0
    %1400 = vadd.xlane.f32.xlu0 %v1399
    %v1401 = vpop.xlane.xlu0 %1400
    %v1402 = vsel %vm200, %v1380, 0.0
    %1403 = vadd.xlane.f32.xlu0 %v1402
    %v1404 = vpop.xlane.xlu0 %1403
    %v1405 = vrcp.pop %v1383
    %v1406 = vrcp.pop %v1386
    %v1407 = vrcp.pop %v1389
    %v1408 = vrcp.pop %v1392
    %v1409 = vrcp.pop %v1395
    %v1410 = vrcp.pop %v1398
    %v1411 = vrcp.pop %v1401
    %v1412 = vrcp.pop %v1404
    %v1413 = vmul.f32 %v1366, %v1405
    %v1414 = vmul.f32 %v1368, %v1406
    %v1415 = vmul.f32 %v1370, %v1407
    %v1416 = vmul.f32 %v1372, %v1408
    %v1417 = vmul.f32 %v1374, %v1409
    %v1418 = vmul.f32 %v1376, %v1410
    %v1419 = vmul.f32 %v1378, %v1411
    %v1420 = vmul.f32 %v1380, %v1412
    %v1421 = vpack.c.bf16 %v1414, %v1413
    %v1422 = vpack.c.bf16 %v1416, %v1415
    %v1423 = vpack.c.bf16 %v1418, %v1417
    %v1424 = vpack.c.bf16 %v1420, %v1419
    %1427 = vrot.lane.b32.xlu0 %v1109, 96
    %v1428 = vpop.permute.xlu0 %1427
    %1429 = vrot.lane.b32.xlu0 %v1110, 96
    %v1430 = vpop.permute.xlu0 %1429
    %v1434 = vsel %vm200, %v1421, 0
    %1436 = vmatprep.subr.bf16.mxu0 0
    %1437 = vmatpush1.bf16.msra.mxu0 %v1428
    %1438 = vmatprep.subr.bf16.mxu0 0
    %1439 = vmatpush1.bf16.msra.mxu0 %v1430
    %1440 = vmatprep.subr.bf16.mxu0 0
    %1441 = vmatpush1.bf16.msra.mxu0 0
    %1442 = vmatprep.subr.bf16.mxu0 0
    %1443 = vmatpush1.bf16.msra.mxu0 0
    %1444 = vmatprep.subr.bf16.mxu0 0
    %1445 = vmatpush1.bf16.msra.mxu0 0
    %1446 = vmatprep.subr.bf16.mxu0 0
    %1447 = vmatpush1.bf16.msra.mxu0 0
    %1448 = vmatprep.subr.bf16.mxu0 0
    %1449 = vmatpush1.bf16.msra.mxu0 0
    %1450 = vmatprep.subr.bf16.mxu0 0
    %1451 = vmatpush1.bf16.msra.mxu0 0
    %1452 = vmatprep.subr.bf16.mxu0 0
    %1453 = vmatpush1.bf16.msra.mxu0 0
    %1454 = vmatprep.subr.bf16.mxu0 0
    %1455 = vmatpush1.bf16.msra.mxu0 0
    %1456 = vmatprep.subr.bf16.mxu0 0
    %1457 = vmatpush1.bf16.msra.mxu0 0
    %1458 = vmatprep.subr.bf16.mxu0 0
    %1459 = vmatpush1.bf16.msra.mxu0 0
    %1460 = vmatprep.subr.bf16.mxu0 0
    %1461 = vmatpush1.bf16.msra.mxu0 0
    %1462 = vmatprep.subr.bf16.mxu0 0
    %1463 = vmatpush1.bf16.msra.mxu0 0
    %1464 = vmatprep.subr.bf16.mxu0 0
    %1465 = vmatpush1.bf16.msra.mxu0 0
    %1466 = vmatprep.subr.bf16.mxu0 0
    %1467 = vmatpush1.bf16.msra.mxu0 0
    %1468 = vmatprep.mubr.bf16.mxu0 0
    %1469 = vmatmul.mubr.bf16.gmra.mrb[0].mxu0 %v1434
    %v1470 = vpop.f32.mrb[0].mxu0
    %v1471 = vadd.f32 0.0, %v1470
    %v1472 = vpop.f32.mrb[0].mxu0
    %v1473 = vpop.f32.mrb[0].mxu0
    %v1474 = vadd.f32 0.0, %v1473
    %v1475 = vpop.f32.mrb[0].mxu0
    %1476 = vdwg.mxu0
    %1479 = vrot.lane.b32.xlu0 %v1111, 96
    %v1480 = vpop.permute.xlu0 %1479
    %1481 = vrot.lane.b32.xlu0 %v1112, 96
    %v1482 = vpop.permute.xlu0 %1481
    %v1486 = vsel %vm200, %v1422, 0
    %1488 = vmatprep.subr.bf16.mxu0 0
    %1489 = vmatpush1.bf16.msra.mxu0 %v1480
    %1490 = vmatprep.subr.bf16.mxu0 0
    %1491 = vmatpush1.bf16.msra.mxu0 %v1482
    %1492 = vmatprep.subr.bf16.mxu0 0
    %1493 = vmatpush1.bf16.msra.mxu0 0
    %1494 = vmatprep.subr.bf16.mxu0 0
    %1495 = vmatpush1.bf16.msra.mxu0 0
    %1496 = vmatprep.subr.bf16.mxu0 0
    %1497 = vmatpush1.bf16.msra.mxu0 0
    %1498 = vmatprep.subr.bf16.mxu0 0
    %1499 = vmatpush1.bf16.msra.mxu0 0
    %1500 = vmatprep.subr.bf16.mxu0 0
    %1501 = vmatpush1.bf16.msra.mxu0 0
    %1502 = vmatprep.subr.bf16.mxu0 0
    %1503 = vmatpush1.bf16.msra.mxu0 0
    %1504 = vmatprep.subr.bf16.mxu0 0
    %1505 = vmatpush1.bf16.msra.mxu0 0
    %1506 = vmatprep.subr.bf16.mxu0 0
    %1507 = vmatpush1.bf16.msra.mxu0 0
    %1508 = vmatprep.subr.bf16.mxu0 0
    %1509 = vmatpush1.bf16.msra.mxu0 0
    %1510 = vmatprep.subr.bf16.mxu0 0
    %1511 = vmatpush1.bf16.msra.mxu0 0
    %1512 = vmatprep.subr.bf16.mxu0 0
    %1513 = vmatpush1.bf16.msra.mxu0 0
    %1514 = vmatprep.subr.bf16.mxu0 0
    %1515 = vmatpush1.bf16.msra.mxu0 0
    %1516 = vmatprep.subr.bf16.mxu0 0
    %1517 = vmatpush1.bf16.msra.mxu0 0
    %1518 = vmatprep.subr.bf16.mxu0 0
    %1519 = vmatpush1.bf16.msra.mxu0 0
    %1520 = vmatprep.mubr.bf16.mxu0 0
    %1521 = vmatmul.mubr.bf16.gmra.mrb[0].mxu0 %v1486
    %v1522 = vpop.f32.mrb[0].mxu0
    %v1523 = vadd.f32 0.0, %v1522
    %v1524 = vpop.f32.mrb[0].mxu0
    %v1525 = vpop.f32.mrb[0].mxu0
    %v1526 = vadd.f32 0.0, %v1525
    %v1527 = vpop.f32.mrb[0].mxu0
    %1528 = vdwg.mxu0
    %1531 = vrot.lane.b32.xlu0 %v1113, 96
    %v1532 = vpop.permute.xlu0 %1531
    %1533 = vrot.lane.b32.xlu0 %v1114, 96
    %v1534 = vpop.permute.xlu0 %1533
    %v1538 = vsel %vm200, %v1423, 0
    %1540 = vmatprep.subr.bf16.mxu0 0
    %1541 = vmatpush1.bf16.msra.mxu0 %v1532
    %1542 = vmatprep.subr.bf16.mxu0 0
    %1543 = vmatpush1.bf16.msra.mxu0 %v1534
    %1544 = vmatprep.subr.bf16.mxu0 0
    %1545 = vmatpush1.bf16.msra.mxu0 0
    %1546 = vmatprep.subr.bf16.mxu0 0
    %1547 = vmatpush1.bf16.msra.mxu0 0
    %1548 = vmatprep.subr.bf16.mxu0 0
    %1549 = vmatpush1.bf16.msra.mxu0 0
    %1550 = vmatprep.subr.bf16.mxu0 0
    %1551 = vmatpush1.bf16.msra.mxu0 0
    %1552 = vmatprep.subr.bf16.mxu0 0
    %1553 = vmatpush1.bf16.msra.mxu0 0
    %1554 = vmatprep.subr.bf16.mxu0 0
    %1555 = vmatpush1.bf16.msra.mxu0 0
    %1556 = vmatprep.subr.bf16.mxu0 0
    %1557 = vmatpush1.bf16.msra.mxu0 0
    %1558 = vmatprep.subr.bf16.mxu0 0
    %1559 = vmatpush1.bf16.msra.mxu0 0
    %1560 = vmatprep.subr.bf16.mxu0 0
    %1561 = vmatpush1.bf16.msra.mxu0 0
    %1562 = vmatprep.subr.bf16.mxu0 0
    %1563 = vmatpush1.bf16.msra.mxu0 0
    %1564 = vmatprep.subr.bf16.mxu0 0
    %1565 = vmatpush1.bf16.msra.mxu0 0
    %1566 = vmatprep.subr.bf16.mxu0 0
    %1567 = vmatpush1.bf16.msra.mxu0 0
    %1568 = vmatprep.subr.bf16.mxu0 0
    %1569 = vmatpush1.bf16.msra.mxu0 0
    %1570 = vmatprep.subr.bf16.mxu0 0
    %1571 = vmatpush1.bf16.msra.mxu0 0
    %1572 = vmatprep.mubr.bf16.mxu0 0
    %1573 = vmatmul.mubr.bf16.gmra.mrb[0].mxu0 %v1538
    %v1574 = vpop.f32.mrb[0].mxu0
    %v1575 = vadd.f32 0.0, %v1574
    %v1576 = vpop.f32.mrb[0].mxu0
    %v1577 = vpop.f32.mrb[0].mxu0
    %v1578 = vadd.f32 0.0, %v1577
    %v1579 = vpop.f32.mrb[0].mxu0
    %1580 = vdwg.mxu0
    %1583 = vrot.lane.b32.xlu0 %v1115, 96
    %v1584 = vpop.permute.xlu0 %1583
    %1585 = vrot.lane.b32.xlu0 %v1116, 96
    %v1586 = vpop.permute.xlu0 %1585
    %v1590 = vsel %vm200, %v1424, 0
    %1592 = vmatprep.subr.bf16.mxu0 0
    %1593 = vmatpush1.bf16.msra.mxu0 %v1584
    %1594 = vmatprep.subr.bf16.mxu0 0
    %1595 = vmatpush1.bf16.msra.mxu0 %v1586
    %1596 = vmatprep.subr.bf16.mxu0 0
    %1597 = vmatpush1.bf16.msra.mxu0 0
    %1598 = vmatprep.subr.bf16.mxu0 0
    %1599 = vmatpush1.bf16.msra.mxu0 0
    %1600 = vmatprep.subr.bf16.mxu0 0
    %1601 = vmatpush1.bf16.msra.mxu0 0
    %1602 = vmatprep.subr.bf16.mxu0 0
    %1603 = vmatpush1.bf16.msra.mxu0 0
    %1604 = vmatprep.subr.bf16.mxu0 0
    %1605 = vmatpush1.bf16.msra.mxu0 0
    %1606 = vmatprep.subr.bf16.mxu0 0
    %1607 = vmatpush1.bf16.msra.mxu0 0
    %1608 = vmatprep.subr.bf16.mxu0 0
    %1609 = vmatpush1.bf16.msra.mxu0 0
    %1610 = vmatprep.subr.bf16.mxu0 0
    %1611 = vmatpush1.bf16.msra.mxu0 0
    %1612 = vmatprep.subr.bf16.mxu0 0
    %1613 = vmatpush1.bf16.msra.mxu0 0
    %1614 = vmatprep.subr.bf16.mxu0 0
    %1615 = vmatpush1.bf16.msra.mxu0 0
    %1616 = vmatprep.subr.bf16.mxu0 0
    %1617 = vmatpush1.bf16.msra.mxu0 0
    %1618 = vmatprep.subr.bf16.mxu0 0
    %1619 = vmatpush1.bf16.msra.mxu0 0
    %1620 = vmatprep.subr.bf16.mxu0 0
    %1621 = vmatpush1.bf16.msra.mxu0 0
    %1622 = vmatprep.subr.bf16.mxu0 0
    %1623 = vmatpush1.bf16.msra.mxu0 0
    %1624 = vmatprep.mubr.bf16.mxu0 0
    %1625 = vmatmul.mubr.bf16.gmra.mrb[0].mxu0 %v1590
    %v1626 = vpop.f32.mrb[0].mxu0
    %v1627 = vadd.f32 0.0, %v1626
    %v1628 = vpop.f32.mrb[0].mxu0
    %v1629 = vpop.f32.mrb[0].mxu0
    %v1630 = vadd.f32 0.0, %v1629
    %v1631 = vpop.f32.mrb[0].mxu0
    %1632 = vdwg.mxu0
    %1635 = vrot.lane.b32.xlu0 %v1523, 8
    %v1636 = vpop.permute.xlu0 %1635
    %1637 = vrot.lane.b32.xlu0 %v1526, 8
    %v1638 = vpop.permute.xlu0 %1637
    %1643 = vrot.lane.b32.xlu0 %v1575, 16
    %v1644 = vpop.permute.xlu0 %1643
    %1645 = vrot.lane.b32.xlu0 %v1578, 16
    %v1646 = vpop.permute.xlu0 %1645
    %1651 = vrot.lane.b32.xlu0 %v1627, 24
    %v1652 = vpop.permute.xlu0 %1651
    %1653 = vrot.lane.b32.xlu0 %v1630, 24
    %v1654 = vpop.permute.xlu0 %1653
    %v1657 = vsel %vm272, %v1471, %v1636
    %v1658 = vsel %vm272, %v1474, %v1638
    %v1659 = vsel %vm486, %v1657, %v1644
    %v1660 = vsel %vm486, %v1658, %v1646
    %v1661 = vsel %vm795, %v1659, %v1652
    %v1662 = vsel %vm795, %v1660, %v1654
    %v1663 = vpack.c.bf16 %v1662, %v1661
    %v1665 = vlaneseq
    %v1666 = vshrl.u32 %v1665, 7
    %v1667 = vsub.s32 0, %v1666
    %v1668 = vrot.slane %v915, %v1667
    %v1674 = vunpack.c.l.b16 %v910
    %v1675 = vunpack.c.l.b16 %v911
    %v1676 = vunpack.c.l.b16 %v912
    %v1677 = vunpack.c.l.b16 %v913
    %v1678 = vpack.c.b16 %v1675, %v1674
    %v1679 = vpack.c.b16 %v1677, %v1676
    %v1683 = vsel %vm200, %v1663, 0
    %1685 = vmatprep.subr.bf16.mxu0 0
    %1686 = vmatpush1.bf16.msra.mxu0 %v1678
    %1687 = vmatprep.subr.bf16.mxu0 0
    %1688 = vmatpush1.bf16.msra.mxu0 %v1679
    %1689 = vmatprep.subr.bf16.mxu0 0
    %1690 = vmatpush1.bf16.msra.mxu0 0
    %1691 = vmatprep.subr.bf16.mxu0 0
    %1692 = vmatpush1.bf16.msra.mxu0 0
    %1693 = vmatprep.subr.bf16.mxu0 0
    %1694 = vmatpush1.bf16.msra.mxu0 0
    %1695 = vmatprep.subr.bf16.mxu0 0
    %1696 = vmatpush1.bf16.msra.mxu0 0
    %1697 = vmatprep.subr.bf16.mxu0 0
    %1698 = vmatpush1.bf16.msra.mxu0 0
    %1699 = vmatprep.subr.bf16.mxu0 0
    %1700 = vmatpush1.bf16.msra.mxu0 0
    %1701 = vmatprep.subr.bf16.mxu0 0
    %1702 = vmatpush1.bf16.msra.mxu0 0
    %1703 = vmatprep.subr.bf16.mxu0 0
    %1704 = vmatpush1.bf16.msra.mxu0 0
    %1705 = vmatprep.subr.bf16.mxu0 0
    %1706 = vmatpush1.bf16.msra.mxu0 0
    %1707 = vmatprep.subr.bf16.mxu0 0
    %1708 = vmatpush1.bf16.msra.mxu0 0
    %1709 = vmatprep.subr.bf16.mxu0 0
    %1710 = vmatpush1.bf16.msra.mxu0 0
    %1711 = vmatprep.subr.bf16.mxu0 0
    %1712 = vmatpush1.bf16.msra.mxu0 0
    %1713 = vmatprep.subr.bf16.mxu0 0
    %1714 = vmatpush1.bf16.msra.mxu0 0
    %1715 = vmatprep.subr.bf16.mxu0 0
    %1716 = vmatpush1.bf16.msra.mxu0 0
    %1717 = vmatprep.mubr.bf16.mxu0 0
    %1718 = vmatmul.mubr.bf16.gmra.mrb[0].mxu0 %v1683
    %v1719 = vpop.f32.mrb[0].mxu0
    %v1720 = vadd.f32 %v1668, %v1719
    %v1721 = vpop.f32.mrb[0].mxu0
    %v1722 = vpop.f32.mrb[0].mxu0
    %v1723 = vadd.f32 %v1668, %v1722
    %v1724 = vpop.f32.mrb[0].mxu0
    %1725 = vdwg.mxu0
    %v1726 = vadd.f32 %v900, %v1720
    %v1727 = vadd.f32 %v901, %v1723
    %v1728 = vsel %vm200, %v1726, 0.0
    %1729 = vadd.xlane.f32.xlu0 %v1728
    %v1730 = vpop.xlane.xlu0 %1729
    %v1731 = vsel %vm200, %v1727, 0.0
    %1732 = vadd.xlane.f32.xlu0 %v1731
    %v1733 = vpop.xlane.xlu0 %1732
    %v1734 = vmul.f32 %v1730, %v869
    %v1735 = vmul.f32 %v1733, %v869
    %v1736 = vsub.f32 %v1726, %v1734
    %v1737 = vsub.f32 %v1727, %v1735
    %v1738 = vmul.f32 %v1736, %v1736
    %v1739 = vmul.f32 %v1737, %v1737
    %v1740 = vsel %vm200, %v1738, 0.0
    %1741 = vadd.xlane.f32.xlu0 %v1740
    %v1742 = vpop.xlane.xlu0 %1741
    %v1743 = vsel %vm200, %v1739, 0.0
    %1744 = vadd.xlane.f32.xlu0 %v1743
    %v1745 = vpop.xlane.xlu0 %1744
    %v1746 = vmul.f32 %v1742, %v869
    %v1747 = vmul.f32 %v1745, %v869
    %v1748 = vadd.f32 %v1746, 1e-05
    %v1749 = vadd.f32 %v1747, 1e-05
    %v1750 = vrsqrt.pop %v1748
    %v1751 = vrsqrt.pop %v1749
    %v1752 = vmul.f32 %v1736, %v1750
    %v1753 = vmul.f32 %v1737, %v1751
    %v1754 = vlaneseq
    %v1755 = vshrl.u32 %v1754, 7
    %v1756 = vsub.s32 2, %v1755
    %v1757 = vrot.slane %v170, %v1756
    %v1758 = vmul.f32 %v1752, %v1757
    %v1759 = vmul.f32 %v1753, %v1757
    %v1760 = vlaneseq
    %v1761 = vshrl.u32 %v1760, 7
    %v1762 = vsub.s32 3, %v1761
    %v1763 = vrot.slane %v170, %v1762
    %v1764 = vadd.f32 %v1758, %v1763
    %v1765 = vadd.f32 %v1759, %v1763
    %v1766 = vpack.c.bf16 %v1765, %v1764
    %v1767 = vld [vmem:[%s10] sm:$0xf]
    %v1768 = vld [vmem:[%s10 + $0x4] sm:$0xf]
    %v1769 = vld [vmem:[%s10 + $0x8] sm:$0xf]
    %v1770 = vld [vmem:[%s10 + $0xc] sm:$0xf]
    %v1771 = vld [vmem:[%s11] sm:$0x1]
    %v1773 = vlaneseq
    %v1774 = vshrl.u32 %v1773, 7
    %v1775 = vsub.s32 0, %v1774
    %v1776 = vrot.slane %v1771, %v1775
    %v1782 = vunpack.c.l.b16 %v1767
    %v1783 = vunpack.c.l.b16 %v1768
    %v1784 = vunpack.c.l.b16 %v1769
    %v1785 = vunpack.c.l.b16 %v1770
    %v1786 = vpack.c.b16 %v1783, %v1782
    %v1787 = vpack.c.b16 %v1785, %v1784
    %v1791 = vsel %vm200, %v1766, 0
    %1793 = vmatprep.subr.bf16.mxu0 0
    %1794 = vmatpush1.bf16.msra.mxu0 %v1786
    %1795 = vmatprep.subr.bf16.mxu0 0
    %1796 = vmatpush1.bf16.msra.mxu0 %v1787
    %1797 = vmatprep.subr.bf16.mxu0 0
    %1798 = vmatpush1.bf16.msra.mxu0 0
    %1799 = vmatprep.subr.bf16.mxu0 0
    %1800 = vmatpush1.bf16.msra.mxu0 0
    %1801 = vmatprep.subr.bf16.mxu0 0
    %1802 = vmatpush1.bf16.msra.mxu0 0
    %1803 = vmatprep.subr.bf16.mxu0 0
    %1804 = vmatpush1.bf16.msra.mxu0 0
    %1805 = vmatprep.subr.bf16.mxu0 0
    %1806 = vmatpush1.bf16.msra.mxu0 0
    %1807 = vmatprep.subr.bf16.mxu0 0
    %1808 = vmatpush1.bf16.msra.mxu0 0
    %1809 = vmatprep.subr.bf16.mxu0 0
    %1810 = vmatpush1.bf16.msra.mxu0 0
    %1811 = vmatprep.subr.bf16.mxu0 0
    %1812 = vmatpush1.bf16.msra.mxu0 0
    %1813 = vmatprep.subr.bf16.mxu0 0
    %1814 = vmatpush1.bf16.msra.mxu0 0
    %1815 = vmatprep.subr.bf16.mxu0 0
    %1816 = vmatpush1.bf16.msra.mxu0 0
    %1817 = vmatprep.subr.bf16.mxu0 0
    %1818 = vmatpush1.bf16.msra.mxu0 0
    %1819 = vmatprep.subr.bf16.mxu0 0
    %1820 = vmatpush1.bf16.msra.mxu0 0
    %1821 = vmatprep.subr.bf16.mxu0 0
    %1822 = vmatpush1.bf16.msra.mxu0 0
    %1823 = vmatprep.subr.bf16.mxu0 0
    %1824 = vmatpush1.bf16.msra.mxu0 0
    %1825 = vmatprep.mubr.bf16.mxu0 0
    %1826 = vmatmul.mubr.bf16.gmra.mrb[0].mxu0 %v1791
    %v1827 = vpop.f32.mrb[0].mxu0
    %v1828 = vadd.f32 %v1776, %v1827
    %v1829 = vpop.f32.mrb[0].mxu0
    %v1830 = vpop.f32.mrb[0].mxu0
    %v1831 = vadd.f32 %v1776, %v1830
    %v1832 = vpop.f32.mrb[0].mxu0
    %1833 = vdwg.mxu0
    %v1834 = vmax.f32 %v1828, 0.0
    %v1835 = vmax.f32 %v1831, 0.0
    %v1836 = vpack.c.bf16 %v1835, %v1834
    %v1837 = vld [vmem:[%s12] sm:$0xf]
    %v1838 = vld [vmem:[%s12 + $0x4] sm:$0xf]
    %v1839 = vld [vmem:[%s12 + $0x8] sm:$0xf]
    %v1840 = vld [vmem:[%s12 + $0xc] sm:$0xf]
    %v1841 = vld [vmem:[%s12 + $0x10] sm:$0xf]
    %v1842 = vld [vmem:[%s12 + $0x14] sm:$0xf]
    %v1843 = vld [vmem:[%s12 + $0x18] sm:$0xf]
    %v1844 = vld [vmem:[%s12 + $0x1c] sm:$0xf]
    %v1845 = vld [vmem:[%s13] sm:$0x1]
    %v1847 = vlaneseq
    %v1848 = vshrl.u32 %v1847, 7
    %v1849 = vsub.s32 0, %v1848
    %v1850 = vrot.slane %v1845, %v1849
    %v1860 = vunpack.c.l.b16 %v1837
    %v1861 = vunpack.c.l.b16 %v1838
    %v1862 = vunpack.c.l.b16 %v1839
    %v1863 = vunpack.c.l.b16 %v1840
    %v1864 = vunpack.c.l.b16 %v1841
    %v1865 = vunpack.c.l.b16 %v1842
    %v1866 = vunpack.c.l.b16 %v1843
    %v1867 = vunpack.c.l.b16 %v1844
    %v1868 = vpack.c.b16 %v1861, %v1860
    %v1869 = vpack.c.b16 %v1863, %v1862
    %v1870 = vpack.c.b16 %v1865, %v1864
    %v1871 = vpack.c.b16 %v1867, %v1866
    %vm1876 = vcmask 523264
    %v1878 = vsel %vm1876, %v1836, 0
    %1880 = vmatprep.subr.bf16.mxu0 0
    %1881 = vmatpush1.bf16.msra.mxu0 %v1868
    %1882 = vmatprep.subr.bf16.mxu0 0
    %1883 = vmatpush1.bf16.msra.mxu0 %v1869
    %1884 = vmatprep.subr.bf16.mxu0 0
    %1885 = vmatpush1.bf16.msra.mxu0 %v1870
    %1886 = vmatprep.subr.bf16.mxu0 0
    %1887 = vmatpush1.bf16.msra.mxu0 %v1871
    %1888 = vmatprep.subr.bf16.mxu0 0
    %1889 = vmatpush1.bf16.msra.mxu0 0
    %1890 = vmatprep.subr.bf16.mxu0 0
    %1891 = vmatpush1.bf16.msra.mxu0 0
    %1892 = vmatprep.subr.bf16.mxu0 0
    %1893 = vmatpush1.bf16.msra.mxu0 0
    %1894 = vmatprep.subr.bf16.mxu0 0
    %1895 = vmatpush1.bf16.msra.mxu0 0
    %1896 = vmatprep.subr.bf16.mxu0 0
    %1897 = vmatpush1.bf16.msra.mxu0 0
    %1898 = vmatprep.subr.bf16.mxu0 0
    %1899 = vmatpush1.bf16.msra.mxu0 0
    %1900 = vmatprep.subr.bf16.mxu0 0
    %1901 = vmatpush1.bf16.msra.mxu0 0
    %1902 = vmatprep.subr.bf16.mxu0 0
    %1903 = vmatpush1.bf16.msra.mxu0 0
    %1904 = vmatprep.subr.bf16.mxu0 0
    %1905 = vmatpush1.bf16.msra.mxu0 0
    %1906 = vmatprep.subr.bf16.mxu0 0
    %1907 = vmatpush1.bf16.msra.mxu0 0
    %1908 = vmatprep.subr.bf16.mxu0 0
    %1909 = vmatpush1.bf16.msra.mxu0 0
    %1910 = vmatprep.subr.bf16.mxu0 0
    %1911 = vmatpush1.bf16.msra.mxu0 0
    %1912 = vmatprep.mubr.bf16.mxu0 0
    %1913 = vmatmul.mubr.bf16.gmra.mrb[0].mxu0 %v1878
    %v1914 = vpop.f32.mrb[0].mxu0
    %v1915 = vadd.f32 %v1850, %v1914
    %v1916 = vpop.f32.mrb[0].mxu0
    %v1917 = vpop.f32.mrb[0].mxu0
    %v1918 = vadd.f32 %v1850, %v1917
    %v1919 = vpop.f32.mrb[0].mxu0
    %1920 = vdwg.mxu0
    %v1921 = vadd.f32 %v1764, %v1915
    %v1922 = vadd.f32 %v1765, %v1918
    %v1923 = vsel %vm200, %v1921, 0.0
    %1924 = vadd.xlane.f32.xlu0 %v1923
    %v1925 = vpop.xlane.xlu0 %1924
    %v1926 = vsel %vm200, %v1922, 0.0
    %1927 = vadd.xlane.f32.xlu0 %v1926
    %v1928 = vpop.xlane.xlu0 %1927
    %v1929 = vmul.f32 %v1925, %v869
    %v1930 = vmul.f32 %v1928, %v869
    %v1931 = vsub.f32 %v1921, %v1929
    %v1932 = vsub.f32 %v1922, %v1930
    %v1933 = vmul.f32 %v1931, %v1931
    %v1934 = vmul.f32 %v1932, %v1932
    %v1935 = vsel %vm200, %v1933, 0.0
    %1936 = vadd.xlane.f32.xlu0 %v1935
    %v1937 = vpop.xlane.xlu0 %1936
    %v1938 = vsel %vm200, %v1934, 0.0
    %1939 = vadd.xlane.f32.xlu0 %v1938
    %v1940 = vpop.xlane.xlu0 %1939
    %v1941 = vmul.f32 %v1937, %v869
    %v1942 = vmul.f32 %v1940, %v869
    %v1943 = vadd.f32 %v1941, 1e-05
    %v1944 = vadd.f32 %v1942, 1e-05
    %v1945 = vrsqrt.pop %v1943
    %v1946 = vrsqrt.pop %v1944
    %v1947 = vmul.f32 %v1931, %v1945
    %v1948 = vmul.f32 %v1932, %v1946
    %v1949 = vlaneseq
    %v1950 = vshrl.u32 %v1949, 7
    %v1951 = vsub.s32 4, %v1950
    %v1952 = vrot.slane %v170, %v1951
    %v1953 = vmul.f32 %v1947, %v1952
    %v1954 = vmul.f32 %v1948, %v1952
    %v1955 = vlaneseq
    %v1956 = vshrl.u32 %v1955, 7
    %v1957 = vsub.s32 5, %v1956
    %v1958 = vrot.slane %v170, %v1957
    %v1959 = vadd.f32 %v1953, %v1958
    %v1960 = vadd.f32 %v1954, %v1958
    %s1961 = scalar_lea.vmem %s9, 8
    %v1962 = vld [vmem:[%s1961] sm:$0x3f]
    %s1963 = scalar_lea.vmem %s5, 32
    %v1964 = vld [vmem:[%s1963] sm:$0xf]
    %v1965 = vld [vmem:[%s1963 + $0x4] sm:$0xf]
    %v1966 = vld [vmem:[%s1963 + $0x8] sm:$0xf]
    %v1967 = vld [vmem:[%s1963 + $0xc] sm:$0xf]
    %s1968 = scalar_lea.vmem %s6, 2
    %v1969 = vld [vmem:[%s1968] sm:$0x1]
    %s1970 = scalar_lea.vmem %s7, 32
    %v1971 = vld [vmem:[%s1970] sm:$0xf]
    %v1972 = vld [vmem:[%s1970 + $0x4] sm:$0xf]
    %v1973 = vld [vmem:[%s1970 + $0x8] sm:$0xf]
    %v1974 = vld [vmem:[%s1970 + $0xc] sm:$0xf]
    %s1975 = scalar_lea.vmem %s8, 2
    %v1976 = vld [vmem:[%s1975] sm:$0x1]
    %v1977 = vpack.c.bf16 %v1960, %v1959
    %v1979 = vlaneseq
    %v1980 = vshrl.u32 %v1979, 7
    %v1981 = vsub.s32 0, %v1980
    %v1982 = vrot.slane %v1969, %v1981
    %v1988 = vunpack.c.l.b16 %v1964
    %v1989 = vunpack.c.l.b16 %v1965
    %v1990 = vunpack.c.l.b16 %v1966
    %v1991 = vunpack.c.l.b16 %v1967
    %v1992 = vpack.c.b16 %v1989, %v1988
    %v1993 = vpack.c.b16 %v1991, %v1990
    %v1997 = vsel %vm200, %v1977, 0
    %1999 = vmatprep.subr.bf16.mxu0 0
    %2000 = vmatpush1.bf16.msra.mxu0 %v1992
    %2001 = vmatprep.subr.bf16.mxu0 0
    %2002 = vmatpush1.bf16.msra.mxu0 %v1993
    %2003 = vmatprep.subr.bf16.mxu0 0
    %2004 = vmatpush1.bf16.msra.mxu0 0
    %2005 = vmatprep.subr.bf16.mxu0 0
    %2006 = vmatpush1.bf16.msra.mxu0 0
    %2007 = vmatprep.subr.bf16.mxu0 0
    %2008 = vmatpush1.bf16.msra.mxu0 0
    %2009 = vmatprep.subr.bf16.mxu0 0
    %2010 = vmatpush1.bf16.msra.mxu0 0
    %2011 = vmatprep.subr.bf16.mxu0 0
    %2012 = vmatpush1.bf16.msra.mxu0 0
    %2013 = vmatprep.subr.bf16.mxu0 0
    %2014 = vmatpush1.bf16.msra.mxu0 0
    %2015 = vmatprep.subr.bf16.mxu0 0
    %2016 = vmatpush1.bf16.msra.mxu0 0
    %2017 = vmatprep.subr.bf16.mxu0 0
    %2018 = vmatpush1.bf16.msra.mxu0 0
    %2019 = vmatprep.subr.bf16.mxu0 0
    %2020 = vmatpush1.bf16.msra.mxu0 0
    %2021 = vmatprep.subr.bf16.mxu0 0
    %2022 = vmatpush1.bf16.msra.mxu0 0
    %2023 = vmatprep.subr.bf16.mxu0 0
    %2024 = vmatpush1.bf16.msra.mxu0 0
    %2025 = vmatprep.subr.bf16.mxu0 0
    %2026 = vmatpush1.bf16.msra.mxu0 0
    %2027 = vmatprep.subr.bf16.mxu0 0
    %2028 = vmatpush1.bf16.msra.mxu0 0
    %2029 = vmatprep.subr.bf16.mxu0 0
    %2030 = vmatpush1.bf16.msra.mxu0 0
    %2031 = vmatprep.mubr.bf16.mxu0 0
    %2032 = vmatmul.mubr.bf16.gmra.mrb[0].mxu0 %v1997
    %v2033 = vpop.f32.mrb[0].mxu0
    %v2034 = vadd.f32 %v1982, %v2033
    %v2035 = vpop.f32.mrb[0].mxu0
    %v2036 = vpop.f32.mrb[0].mxu0
    %v2037 = vadd.f32 %v1982, %v2036
    %v2038 = vpop.f32.mrb[0].mxu0
    %2039 = vdwg.mxu0
    %2042 = vrot.lane.b32.xlu0 %v2034, 120
    %v2043 = vpop.permute.xlu0 %2042
    %2044 = vrot.lane.b32.xlu0 %v2037, 120
    %v2045 = vpop.permute.xlu0 %2044
    %2048 = vrot.lane.b32.xlu0 %v2034, 112
    %v2049 = vpop.permute.xlu0 %2048
    %2050 = vrot.lane.b32.xlu0 %v2037, 112
    %v2051 = vpop.permute.xlu0 %2050
    %2054 = vrot.lane.b32.xlu0 %v2034, 104
    %v2055 = vpop.permute.xlu0 %2054
    %2056 = vrot.lane.b32.xlu0 %v2037, 104
    %v2057 = vpop.permute.xlu0 %2056
    %v2060 = vpack.c.bf16 %v2037, %v2034
    %v2061 = vpack.c.bf16 %v2045, %v2043
    %v2062 = vpack.c.bf16 %v2051, %v2049
    %v2063 = vpack.c.bf16 %v2057, %v2055
    %2065 = vrot.lane.b32.xlu0 %v2060, 96
    %v2066 = vpop.permute.xlu0 %2065
    %v2068 = vsel %vm272, %v2060, 0
    %v2071 = vsel %vm272, %v2066, 0
    %2073 = vmatprep.subr.bf16.mxu0 0
    %2074 = vmatpush1.bf16.xpose.msra.mxu0 %v2071
    %2075 = vmatprep.subr.bf16.mxu0 0
    %2076 = vmatpush1.bf16.xpose.msra.mxu0 0
    %2077 = vmatprep.subr.bf16.mxu0 0
    %2078 = vmatpush1.bf16.xpose.msra.mxu0 0
    %2079 = vmatprep.subr.bf16.mxu0 0
    %2080 = vmatpush1.bf16.xpose.msra.mxu0 0
    %2081 = vmatprep.subr.bf16.mxu0 0
    %2082 = vmatpush1.bf16.xpose.msra.mxu0 0
    %2083 = vmatprep.subr.bf16.mxu0 0
    %2084 = vmatpush1.bf16.xpose.msra.mxu0 0
    %2085 = vmatprep.subr.bf16.mxu0 0
    %2086 = vmatpush1.bf16.xpose.msra.mxu0 0
    %2087 = vmatprep.subr.bf16.mxu0 0
    %2088 = vmatpush1.bf16.xpose.msra.mxu0 0
    %2089 = vmatprep.subr.bf16.mxu0 0
    %2090 = vmatpush1.bf16.xpose.msra.mxu0 0
    %2091 = vmatprep.subr.bf16.mxu0 0
    %2092 = vmatpush1.bf16.xpose.msra.mxu0 0
    %2093 = vmatprep.subr.bf16.mxu0 0
    %2094 = vmatpush1.bf16.xpose.msra.mxu0 0
    %2095 = vmatprep.subr.bf16.mxu0 0
    %2096 = vmatpush1.bf16.xpose.msra.mxu0 0
    %2097 = vmatprep.subr.bf16.mxu0 0
    %2098 = vmatpush1.bf16.xpose.msra.mxu0 0
    %2099 = vmatprep.subr.bf16.mxu0 0
    %2100 = vmatpush1.bf16.xpose.msra.mxu0 0
    %2101 = vmatprep.subr.bf16.mxu0 0
    %2102 = vmatpush1.bf16.xpose.msra.mxu0 0
    %2103 = vmatprep.subr.bf16.mxu0 0
    %2104 = vmatpush1.bf16.xpose.msra.mxu0 0
    %2105 = vmatprep.mubr.bf16.mxu0 0
    %2106 = vmatmul.mubr.bf16.gmra.mrb[0].mxu0 %v2068
    %v2107 = vpop.f32.mrb[0].mxu0
    %v2108 = vadd.f32 0.0, %v2107
    %v2109 = vpop.f32.mrb[0].mxu0
    %v2110 = vpop.f32.mrb[0].mxu0
    %v2111 = vadd.f32 0.0, %v2110
    %v2112 = vpop.f32.mrb[0].mxu0
    %2113 = vdwg.mxu0
    %2115 = vrot.lane.b32.xlu0 %v2061, 96
    %v2116 = vpop.permute.xlu0 %2115
    %v2118 = vsel %vm272, %v2061, 0
    %v2121 = vsel %vm272, %v2116, 0
    %2123 = vmatprep.subr.bf16.mxu0 0
    %2124 = vmatpush1.bf16.xpose.msra.mxu0 %v2121
    %2125 = vmatprep.subr.bf16.mxu0 0
    %2126 = vmatpush1.bf16.xpose.msra.mxu0 0
    %2127 = vmatprep.subr.bf16.mxu0 0
    %2128 = vmatpush1.bf16.xpose.msra.mxu0 0
    %2129 = vmatprep.subr.bf16.mxu0 0
    %2130 = vmatpush1.bf16.xpose.msra.mxu0 0
    %2131 = vmatprep.subr.bf16.mxu0 0
    %2132 = vmatpush1.bf16.xpose.msra.mxu0 0
    %2133 = vmatprep.subr.bf16.mxu0 0
    %2134 = vmatpush1.bf16.xpose.msra.mxu0 0
    %2135 = vmatprep.subr.bf16.mxu0 0
    %2136 = vmatpush1.bf16.xpose.msra.mxu0 0
    %2137 = vmatprep.subr.bf16.mxu0 0
    %2138 = vmatpush1.bf16.xpose.msra.mxu0 0
    %2139 = vmatprep.subr.bf16.mxu0 0
    %2140 = vmatpush1.bf16.xpose.msra.mxu0 0
    %2141 = vmatprep.subr.bf16.mxu0 0
    %2142 = vmatpush1.bf16.xpose.msra.mxu0 0
    %2143 = vmatprep.subr.bf16.mxu0 0
    %2144 = vmatpush1.bf16.xpose.msra.mxu0 0
    %2145 = vmatprep.subr.bf16.mxu0 0
    %2146 = vmatpush1.bf16.xpose.msra.mxu0 0
    %2147 = vmatprep.subr.bf16.mxu0 0
    %2148 = vmatpush1.bf16.xpose.msra.mxu0 0
    %2149 = vmatprep.subr.bf16.mxu0 0
    %2150 = vmatpush1.bf16.xpose.msra.mxu0 0
    %2151 = vmatprep.subr.bf16.mxu0 0
    %2152 = vmatpush1.bf16.xpose.msra.mxu0 0
    %2153 = vmatprep.subr.bf16.mxu0 0
    %2154 = vmatpush1.bf16.xpose.msra.mxu0 0
    %2155 = vmatprep.mubr.bf16.mxu0 0
    %2156 = vmatmul.mubr.bf16.gmra.mrb[0].mxu0 %v2118
    %v2157 = vpop.f32.mrb[0].mxu0
    %v2158 = vadd.f32 0.0, %v2157
    %v2159 = vpop.f32.mrb[0].mxu0
    %v2160 = vpop.f32.mrb[0].mxu0
    %v2161 = vadd.f32 0.0, %v2160
    %v2162 = vpop.f32.mrb[0].mxu0
    %2163 = vdwg.mxu0
    %2165 = vrot.lane.b32.xlu0 %v2062, 96
    %v2166 = vpop.permute.xlu0 %2165
    %v2168 = vsel %vm272, %v2062, 0
    %v2171 = vsel %vm272, %v2166, 0
    %2173 = vmatprep.subr.bf16.mxu0 0
    %2174 = vmatpush1.bf16.xpose.msra.mxu0 %v2171
    %2175 = vmatprep.subr.bf16.mxu0 0
    %2176 = vmatpush1.bf16.xpose.msra.mxu0 0
    %2177 = vmatprep.subr.bf16.mxu0 0
    %2178 = vmatpush1.bf16.xpose.msra.mxu0 0
    %2179 = vmatprep.subr.bf16.mxu0 0
    %2180 = vmatpush1.bf16.xpose.msra.mxu0 0
    %2181 = vmatprep.subr.bf16.mxu0 0
    %2182 = vmatpush1.bf16.xpose.msra.mxu0 0
    %2183 = vmatprep.subr.bf16.mxu0 0
    %2184 = vmatpush1.bf16.xpose.msra.mxu0 0
    %2185 = vmatprep.subr.bf16.mxu0 0
    %2186 = vmatpush1.bf16.xpose.msra.mxu0 0
    %2187 = vmatprep.subr.bf16.mxu0 0
    %2188 = vmatpush1.bf16.xpose.msra.mxu0 0
    %2189 = vmatprep.subr.bf16.mxu0 0
    %2190 = vmatpush1.bf16.xpose.msra.mxu0 0
    %2191 = vmatprep.subr.bf16.mxu0 0
    %2192 = vmatpush1.bf16.xpose.msra.mxu0 0
    %2193 = vmatprep.subr.bf16.mxu0 0
    %2194 = vmatpush1.bf16.xpose.msra.mxu0 0
    %2195 = vmatprep.subr.bf16.mxu0 0
    %2196 = vmatpush1.bf16.xpose.msra.mxu0 0
    %2197 = vmatprep.subr.bf16.mxu0 0
    %2198 = vmatpush1.bf16.xpose.msra.mxu0 0
    %2199 = vmatprep.subr.bf16.mxu0 0
    %2200 = vmatpush1.bf16.xpose.msra.mxu0 0
    %2201 = vmatprep.subr.bf16.mxu0 0
    %2202 = vmatpush1.bf16.xpose.msra.mxu0 0
    %2203 = vmatprep.subr.bf16.mxu0 0
    %2204 = vmatpush1.bf16.xpose.msra.mxu0 0
    %2205 = vmatprep.mubr.bf16.mxu0 0
    %2206 = vmatmul.mubr.bf16.gmra.mrb[0].mxu0 %v2168
    %v2207 = vpop.f32.mrb[0].mxu0
    %v2208 = vadd.f32 0.0, %v2207
    %v2209 = vpop.f32.mrb[0].mxu0
    %v2210 = vpop.f32.mrb[0].mxu0
    %v2211 = vadd.f32 0.0, %v2210
    %v2212 = vpop.f32.mrb[0].mxu0
    %2213 = vdwg.mxu0
    %2215 = vrot.lane.b32.xlu0 %v2063, 96
    %v2216 = vpop.permute.xlu0 %2215
    %v2218 = vsel %vm272, %v2063, 0
    %v2221 = vsel %vm272, %v2216, 0
    %2223 = vmatprep.subr.bf16.mxu0 0
    %2224 = vmatpush1.bf16.xpose.msra.mxu0 %v2221
    %2225 = vmatprep.subr.bf16.mxu0 0
    %2226 = vmatpush1.bf16.xpose.msra.mxu0 0
    %2227 = vmatprep.subr.bf16.mxu0 0
    %2228 = vmatpush1.bf16.xpose.msra.mxu0 0
    %2229 = vmatprep.subr.bf16.mxu0 0
    %2230 = vmatpush1.bf16.xpose.msra.mxu0 0
    %2231 = vmatprep.subr.bf16.mxu0 0
    %2232 = vmatpush1.bf16.xpose.msra.mxu0 0
    %2233 = vmatprep.subr.bf16.mxu0 0
    %2234 = vmatpush1.bf16.xpose.msra.mxu0 0
    %2235 = vmatprep.subr.bf16.mxu0 0
    %2236 = vmatpush1.bf16.xpose.msra.mxu0 0
    %2237 = vmatprep.subr.bf16.mxu0 0
    %2238 = vmatpush1.bf16.xpose.msra.mxu0 0
    %2239 = vmatprep.subr.bf16.mxu0 0
    %2240 = vmatpush1.bf16.xpose.msra.mxu0 0
    %2241 = vmatprep.subr.bf16.mxu0 0
    %2242 = vmatpush1.bf16.xpose.msra.mxu0 0
    %2243 = vmatprep.subr.bf16.mxu0 0
    %2244 = vmatpush1.bf16.xpose.msra.mxu0 0
    %2245 = vmatprep.subr.bf16.mxu0 0
    %2246 = vmatpush1.bf16.xpose.msra.mxu0 0
    %2247 = vmatprep.subr.bf16.mxu0 0
    %2248 = vmatpush1.bf16.xpose.msra.mxu0 0
    %2249 = vmatprep.subr.bf16.mxu0 0
    %2250 = vmatpush1.bf16.xpose.msra.mxu0 0
    %2251 = vmatprep.subr.bf16.mxu0 0
    %2252 = vmatpush1.bf16.xpose.msra.mxu0 0
    %2253 = vmatprep.subr.bf16.mxu0 0
    %2254 = vmatpush1.bf16.xpose.msra.mxu0 0
    %2255 = vmatprep.mubr.bf16.mxu0 0
    %2256 = vmatmul.mubr.bf16.gmra.mrb[0].mxu0 %v2218
    %v2257 = vpop.f32.mrb[0].mxu0
    %v2258 = vadd.f32 0.0, %v2257
    %v2259 = vpop.f32.mrb[0].mxu0
    %v2260 = vpop.f32.mrb[0].mxu0
    %v2261 = vadd.f32 0.0, %v2260
    %v2262 = vpop.f32.mrb[0].mxu0
    %2263 = vdwg.mxu0
    %v2264 = vmul.f32 %v2108, 0.35355338
    %v2265 = vmul.f32 %v2111, 0.35355338
    %v2266 = vmul.f32 %v2158, 0.35355338
    %v2267 = vmul.f32 %v2161, 0.35355338
    %v2268 = vmul.f32 %v2208, 0.35355338
    %v2269 = vmul.f32 %v2211, 0.35355338
    %v2270 = vmul.f32 %v2258, 0.35355338
    %v2271 = vmul.f32 %v2261, 0.35355338
    %v2272 = vadd.f32 %v2264, %v166
    %v2273 = vadd.f32 %v2265, %v167
    %v2274 = vadd.f32 %v2266, %v166
    %v2275 = vadd.f32 %v2267, %v167
    %v2276 = vadd.f32 %v2268, %v166
    %v2277 = vadd.f32 %v2269, %v167
    %v2278 = vadd.f32 %v2270, %v166
    %v2279 = vadd.f32 %v2271, %v167
    %v2280 = vsel %vm486, %v2272, -inf
    %2281 = vmax.xlane.f32.xlu0 %v2280
    %v2282 = vpop.xlane.xlu0 %2281
    %v2283 = vsel %vm486, %v2273, -inf
    %2284 = vmax.xlane.f32.xlu0 %v2283
    %v2285 = vpop.xlane.xlu0 %2284
    %v2286 = vsel %vm486, %v2274, -inf
    %2287 = vmax.xlane.f32.xlu0 %v2286
    %v2288 = vpop.xlane.xlu0 %2287
    %v2289 = vsel %vm486, %v2275, -inf
    %2290 = vmax.xlane.f32.xlu0 %v2289
    %v2291 = vpop.xlane.xlu0 %2290
    %v2292 = vsel %vm486, %v2276, -inf
    %2293 = vmax.xlane.f32.xlu0 %v2292
    %v2294 = vpop.xlane.xlu0 %2293
    %v2295 = vsel %vm486, %v2277, -inf
    %2296 = vmax.xlane.f32.xlu0 %v2295
    %v2297 = vpop.xlane.xlu0 %2296
    %v2298 = vsel %vm486, %v2278, -inf
    %2299 = vmax.xlane.f32.xlu0 %v2298
    %v2300 = vpop.xlane.xlu0 %2299
    %v2301 = vsel %vm486, %v2279, -inf
    %2302 = vmax.xlane.f32.xlu0 %v2301
    %v2303 = vpop.xlane.xlu0 %2302
    %v2304 = vsub.f32 %v2272, %v2282
    %v2305 = vsub.f32 %v2273, %v2285
    %v2306 = vsub.f32 %v2274, %v2288
    %v2307 = vsub.f32 %v2275, %v2291
    %v2308 = vsub.f32 %v2276, %v2294
    %v2309 = vsub.f32 %v2277, %v2297
    %v2310 = vsub.f32 %v2278, %v2300
    %v2311 = vsub.f32 %v2279, %v2303
    %v2312 = vmul.f32 %v2304, 1.442695
    %v2313 = vpow.pop %v2312
    %v2314 = vmul.f32 %v2305, 1.442695
    %v2315 = vpow.pop %v2314
    %v2316 = vmul.f32 %v2306, 1.442695
    %v2317 = vpow.pop %v2316
    %v2318 = vmul.f32 %v2307, 1.442695
    %v2319 = vpow.pop %v2318
    %v2320 = vmul.f32 %v2308, 1.442695
    %v2321 = vpow.pop %v2320
    %v2322 = vmul.f32 %v2309, 1.442695
    %v2323 = vpow.pop %v2322
    %v2324 = vmul.f32 %v2310, 1.442695
    %v2325 = vpow.pop %v2324
    %v2326 = vmul.f32 %v2311, 1.442695
    %v2327 = vpow.pop %v2326
    %v2328 = vsel %vm486, %v2313, 0.0
    %2329 = vadd.xlane.f32.xlu0 %v2328
    %v2330 = vpop.xlane.xlu0 %2329
    %v2331 = vsel %vm486, %v2315, 0.0
    %2332 = vadd.xlane.f32.xlu0 %v2331
    %v2333 = vpop.xlane.xlu0 %2332
    %v2334 = vsel %vm486, %v2317, 0.0
    %2335 = vadd.xlane.f32.xlu0 %v2334
    %v2336 = vpop.xlane.xlu0 %2335
    %v2337 = vsel %vm486, %v2319, 0.0
    %2338 = vadd.xlane.f32.xlu0 %v2337
    %v2339 = vpop.xlane.xlu0 %2338
    %v2340 = vsel %vm486, %v2321, 0.0
    %2341 = vadd.xlane.f32.xlu0 %v2340
    %v2342 = vpop.xlane.xlu0 %2341
    %v2343 = vsel %vm486, %v2323, 0.0
    %2344 = vadd.xlane.f32.xlu0 %v2343
    %v2345 = vpop.xlane.xlu0 %2344
    %v2346 = vsel %vm486, %v2325, 0.0
    %2347 = vadd.xlane.f32.xlu0 %v2346
    %v2348 = vpop.xlane.xlu0 %2347
    %v2349 = vsel %vm486, %v2327, 0.0
    %2350 = vadd.xlane.f32.xlu0 %v2349
    %v2351 = vpop.xlane.xlu0 %2350
    %v2352 = vrcp.pop %v2330
    %v2353 = vrcp.pop %v2333
    %v2354 = vrcp.pop %v2336
    %v2355 = vrcp.pop %v2339
    %v2356 = vrcp.pop %v2342
    %v2357 = vrcp.pop %v2345
    %v2358 = vrcp.pop %v2348
    %v2359 = vrcp.pop %v2351
    %v2360 = vmul.f32 %v2313, %v2352
    %v2361 = vmul.f32 %v2315, %v2353
    %v2362 = vmul.f32 %v2317, %v2354
    %v2363 = vmul.f32 %v2319, %v2355
    %v2364 = vmul.f32 %v2321, %v2356
    %v2365 = vmul.f32 %v2323, %v2357
    %v2366 = vmul.f32 %v2325, %v2358
    %v2367 = vmul.f32 %v2327, %v2359
    %v2368 = vpack.c.bf16 %v2361, %v2360
    %v2369 = vpack.c.bf16 %v2363, %v2362
    %v2370 = vpack.c.bf16 %v2365, %v2364
    %v2371 = vpack.c.bf16 %v2367, %v2366
    %2372 = vrot.lane.b32.xlu0 %v2060, 64
    %v2373 = vpop.permute.xlu0 %2372
    %v2376 = vsel %vm486, %v2368, 0
    %2378 = vmatprep.subr.bf16.mxu0 0
    %2379 = vmatpush1.bf16.msra.mxu0 %v2373
    %2380 = vmatprep.subr.bf16.mxu0 0
    %2381 = vmatpush1.bf16.msra.mxu0 0
    %2382 = vmatprep.subr.bf16.mxu0 0
    %2383 = vmatpush1.bf16.msra.mxu0 0
    %2384 = vmatprep.subr.bf16.mxu0 0
    %2385 = vmatpush1.bf16.msra.mxu0 0
    %2386 = vmatprep.subr.bf16.mxu0 0
    %2387 = vmatpush1.bf16.msra.mxu0 0
    %2388 = vmatprep.subr.bf16.mxu0 0
    %2389 = vmatpush1.bf16.msra.mxu0 0
    %2390 = vmatprep.subr.bf16.mxu0 0
    %2391 = vmatpush1.bf16.msra.mxu0 0
    %2392 = vmatprep.subr.bf16.mxu0 0
    %2393 = vmatpush1.bf16.msra.mxu0 0
    %2394 = vmatprep.subr.bf16.mxu0 0
    %2395 = vmatpush1.bf16.msra.mxu0 0
    %2396 = vmatprep.subr.bf16.mxu0 0
    %2397 = vmatpush1.bf16.msra.mxu0 0
    %2398 = vmatprep.subr.bf16.mxu0 0
    %2399 = vmatpush1.bf16.msra.mxu0 0
    %2400 = vmatprep.subr.bf16.mxu0 0
    %2401 = vmatpush1.bf16.msra.mxu0 0
    %2402 = vmatprep.subr.bf16.mxu0 0
    %2403 = vmatpush1.bf16.msra.mxu0 0
    %2404 = vmatprep.subr.bf16.mxu0 0
    %2405 = vmatpush1.bf16.msra.mxu0 0
    %2406 = vmatprep.subr.bf16.mxu0 0
    %2407 = vmatpush1.bf16.msra.mxu0 0
    %2408 = vmatprep.subr.bf16.mxu0 0
    %2409 = vmatpush1.bf16.msra.mxu0 0
    %2410 = vmatprep.mubr.bf16.mxu0 0
    %2411 = vmatmul.mubr.bf16.gmra.mrb[0].mxu0 %v2376
    %v2412 = vpop.f32.mrb[0].mxu0
    %v2413 = vadd.f32 0.0, %v2412
    %v2414 = vpop.f32.mrb[0].mxu0
    %v2415 = vpop.f32.mrb[0].mxu0
    %v2416 = vadd.f32 0.0, %v2415
    %v2417 = vpop.f32.mrb[0].mxu0
    %2418 = vdwg.mxu0
    %2419 = vrot.lane.b32.xlu0 %v2061, 64
    %v2420 = vpop.permute.xlu0 %2419
    %v2423 = vsel %vm486, %v2369, 0
    %2425 = vmatprep.subr.bf16.mxu0 0
    %2426 = vmatpush1.bf16.msra.mxu0 %v2420
    %2427 = vmatprep.subr.bf16.mxu0 0
    %2428 = vmatpush1.bf16.msra.mxu0 0
    %2429 = vmatprep.subr.bf16.mxu0 0
    %2430 = vmatpush1.bf16.msra.mxu0 0
    %2431 = vmatprep.subr.bf16.mxu0 0
    %2432 = vmatpush1.bf16.msra.mxu0 0
    %2433 = vmatprep.subr.bf16.mxu0 0
    %2434 = vmatpush1.bf16.msra.mxu0 0
    %2435 = vmatprep.subr.bf16.mxu0 0
    %2436 = vmatpush1.bf16.msra.mxu0 0
    %2437 = vmatprep.subr.bf16.mxu0 0
    %2438 = vmatpush1.bf16.msra.mxu0 0
    %2439 = vmatprep.subr.bf16.mxu0 0
    %2440 = vmatpush1.bf16.msra.mxu0 0
    %2441 = vmatprep.subr.bf16.mxu0 0
    %2442 = vmatpush1.bf16.msra.mxu0 0
    %2443 = vmatprep.subr.bf16.mxu0 0
    %2444 = vmatpush1.bf16.msra.mxu0 0
    %2445 = vmatprep.subr.bf16.mxu0 0
    %2446 = vmatpush1.bf16.msra.mxu0 0
    %2447 = vmatprep.subr.bf16.mxu0 0
    %2448 = vmatpush1.bf16.msra.mxu0 0
    %2449 = vmatprep.subr.bf16.mxu0 0
    %2450 = vmatpush1.bf16.msra.mxu0 0
    %2451 = vmatprep.subr.bf16.mxu0 0
    %2452 = vmatpush1.bf16.msra.mxu0 0
    %2453 = vmatprep.subr.bf16.mxu0 0
    %2454 = vmatpush1.bf16.msra.mxu0 0
    %2455 = vmatprep.subr.bf16.mxu0 0
    %2456 = vmatpush1.bf16.msra.mxu0 0
    %2457 = vmatprep.mubr.bf16.mxu0 0
    %2458 = vmatmul.mubr.bf16.gmra.mrb[0].mxu0 %v2423
    %v2459 = vpop.f32.mrb[0].mxu0
    %v2460 = vadd.f32 0.0, %v2459
    %v2461 = vpop.f32.mrb[0].mxu0
    %v2462 = vpop.f32.mrb[0].mxu0
    %v2463 = vadd.f32 0.0, %v2462
    %v2464 = vpop.f32.mrb[0].mxu0
    %2465 = vdwg.mxu0
    %2466 = vrot.lane.b32.xlu0 %v2062, 64
    %v2467 = vpop.permute.xlu0 %2466
    %v2470 = vsel %vm486, %v2370, 0
    %2472 = vmatprep.subr.bf16.mxu0 0
    %2473 = vmatpush1.bf16.msra.mxu0 %v2467
    %2474 = vmatprep.subr.bf16.mxu0 0
    %2475 = vmatpush1.bf16.msra.mxu0 0
    %2476 = vmatprep.subr.bf16.mxu0 0
    %2477 = vmatpush1.bf16.msra.mxu0 0
    %2478 = vmatprep.subr.bf16.mxu0 0
    %2479 = vmatpush1.bf16.msra.mxu0 0
    %2480 = vmatprep.subr.bf16.mxu0 0
    %2481 = vmatpush1.bf16.msra.mxu0 0
    %2482 = vmatprep.subr.bf16.mxu0 0
    %2483 = vmatpush1.bf16.msra.mxu0 0
    %2484 = vmatprep.subr.bf16.mxu0 0
    %2485 = vmatpush1.bf16.msra.mxu0 0
    %2486 = vmatprep.subr.bf16.mxu0 0
    %2487 = vmatpush1.bf16.msra.mxu0 0
    %2488 = vmatprep.subr.bf16.mxu0 0
    %2489 = vmatpush1.bf16.msra.mxu0 0
    %2490 = vmatprep.subr.bf16.mxu0 0
    %2491 = vmatpush1.bf16.msra.mxu0 0
    %2492 = vmatprep.subr.bf16.mxu0 0
    %2493 = vmatpush1.bf16.msra.mxu0 0
    %2494 = vmatprep.subr.bf16.mxu0 0
    %2495 = vmatpush1.bf16.msra.mxu0 0
    %2496 = vmatprep.subr.bf16.mxu0 0
    %2497 = vmatpush1.bf16.msra.mxu0 0
    %2498 = vmatprep.subr.bf16.mxu0 0
    %2499 = vmatpush1.bf16.msra.mxu0 0
    %2500 = vmatprep.subr.bf16.mxu0 0
    %2501 = vmatpush1.bf16.msra.mxu0 0
    %2502 = vmatprep.subr.bf16.mxu0 0
    %2503 = vmatpush1.bf16.msra.mxu0 0
    %2504 = vmatprep.mubr.bf16.mxu0 0
    %2505 = vmatmul.mubr.bf16.gmra.mrb[0].mxu0 %v2470
    %v2506 = vpop.f32.mrb[0].mxu0
    %v2507 = vadd.f32 0.0, %v2506
    %v2508 = vpop.f32.mrb[0].mxu0
    %v2509 = vpop.f32.mrb[0].mxu0
    %v2510 = vadd.f32 0.0, %v2509
    %v2511 = vpop.f32.mrb[0].mxu0
    %2512 = vdwg.mxu0
    %2513 = vrot.lane.b32.xlu0 %v2063, 64
    %v2514 = vpop.permute.xlu0 %2513
    %v2517 = vsel %vm486, %v2371, 0
    %2519 = vmatprep.subr.bf16.mxu0 0
    %2520 = vmatpush1.bf16.msra.mxu0 %v2514
    %2521 = vmatprep.subr.bf16.mxu0 0
    %2522 = vmatpush1.bf16.msra.mxu0 0
    %2523 = vmatprep.subr.bf16.mxu0 0
    %2524 = vmatpush1.bf16.msra.mxu0 0
    %2525 = vmatprep.subr.bf16.mxu0 0
    %2526 = vmatpush1.bf16.msra.mxu0 0
    %2527 = vmatprep.subr.bf16.mxu0 0
    %2528 = vmatpush1.bf16.msra.mxu0 0
    %2529 = vmatprep.subr.bf16.mxu0 0
    %2530 = vmatpush1.bf16.msra.mxu0 0
    %2531 = vmatprep.subr.bf16.mxu0 0
    %2532 = vmatpush1.bf16.msra.mxu0 0
    %2533 = vmatprep.subr.bf16.mxu0 0
    %2534 = vmatpush1.bf16.msra.mxu0 0
    %2535 = vmatprep.subr.bf16.mxu0 0
    %2536 = vmatpush1.bf16.msra.mxu0 0
    %2537 = vmatprep.subr.bf16.mxu0 0
    %2538 = vmatpush1.bf16.msra.mxu0 0
    %2539 = vmatprep.subr.bf16.mxu0 0
    %2540 = vmatpush1.bf16.msra.mxu0 0
    %2541 = vmatprep.subr.bf16.mxu0 0
    %2542 = vmatpush1.bf16.msra.mxu0 0
    %2543 = vmatprep.subr.bf16.mxu0 0
    %2544 = vmatpush1.bf16.msra.mxu0 0
    %2545 = vmatprep.subr.bf16.mxu0 0
    %2546 = vmatpush1.bf16.msra.mxu0 0
    %2547 = vmatprep.subr.bf16.mxu0 0
    %2548 = vmatpush1.bf16.msra.mxu0 0
    %2549 = vmatprep.subr.bf16.mxu0 0
    %2550 = vmatpush1.bf16.msra.mxu0 0
    %2551 = vmatprep.mubr.bf16.mxu0 0
    %2552 = vmatmul.mubr.bf16.gmra.mrb[0].mxu0 %v2517
    %v2553 = vpop.f32.mrb[0].mxu0
    %v2554 = vadd.f32 0.0, %v2553
    %v2555 = vpop.f32.mrb[0].mxu0
    %v2556 = vpop.f32.mrb[0].mxu0
    %v2557 = vadd.f32 0.0, %v2556
    %v2558 = vpop.f32.mrb[0].mxu0
    %2559 = vdwg.mxu0
    %2562 = vrot.lane.b32.xlu0 %v2460, 8
    %v2563 = vpop.permute.xlu0 %2562
    %2564 = vrot.lane.b32.xlu0 %v2463, 8
    %v2565 = vpop.permute.xlu0 %2564
    %2570 = vrot.lane.b32.xlu0 %v2507, 16
    %v2571 = vpop.permute.xlu0 %2570
    %2572 = vrot.lane.b32.xlu0 %v2510, 16
    %v2573 = vpop.permute.xlu0 %2572
    %2578 = vrot.lane.b32.xlu0 %v2554, 24
    %v2579 = vpop.permute.xlu0 %2578
    %2580 = vrot.lane.b32.xlu0 %v2557, 24
    %v2581 = vpop.permute.xlu0 %2580
    %v2584 = vsel %vm272, %v2413, %v2563
    %v2585 = vsel %vm272, %v2416, %v2565
    %v2586 = vsel %vm486, %v2584, %v2571
    %v2587 = vsel %vm486, %v2585, %v2573
    %v2588 = vsel %vm795, %v2586, %v2579
    %v2589 = vsel %vm795, %v2587, %v2581
    %v2590 = vpack.c.bf16 %v2589, %v2588
    %v2592 = vlaneseq
    %v2593 = vshrl.u32 %v2592, 7
    %v2594 = vsub.s32 0, %v2593
    %v2595 = vrot.slane %v1976, %v2594
    %v2601 = vunpack.c.l.b16 %v1971
    %v2602 = vunpack.c.l.b16 %v1972
    %v2603 = vunpack.c.l.b16 %v1973
    %v2604 = vunpack.c.l.b16 %v1974
    %v2605 = vpack.c.b16 %v2602, %v2601
    %v2606 = vpack.c.b16 %v2604, %v2603
    %v2610 = vsel %vm200, %v2590, 0
    %2612 = vmatprep.subr.bf16.mxu0 0
    %2613 = vmatpush1.bf16.msra.mxu0 %v2605
    %2614 = vmatprep.subr.bf16.mxu0 0
    %2615 = vmatpush1.bf16.msra.mxu0 %v2606
    %2616 = vmatprep.subr.bf16.mxu0 0
    %2617 = vmatpush1.bf16.msra.mxu0 0
    %2618 = vmatprep.subr.bf16.mxu0 0
    %2619 = vmatpush1.bf16.msra.mxu0 0
    %2620 = vmatprep.subr.bf16.mxu0 0
    %2621 = vmatpush1.bf16.msra.mxu0 0
    %2622 = vmatprep.subr.bf16.mxu0 0
    %2623 = vmatpush1.bf16.msra.mxu0 0
    %2624 = vmatprep.subr.bf16.mxu0 0
    %2625 = vmatpush1.bf16.msra.mxu0 0
    %2626 = vmatprep.subr.bf16.mxu0 0
    %2627 = vmatpush1.bf16.msra.mxu0 0
    %2628 = vmatprep.subr.bf16.mxu0 0
    %2629 = vmatpush1.bf16.msra.mxu0 0
    %2630 = vmatprep.subr.bf16.mxu0 0
    %2631 = vmatpush1.bf16.msra.mxu0 0
    %2632 = vmatprep.subr.bf16.mxu0 0
    %2633 = vmatpush1.bf16.msra.mxu0 0
    %2634 = vmatprep.subr.bf16.mxu0 0
    %2635 = vmatpush1.bf16.msra.mxu0 0
    %2636 = vmatprep.subr.bf16.mxu0 0
    %2637 = vmatpush1.bf16.msra.mxu0 0
    %2638 = vmatprep.subr.bf16.mxu0 0
    %2639 = vmatpush1.bf16.msra.mxu0 0
    %2640 = vmatprep.subr.bf16.mxu0 0
    %2641 = vmatpush1.bf16.msra.mxu0 0
    %2642 = vmatprep.subr.bf16.mxu0 0
    %2643 = vmatpush1.bf16.msra.mxu0 0
    %2644 = vmatprep.mubr.bf16.mxu0 0
    %2645 = vmatmul.mubr.bf16.gmra.mrb[0].mxu0 %v2610
    %v2646 = vpop.f32.mrb[0].mxu0
    %v2647 = vadd.f32 %v2595, %v2646
    %v2648 = vpop.f32.mrb[0].mxu0
    %v2649 = vpop.f32.mrb[0].mxu0
    %v2650 = vadd.f32 %v2595, %v2649
    %v2651 = vpop.f32.mrb[0].mxu0
    %2652 = vdwg.mxu0
    %v2653 = vadd.f32 %v1959, %v2647
    %v2654 = vadd.f32 %v1960, %v2650
    %v2655 = vsel %vm200, %v2653, 0.0
    %2656 = vadd.xlane.f32.xlu0 %v2655
    %v2657 = vpop.xlane.xlu0 %2656
    %v2658 = vsel %vm200, %v2654, 0.0
    %2659 = vadd.xlane.f32.xlu0 %v2658
    %v2660 = vpop.xlane.xlu0 %2659
    %v2661 = vmul.f32 %v2657, %v869
    %v2662 = vmul.f32 %v2660, %v869
    %v2663 = vsub.f32 %v2653, %v2661
    %v2664 = vsub.f32 %v2654, %v2662
    %v2665 = vmul.f32 %v2663, %v2663
    %v2666 = vmul.f32 %v2664, %v2664
    %v2667 = vsel %vm200, %v2665, 0.0
    %2668 = vadd.xlane.f32.xlu0 %v2667
    %v2669 = vpop.xlane.xlu0 %2668
    %v2670 = vsel %vm200, %v2666, 0.0
    %2671 = vadd.xlane.f32.xlu0 %v2670
    %v2672 = vpop.xlane.xlu0 %2671
    %v2673 = vmul.f32 %v2669, %v869
    %v2674 = vmul.f32 %v2672, %v869
    %v2675 = vadd.f32 %v2673, 1e-05
    %v2676 = vadd.f32 %v2674, 1e-05
    %v2677 = vrsqrt.pop %v2675
    %v2678 = vrsqrt.pop %v2676
    %v2679 = vmul.f32 %v2663, %v2677
    %v2680 = vmul.f32 %v2664, %v2678
    %v2681 = vlaneseq
    %v2682 = vshrl.u32 %v2681, 7
    %v2683 = vsub.s32 0, %v2682
    %v2684 = vrot.slane %v1962, %v2683
    %v2685 = vmul.f32 %v2679, %v2684
    %v2686 = vmul.f32 %v2680, %v2684
    %v2687 = vlaneseq
    %v2688 = vshrl.u32 %v2687, 7
    %v2689 = vsub.s32 1, %v2688
    %v2690 = vrot.slane %v1962, %v2689
    %v2691 = vadd.f32 %v2685, %v2690
    %v2692 = vadd.f32 %v2686, %v2690
    %s2693 = scalar_lea.vmem %s5, 48
    %v2694 = vld [vmem:[%s2693] sm:$0xf]
    %v2695 = vld [vmem:[%s2693 + $0x4] sm:$0xf]
    %v2696 = vld [vmem:[%s2693 + $0x8] sm:$0xf]
    %v2697 = vld [vmem:[%s2693 + $0xc] sm:$0xf]
    %s2698 = scalar_lea.vmem %s6, 3
    %v2699 = vld [vmem:[%s2698] sm:$0x1]
    %s2700 = scalar_lea.vmem %s7, 48
    %v2701 = vld [vmem:[%s2700] sm:$0xf]
    %v2702 = vld [vmem:[%s2700 + $0x4] sm:$0xf]
    %v2703 = vld [vmem:[%s2700 + $0x8] sm:$0xf]
    %v2704 = vld [vmem:[%s2700 + $0xc] sm:$0xf]
    %s2705 = scalar_lea.vmem %s8, 3
    %v2706 = vld [vmem:[%s2705] sm:$0x1]
    %v2707 = vpack.c.bf16 %v2692, %v2691
    %v2709 = vlaneseq
    %v2710 = vshrl.u32 %v2709, 7
    %v2711 = vsub.s32 0, %v2710
    %v2712 = vrot.slane %v2699, %v2711
    %v2718 = vunpack.c.l.b16 %v2694
    %v2719 = vunpack.c.l.b16 %v2695
    %v2720 = vunpack.c.l.b16 %v2696
    %v2721 = vunpack.c.l.b16 %v2697
    %v2722 = vpack.c.b16 %v2719, %v2718
    %v2723 = vpack.c.b16 %v2721, %v2720
    %v2727 = vsel %vm200, %v2707, 0
    %2729 = vmatprep.subr.bf16.mxu0 0
    %2730 = vmatpush1.bf16.msra.mxu0 %v2722
    %2731 = vmatprep.subr.bf16.mxu0 0
    %2732 = vmatpush1.bf16.msra.mxu0 %v2723
    %2733 = vmatprep.subr.bf16.mxu0 0
    %2734 = vmatpush1.bf16.msra.mxu0 0
    %2735 = vmatprep.subr.bf16.mxu0 0
    %2736 = vmatpush1.bf16.msra.mxu0 0
    %2737 = vmatprep.subr.bf16.mxu0 0
    %2738 = vmatpush1.bf16.msra.mxu0 0
    %2739 = vmatprep.subr.bf16.mxu0 0
    %2740 = vmatpush1.bf16.msra.mxu0 0
    %2741 = vmatprep.subr.bf16.mxu0 0
    %2742 = vmatpush1.bf16.msra.mxu0 0
    %2743 = vmatprep.subr.bf16.mxu0 0
    %2744 = vmatpush1.bf16.msra.mxu0 0
    %2745 = vmatprep.subr.bf16.mxu0 0
    %2746 = vmatpush1.bf16.msra.mxu0 0
    %2747 = vmatprep.subr.bf16.mxu0 0
    %2748 = vmatpush1.bf16.msra.mxu0 0
    %2749 = vmatprep.subr.bf16.mxu0 0
    %2750 = vmatpush1.bf16.msra.mxu0 0
    %2751 = vmatprep.subr.bf16.mxu0 0
    %2752 = vmatpush1.bf16.msra.mxu0 0
    %2753 = vmatprep.subr.bf16.mxu0 0
    %2754 = vmatpush1.bf16.msra.mxu0 0
    %2755 = vmatprep.subr.bf16.mxu0 0
    %2756 = vmatpush1.bf16.msra.mxu0 0
    %2757 = vmatprep.subr.bf16.mxu0 0
    %2758 = vmatpush1.bf16.msra.mxu0 0
    %2759 = vmatprep.subr.bf16.mxu0 0
    %2760 = vmatpush1.bf16.msra.mxu0 0
    %2761 = vmatprep.mubr.bf16.mxu0 0
    %2762 = vmatmul.mubr.bf16.gmra.mrb[0].mxu0 %v2727
    %v2763 = vpop.f32.mrb[0].mxu0
    %v2764 = vadd.f32 %v2712, %v2763
    %v2765 = vpop.f32.mrb[0].mxu0
    %v2766 = vpop.f32.mrb[0].mxu0
    %v2767 = vadd.f32 %v2712, %v2766
    %v2768 = vpop.f32.mrb[0].mxu0
    %2769 = vdwg.mxu0
    %2770 = vrot.lane.b32.xlu0 %v2722, 96
    %v2771 = vpop.permute.xlu0 %2770
    %2772 = vrot.lane.b32.xlu0 %v2723, 96
    %v2773 = vpop.permute.xlu0 %2772
    %2776 = vrot.lane.b32.xlu0 %v2712, 96
    %v2777 = vpop.permute.xlu0 %2776
    %2779 = vmatprep.subr.bf16.mxu0 0
    %2780 = vmatpush1.bf16.msra.mxu0 %v2771
    %2781 = vmatprep.subr.bf16.mxu0 0
    %2782 = vmatpush1.bf16.msra.mxu0 %v2773
    %2783 = vmatprep.subr.bf16.mxu0 0
    %2784 = vmatpush1.bf16.msra.mxu0 0
    %2785 = vmatprep.subr.bf16.mxu0 0
    %2786 = vmatpush1.bf16.msra.mxu0 0
    %2787 = vmatprep.subr.bf16.mxu0 0
    %2788 = vmatpush1.bf16.msra.mxu0 0
    %2789 = vmatprep.subr.bf16.mxu0 0
    %2790 = vmatpush1.bf16.msra.mxu0 0
    %2791 = vmatprep.subr.bf16.mxu0 0
    %2792 = vmatpush1.bf16.msra.mxu0 0
    %2793 = vmatprep.subr.bf16.mxu0 0
    %2794 = vmatpush1.bf16.msra.mxu0 0
    %2795 = vmatprep.subr.bf16.mxu0 0
    %2796 = vmatpush1.bf16.msra.mxu0 0
    %2797 = vmatprep.subr.bf16.mxu0 0
    %2798 = vmatpush1.bf16.msra.mxu0 0
    %2799 = vmatprep.subr.bf16.mxu0 0
    %2800 = vmatpush1.bf16.msra.mxu0 0
    %2801 = vmatprep.subr.bf16.mxu0 0
    %2802 = vmatpush1.bf16.msra.mxu0 0
    %2803 = vmatprep.subr.bf16.mxu0 0
    %2804 = vmatpush1.bf16.msra.mxu0 0
    %2805 = vmatprep.subr.bf16.mxu0 0
    %2806 = vmatpush1.bf16.msra.mxu0 0
    %2807 = vmatprep.subr.bf16.mxu0 0
    %2808 = vmatpush1.bf16.msra.mxu0 0
    %2809 = vmatprep.subr.bf16.mxu0 0
    %2810 = vmatpush1.bf16.msra.mxu0 0
    %2811 = vmatprep.mubr.bf16.mxu0 0
    %2812 = vmatmul.mubr.bf16.gmra.mrb[0].mxu0 %v991
    %v2813 = vpop.f32.mrb[0].mxu0
    %v2814 = vadd.f32 %v2777, %v2813
    %v2815 = vpop.f32.mrb[0].mxu0
    %v2816 = vpop.f32.mrb[0].mxu0
    %v2817 = vadd.f32 %v2777, %v2816
    %v2818 = vpop.f32.mrb[0].mxu0
    %2819 = vmatprep.mubr.bf16.mxu0 0
    %2820 = vmatmul.mubr.bf16.gmra.mrb[0].mxu0 %v994
    %v2821 = vpop.f32.mrb[0].mxu0
    %v2822 = vadd.f32 %v2777, %v2821
    %v2823 = vpop.f32.mrb[0].mxu0
    %v2824 = vpop.f32.mrb[0].mxu0
    %v2825 = vadd.f32 %v2777, %v2824
    %v2826 = vpop.f32.mrb[0].mxu0
    %2827 = vdwg.mxu0
    %2830 = vrot.lane.b32.xlu0 %v2764, 120
    %v2831 = vpop.permute.xlu0 %2830
    %2832 = vrot.lane.b32.xlu0 %v2767, 120
    %v2833 = vpop.permute.xlu0 %2832
    %2836 = vrot.lane.b32.xlu0 %v2764, 112
    %v2837 = vpop.permute.xlu0 %2836
    %2838 = vrot.lane.b32.xlu0 %v2767, 112
    %v2839 = vpop.permute.xlu0 %2838
    %2842 = vrot.lane.b32.xlu0 %v2764, 104
    %v2843 = vpop.permute.xlu0 %2842
    %2844 = vrot.lane.b32.xlu0 %v2767, 104
    %v2845 = vpop.permute.xlu0 %2844
    %v2848 = vpack.c.bf16 %v2767, %v2764
    %v2849 = vpack.c.bf16 %v2833, %v2831
    %v2850 = vpack.c.bf16 %v2839, %v2837
    %v2851 = vpack.c.bf16 %v2845, %v2843
    %2856 = vrot.lane.b32.xlu0 %v2814, 120
    %v2857 = vpop.permute.xlu0 %2856
    %2858 = vrot.lane.b32.xlu0 %v2817, 120
    %v2859 = vpop.permute.xlu0 %2858
    %2860 = vrot.lane.b32.xlu0 %v2822, 120
    %v2861 = vpop.permute.xlu0 %2860
    %2862 = vrot.lane.b32.xlu0 %v2825, 120
    %v2863 = vpop.permute.xlu0 %2862
    %2868 = vrot.lane.b32.xlu0 %v2814, 112
    %v2869 = vpop.permute.xlu0 %2868
    %2870 = vrot.lane.b32.xlu0 %v2817, 112
    %v2871 = vpop.permute.xlu0 %2870
    %2872 = vrot.lane.b32.xlu0 %v2822, 112
    %v2873 = vpop.permute.xlu0 %2872
    %2874 = vrot.lane.b32.xlu0 %v2825, 112
    %v2875 = vpop.permute.xlu0 %2874
    %2880 = vrot.lane.b32.xlu0 %v2814, 104
    %v2881 = vpop.permute.xlu0 %2880
    %2882 = vrot.lane.b32.xlu0 %v2817, 104
    %v2883 = vpop.permute.xlu0 %2882
    %2884 = vrot.lane.b32.xlu0 %v2822, 104
    %v2885 = vpop.permute.xlu0 %2884
    %2886 = vrot.lane.b32.xlu0 %v2825, 104
    %v2887 = vpop.permute.xlu0 %2886
    %v2892 = vpack.c.bf16 %v2817, %v2814
    %v2893 = vpack.c.bf16 %v2825, %v2822
    %v2894 = vpack.c.bf16 %v2859, %v2857
    %v2895 = vpack.c.bf16 %v2863, %v2861
    %v2896 = vpack.c.bf16 %v2871, %v2869
    %v2897 = vpack.c.bf16 %v2875, %v2873
    %v2898 = vpack.c.bf16 %v2883, %v2881
    %v2899 = vpack.c.bf16 %v2887, %v2885
    %v2901 = vsel %vm272, %v2848, 0
    %v2904 = vsel %vm272, %v2892, 0
    %v2907 = vsel %vm272, %v2893, 0
    %2909 = vmatprep.subr.bf16.mxu0 0
    %2910 = vmatpush1.bf16.xpose.msra.mxu0 %v2904
    %2911 = vmatprep.subr.bf16.mxu0 0
    %2912 = vmatpush1.bf16.xpose.msra.mxu0 %v2907
    %2913 = vmatprep.subr.bf16.mxu0 0
    %2914 = vmatpush1.bf16.xpose.msra.mxu0 0
    %2915 = vmatprep.subr.bf16.mxu0 0
    %2916 = vmatpush1.bf16.xpose.msra.mxu0 0
    %2917 = vmatprep.subr.bf16.mxu0 0
    %2918 = vmatpush1.bf16.xpose.msra.mxu0 0
    %2919 = vmatprep.subr.bf16.mxu0 0
    %2920 = vmatpush1.bf16.xpose.msra.mxu0 0
    %2921 = vmatprep.subr.bf16.mxu0 0
    %2922 = vmatpush1.bf16.xpose.msra.mxu0 0
    %2923 = vmatprep.subr.bf16.mxu0 0
    %2924 = vmatpush1.bf16.xpose.msra.mxu0 0
    %2925 = vmatprep.subr.bf16.mxu0 0
    %2926 = vmatpush1.bf16.xpose.msra.mxu0 0
    %2927 = vmatprep.subr.bf16.mxu0 0
    %2928 = vmatpush1.bf16.xpose.msra.mxu0 0
    %2929 = vmatprep.subr.bf16.mxu0 0
    %2930 = vmatpush1.bf16.xpose.msra.mxu0 0
    %2931 = vmatprep.subr.bf16.mxu0 0
    %2932 = vmatpush1.bf16.xpose.msra.mxu0 0
    %2933 = vmatprep.subr.bf16.mxu0 0
    %2934 = vmatpush1.bf16.xpose.msra.mxu0 0
    %2935 = vmatprep.subr.bf16.mxu0 0
    %2936 = vmatpush1.bf16.xpose.msra.mxu0 0
    %2937 = vmatprep.subr.bf16.mxu0 0
    %2938 = vmatpush1.bf16.xpose.msra.mxu0 0
    %2939 = vmatprep.subr.bf16.mxu0 0
    %2940 = vmatpush1.bf16.xpose.msra.mxu0 0
    %2941 = vmatprep.mubr.bf16.mxu0 0
    %2942 = vmatmul.mubr.bf16.gmra.mrb[0].mxu0 %v2901
    %v2943 = vpop.f32.mrb[0].mxu0
    %v2944 = vadd.f32 0.0, %v2943
    %v2945 = vpop.f32.mrb[0].mxu0
    %v2946 = vpop.f32.mrb[0].mxu0
    %v2947 = vadd.f32 0.0, %v2946
    %v2948 = vpop.f32.mrb[0].mxu0
    %2949 = vdwg.mxu0
    %v2951 = vsel %vm272, %v2849, 0
    %v2954 = vsel %vm272, %v2894, 0
    %v2957 = vsel %vm272, %v2895, 0
    %2959 = vmatprep.subr.bf16.mxu0 0
    %2960 = vmatpush1.bf16.xpose.msra.mxu0 %v2954
    %2961 = vmatprep.subr.bf16.mxu0 0
    %2962 = vmatpush1.bf16.xpose.msra.mxu0 %v2957
    %2963 = vmatprep.subr.bf16.mxu0 0
    %2964 = vmatpush1.bf16.xpose.msra.mxu0 0
    %2965 = vmatprep.subr.bf16.mxu0 0
    %2966 = vmatpush1.bf16.xpose.msra.mxu0 0
    %2967 = vmatprep.subr.bf16.mxu0 0
    %2968 = vmatpush1.bf16.xpose.msra.mxu0 0
    %2969 = vmatprep.subr.bf16.mxu0 0
    %2970 = vmatpush1.bf16.xpose.msra.mxu0 0
    %2971 = vmatprep.subr.bf16.mxu0 0
    %2972 = vmatpush1.bf16.xpose.msra.mxu0 0
    %2973 = vmatprep.subr.bf16.mxu0 0
    %2974 = vmatpush1.bf16.xpose.msra.mxu0 0
    %2975 = vmatprep.subr.bf16.mxu0 0
    %2976 = vmatpush1.bf16.xpose.msra.mxu0 0
    %2977 = vmatprep.subr.bf16.mxu0 0
    %2978 = vmatpush1.bf16.xpose.msra.mxu0 0
    %2979 = vmatprep.subr.bf16.mxu0 0
    %2980 = vmatpush1.bf16.xpose.msra.mxu0 0
    %2981 = vmatprep.subr.bf16.mxu0 0
    %2982 = vmatpush1.bf16.xpose.msra.mxu0 0
    %2983 = vmatprep.subr.bf16.mxu0 0
    %2984 = vmatpush1.bf16.xpose.msra.mxu0 0
    %2985 = vmatprep.subr.bf16.mxu0 0
    %2986 = vmatpush1.bf16.xpose.msra.mxu0 0
    %2987 = vmatprep.subr.bf16.mxu0 0
    %2988 = vmatpush1.bf16.xpose.msra.mxu0 0
    %2989 = vmatprep.subr.bf16.mxu0 0
    %2990 = vmatpush1.bf16.xpose.msra.mxu0 0
    %2991 = vmatprep.mubr.bf16.mxu0 0
    %2992 = vmatmul.mubr.bf16.gmra.mrb[0].mxu0 %v2951
    %v2993 = vpop.f32.mrb[0].mxu0
    %v2994 = vadd.f32 0.0, %v2993
    %v2995 = vpop.f32.mrb[0].mxu0
    %v2996 = vpop.f32.mrb[0].mxu0
    %v2997 = vadd.f32 0.0, %v2996
    %v2998 = vpop.f32.mrb[0].mxu0
    %2999 = vdwg.mxu0
    %v3001 = vsel %vm272, %v2850, 0
    %v3004 = vsel %vm272, %v2896, 0
    %v3007 = vsel %vm272, %v2897, 0
    %3009 = vmatprep.subr.bf16.mxu0 0
    %3010 = vmatpush1.bf16.xpose.msra.mxu0 %v3004
    %3011 = vmatprep.subr.bf16.mxu0 0
    %3012 = vmatpush1.bf16.xpose.msra.mxu0 %v3007
    %3013 = vmatprep.subr.bf16.mxu0 0
    %3014 = vmatpush1.bf16.xpose.msra.mxu0 0
    %3015 = vmatprep.subr.bf16.mxu0 0
    %3016 = vmatpush1.bf16.xpose.msra.mxu0 0
    %3017 = vmatprep.subr.bf16.mxu0 0
    %3018 = vmatpush1.bf16.xpose.msra.mxu0 0
    %3019 = vmatprep.subr.bf16.mxu0 0
    %3020 = vmatpush1.bf16.xpose.msra.mxu0 0
    %3021 = vmatprep.subr.bf16.mxu0 0
    %3022 = vmatpush1.bf16.xpose.msra.mxu0 0
    %3023 = vmatprep.subr.bf16.mxu0 0
    %3024 = vmatpush1.bf16.xpose.msra.mxu0 0
    %3025 = vmatprep.subr.bf16.mxu0 0
    %3026 = vmatpush1.bf16.xpose.msra.mxu0 0
    %3027 = vmatprep.subr.bf16.mxu0 0
    %3028 = vmatpush1.bf16.xpose.msra.mxu0 0
    %3029 = vmatprep.subr.bf16.mxu0 0
    %3030 = vmatpush1.bf16.xpose.msra.mxu0 0
    %3031 = vmatprep.subr.bf16.mxu0 0
    %3032 = vmatpush1.bf16.xpose.msra.mxu0 0
    %3033 = vmatprep.subr.bf16.mxu0 0
    %3034 = vmatpush1.bf16.xpose.msra.mxu0 0
    %3035 = vmatprep.subr.bf16.mxu0 0
    %3036 = vmatpush1.bf16.xpose.msra.mxu0 0
    %3037 = vmatprep.subr.bf16.mxu0 0
    %3038 = vmatpush1.bf16.xpose.msra.mxu0 0
    %3039 = vmatprep.subr.bf16.mxu0 0
    %3040 = vmatpush1.bf16.xpose.msra.mxu0 0
    %3041 = vmatprep.mubr.bf16.mxu0 0
    %3042 = vmatmul.mubr.bf16.gmra.mrb[0].mxu0 %v3001
    %v3043 = vpop.f32.mrb[0].mxu0
    %v3044 = vadd.f32 0.0, %v3043
    %v3045 = vpop.f32.mrb[0].mxu0
    %v3046 = vpop.f32.mrb[0].mxu0
    %v3047 = vadd.f32 0.0, %v3046
    %v3048 = vpop.f32.mrb[0].mxu0
    %3049 = vdwg.mxu0
    %v3051 = vsel %vm272, %v2851, 0
    %v3054 = vsel %vm272, %v2898, 0
    %v3057 = vsel %vm272, %v2899, 0
    %3059 = vmatprep.subr.bf16.mxu0 0
    %3060 = vmatpush1.bf16.xpose.msra.mxu0 %v3054
    %3061 = vmatprep.subr.bf16.mxu0 0
    %3062 = vmatpush1.bf16.xpose.msra.mxu0 %v3057
    %3063 = vmatprep.subr.bf16.mxu0 0
    %3064 = vmatpush1.bf16.xpose.msra.mxu0 0
    %3065 = vmatprep.subr.bf16.mxu0 0
    %3066 = vmatpush1.bf16.xpose.msra.mxu0 0
    %3067 = vmatprep.subr.bf16.mxu0 0
    %3068 = vmatpush1.bf16.xpose.msra.mxu0 0
    %3069 = vmatprep.subr.bf16.mxu0 0
    %3070 = vmatpush1.bf16.xpose.msra.mxu0 0
    %3071 = vmatprep.subr.bf16.mxu0 0
    %3072 = vmatpush1.bf16.xpose.msra.mxu0 0
    %3073 = vmatprep.subr.bf16.mxu0 0
    %3074 = vmatpush1.bf16.xpose.msra.mxu0 0
    %3075 = vmatprep.subr.bf16.mxu0 0
    %3076 = vmatpush1.bf16.xpose.msra.mxu0 0
    %3077 = vmatprep.subr.bf16.mxu0 0
    %3078 = vmatpush1.bf16.xpose.msra.mxu0 0
    %3079 = vmatprep.subr.bf16.mxu0 0
    %3080 = vmatpush1.bf16.xpose.msra.mxu0 0
    %3081 = vmatprep.subr.bf16.mxu0 0
    %3082 = vmatpush1.bf16.xpose.msra.mxu0 0
    %3083 = vmatprep.subr.bf16.mxu0 0
    %3084 = vmatpush1.bf16.xpose.msra.mxu0 0
    %3085 = vmatprep.subr.bf16.mxu0 0
    %3086 = vmatpush1.bf16.xpose.msra.mxu0 0
    %3087 = vmatprep.subr.bf16.mxu0 0
    %3088 = vmatpush1.bf16.xpose.msra.mxu0 0
    %3089 = vmatprep.subr.bf16.mxu0 0
    %3090 = vmatpush1.bf16.xpose.msra.mxu0 0
    %3091 = vmatprep.mubr.bf16.mxu0 0
    %3092 = vmatmul.mubr.bf16.gmra.mrb[0].mxu0 %v3051
    %v3093 = vpop.f32.mrb[0].mxu0
    %v3094 = vadd.f32 0.0, %v3093
    %v3095 = vpop.f32.mrb[0].mxu0
    %v3096 = vpop.f32.mrb[0].mxu0
    %v3097 = vadd.f32 0.0, %v3096
    %v3098 = vpop.f32.mrb[0].mxu0
    %3099 = vdwg.mxu0
    %v3100 = vmul.f32 %v2944, 0.35355338
    %v3101 = vmul.f32 %v2947, 0.35355338
    %v3102 = vmul.f32 %v2994, 0.35355338
    %v3103 = vmul.f32 %v2997, 0.35355338
    %v3104 = vmul.f32 %v3044, 0.35355338
    %v3105 = vmul.f32 %v3047, 0.35355338
    %v3106 = vmul.f32 %v3094, 0.35355338
    %v3107 = vmul.f32 %v3097, 0.35355338
    %v3108 = vadd.f32 %v3100, %v168
    %v3109 = vadd.f32 %v3101, %v169
    %v3110 = vadd.f32 %v3102, %v168
    %v3111 = vadd.f32 %v3103, %v169
    %v3112 = vadd.f32 %v3104, %v168
    %v3113 = vadd.f32 %v3105, %v169
    %v3114 = vadd.f32 %v3106, %v168
    %v3115 = vadd.f32 %v3107, %v169
    %v3116 = vsel %vm200, %v3108, -inf
    %3117 = vmax.xlane.f32.xlu0 %v3116
    %v3118 = vpop.xlane.xlu0 %3117
    %v3119 = vsel %vm200, %v3109, -inf
    %3120 = vmax.xlane.f32.xlu0 %v3119
    %v3121 = vpop.xlane.xlu0 %3120
    %v3122 = vsel %vm200, %v3110, -inf
    %3123 = vmax.xlane.f32.xlu0 %v3122
    %v3124 = vpop.xlane.xlu0 %3123
    %v3125 = vsel %vm200, %v3111, -inf
    %3126 = vmax.xlane.f32.xlu0 %v3125
    %v3127 = vpop.xlane.xlu0 %3126
    %v3128 = vsel %vm200, %v3112, -inf
    %3129 = vmax.xlane.f32.xlu0 %v3128
    %v3130 = vpop.xlane.xlu0 %3129
    %v3131 = vsel %vm200, %v3113, -inf
    %3132 = vmax.xlane.f32.xlu0 %v3131
    %v3133 = vpop.xlane.xlu0 %3132
    %v3134 = vsel %vm200, %v3114, -inf
    %3135 = vmax.xlane.f32.xlu0 %v3134
    %v3136 = vpop.xlane.xlu0 %3135
    %v3137 = vsel %vm200, %v3115, -inf
    %3138 = vmax.xlane.f32.xlu0 %v3137
    %v3139 = vpop.xlane.xlu0 %3138
    %v3140 = vsub.f32 %v3108, %v3118
    %v3141 = vsub.f32 %v3109, %v3121
    %v3142 = vsub.f32 %v3110, %v3124
    %v3143 = vsub.f32 %v3111, %v3127
    %v3144 = vsub.f32 %v3112, %v3130
    %v3145 = vsub.f32 %v3113, %v3133
    %v3146 = vsub.f32 %v3114, %v3136
    %v3147 = vsub.f32 %v3115, %v3139
    %v3148 = vmul.f32 %v3140, 1.442695
    %v3149 = vpow.pop %v3148
    %v3150 = vmul.f32 %v3141, 1.442695
    %v3151 = vpow.pop %v3150
    %v3152 = vmul.f32 %v3142, 1.442695
    %v3153 = vpow.pop %v3152
    %v3154 = vmul.f32 %v3143, 1.442695
    %v3155 = vpow.pop %v3154
    %v3156 = vmul.f32 %v3144, 1.442695
    %v3157 = vpow.pop %v3156
    %v3158 = vmul.f32 %v3145, 1.442695
    %v3159 = vpow.pop %v3158
    %v3160 = vmul.f32 %v3146, 1.442695
    %v3161 = vpow.pop %v3160
    %v3162 = vmul.f32 %v3147, 1.442695
    %v3163 = vpow.pop %v3162
    %v3164 = vsel %vm200, %v3149, 0.0
    %3165 = vadd.xlane.f32.xlu0 %v3164
    %v3166 = vpop.xlane.xlu0 %3165
    %v3167 = vsel %vm200, %v3151, 0.0
    %3168 = vadd.xlane.f32.xlu0 %v3167
    %v3169 = vpop.xlane.xlu0 %3168
    %v3170 = vsel %vm200, %v3153, 0.0
    %3171 = vadd.xlane.f32.xlu0 %v3170
    %v3172 = vpop.xlane.xlu0 %3171
    %v3173 = vsel %vm200, %v3155, 0.0
    %3174 = vadd.xlane.f32.xlu0 %v3173
    %v3175 = vpop.xlane.xlu0 %3174
    %v3176 = vsel %vm200, %v3157, 0.0
    %3177 = vadd.xlane.f32.xlu0 %v3176
    %v3178 = vpop.xlane.xlu0 %3177
    %v3179 = vsel %vm200, %v3159, 0.0
    %3180 = vadd.xlane.f32.xlu0 %v3179
    %v3181 = vpop.xlane.xlu0 %3180
    %v3182 = vsel %vm200, %v3161, 0.0
    %3183 = vadd.xlane.f32.xlu0 %v3182
    %v3184 = vpop.xlane.xlu0 %3183
    %v3185 = vsel %vm200, %v3163, 0.0
    %3186 = vadd.xlane.f32.xlu0 %v3185
    %v3187 = vpop.xlane.xlu0 %3186
    %v3188 = vrcp.pop %v3166
    %v3189 = vrcp.pop %v3169
    %v3190 = vrcp.pop %v3172
    %v3191 = vrcp.pop %v3175
    %v3192 = vrcp.pop %v3178
    %v3193 = vrcp.pop %v3181
    %v3194 = vrcp.pop %v3184
    %v3195 = vrcp.pop %v3187
    %v3196 = vmul.f32 %v3149, %v3188
    %v3197 = vmul.f32 %v3151, %v3189
    %v3198 = vmul.f32 %v3153, %v3190
    %v3199 = vmul.f32 %v3155, %v3191
    %v3200 = vmul.f32 %v3157, %v3192
    %v3201 = vmul.f32 %v3159, %v3193
    %v3202 = vmul.f32 %v3161, %v3194
    %v3203 = vmul.f32 %v3163, %v3195
    %v3204 = vpack.c.bf16 %v3197, %v3196
    %v3205 = vpack.c.bf16 %v3199, %v3198
    %v3206 = vpack.c.bf16 %v3201, %v3200
    %v3207 = vpack.c.bf16 %v3203, %v3202
    %3210 = vrot.lane.b32.xlu0 %v2892, 96
    %v3211 = vpop.permute.xlu0 %3210
    %3212 = vrot.lane.b32.xlu0 %v2893, 96
    %v3213 = vpop.permute.xlu0 %3212
    %v3217 = vsel %vm200, %v3204, 0
    %3219 = vmatprep.subr.bf16.mxu0 0
    %3220 = vmatpush1.bf16.msra.mxu0 %v3211
    %3221 = vmatprep.subr.bf16.mxu0 0
    %3222 = vmatpush1.bf16.msra.mxu0 %v3213
    %3223 = vmatprep.subr.bf16.mxu0 0
    %3224 = vmatpush1.bf16.msra.mxu0 0
    %3225 = vmatprep.subr.bf16.mxu0 0
    %3226 = vmatpush1.bf16.msra.mxu0 0
    %3227 = vmatprep.subr.bf16.mxu0 0
    %3228 = vmatpush1.bf16.msra.mxu0 0
    %3229 = vmatprep.subr.bf16.mxu0 0
    %3230 = vmatpush1.bf16.msra.mxu0 0
    %3231 = vmatprep.subr.bf16.mxu0 0
    %3232 = vmatpush1.bf16.msra.mxu0 0
    %3233 = vmatprep.subr.bf16.mxu0 0
    %3234 = vmatpush1.bf16.msra.mxu0 0
    %3235 = vmatprep.subr.bf16.mxu0 0
    %3236 = vmatpush1.bf16.msra.mxu0 0
    %3237 = vmatprep.subr.bf16.mxu0 0
    %3238 = vmatpush1.bf16.msra.mxu0 0
    %3239 = vmatprep.subr.bf16.mxu0 0
    %3240 = vmatpush1.bf16.msra.mxu0 0
    %3241 = vmatprep.subr.bf16.mxu0 0
    %3242 = vmatpush1.bf16.msra.mxu0 0
    %3243 = vmatprep.subr.bf16.mxu0 0
    %3244 = vmatpush1.bf16.msra.mxu0 0
    %3245 = vmatprep.subr.bf16.mxu0 0
    %3246 = vmatpush1.bf16.msra.mxu0 0
    %3247 = vmatprep.subr.bf16.mxu0 0
    %3248 = vmatpush1.bf16.msra.mxu0 0
    %3249 = vmatprep.subr.bf16.mxu0 0
    %3250 = vmatpush1.bf16.msra.mxu0 0
    %3251 = vmatprep.mubr.bf16.mxu0 0
    %3252 = vmatmul.mubr.bf16.gmra.mrb[0].mxu0 %v3217
    %v3253 = vpop.f32.mrb[0].mxu0
    %v3254 = vadd.f32 0.0, %v3253
    %v3255 = vpop.f32.mrb[0].mxu0
    %v3256 = vpop.f32.mrb[0].mxu0
    %v3257 = vadd.f32 0.0, %v3256
    %v3258 = vpop.f32.mrb[0].mxu0
    %3259 = vdwg.mxu0
    %3262 = vrot.lane.b32.xlu0 %v2894, 96
    %v3263 = vpop.permute.xlu0 %3262
    %3264 = vrot.lane.b32.xlu0 %v2895, 96
    %v3265 = vpop.permute.xlu0 %3264
    %v3269 = vsel %vm200, %v3205, 0
    %3271 = vmatprep.subr.bf16.mxu0 0
    %3272 = vmatpush1.bf16.msra.mxu0 %v3263
    %3273 = vmatprep.subr.bf16.mxu0 0
    %3274 = vmatpush1.bf16.msra.mxu0 %v3265
    %3275 = vmatprep.subr.bf16.mxu0 0
    %3276 = vmatpush1.bf16.msra.mxu0 0
    %3277 = vmatprep.subr.bf16.mxu0 0
    %3278 = vmatpush1.bf16.msra.mxu0 0
    %3279 = vmatprep.subr.bf16.mxu0 0
    %3280 = vmatpush1.bf16.msra.mxu0 0
    %3281 = vmatprep.subr.bf16.mxu0 0
    %3282 = vmatpush1.bf16.msra.mxu0 0
    %3283 = vmatprep.subr.bf16.mxu0 0
    %3284 = vmatpush1.bf16.msra.mxu0 0
    %3285 = vmatprep.subr.bf16.mxu0 0
    %3286 = vmatpush1.bf16.msra.mxu0 0
    %3287 = vmatprep.subr.bf16.mxu0 0
    %3288 = vmatpush1.bf16.msra.mxu0 0
    %3289 = vmatprep.subr.bf16.mxu0 0
    %3290 = vmatpush1.bf16.msra.mxu0 0
    %3291 = vmatprep.subr.bf16.mxu0 0
    %3292 = vmatpush1.bf16.msra.mxu0 0
    %3293 = vmatprep.subr.bf16.mxu0 0
    %3294 = vmatpush1.bf16.msra.mxu0 0
    %3295 = vmatprep.subr.bf16.mxu0 0
    %3296 = vmatpush1.bf16.msra.mxu0 0
    %3297 = vmatprep.subr.bf16.mxu0 0
    %3298 = vmatpush1.bf16.msra.mxu0 0
    %3299 = vmatprep.subr.bf16.mxu0 0
    %3300 = vmatpush1.bf16.msra.mxu0 0
    %3301 = vmatprep.subr.bf16.mxu0 0
    %3302 = vmatpush1.bf16.msra.mxu0 0
    %3303 = vmatprep.mubr.bf16.mxu0 0
    %3304 = vmatmul.mubr.bf16.gmra.mrb[0].mxu0 %v3269
    %v3305 = vpop.f32.mrb[0].mxu0
    %v3306 = vadd.f32 0.0, %v3305
    %v3307 = vpop.f32.mrb[0].mxu0
    %v3308 = vpop.f32.mrb[0].mxu0
    %v3309 = vadd.f32 0.0, %v3308
    %v3310 = vpop.f32.mrb[0].mxu0
    %3311 = vdwg.mxu0
    %3314 = vrot.lane.b32.xlu0 %v2896, 96
    %v3315 = vpop.permute.xlu0 %3314
    %3316 = vrot.lane.b32.xlu0 %v2897, 96
    %v3317 = vpop.permute.xlu0 %3316
    %v3321 = vsel %vm200, %v3206, 0
    %3323 = vmatprep.subr.bf16.mxu0 0
    %3324 = vmatpush1.bf16.msra.mxu0 %v3315
    %3325 = vmatprep.subr.bf16.mxu0 0
    %3326 = vmatpush1.bf16.msra.mxu0 %v3317
    %3327 = vmatprep.subr.bf16.mxu0 0
    %3328 = vmatpush1.bf16.msra.mxu0 0
    %3329 = vmatprep.subr.bf16.mxu0 0
    %3330 = vmatpush1.bf16.msra.mxu0 0
    %3331 = vmatprep.subr.bf16.mxu0 0
    %3332 = vmatpush1.bf16.msra.mxu0 0
    %3333 = vmatprep.subr.bf16.mxu0 0
    %3334 = vmatpush1.bf16.msra.mxu0 0
    %3335 = vmatprep.subr.bf16.mxu0 0
    %3336 = vmatpush1.bf16.msra.mxu0 0
    %3337 = vmatprep.subr.bf16.mxu0 0
    %3338 = vmatpush1.bf16.msra.mxu0 0
    %3339 = vmatprep.subr.bf16.mxu0 0
    %3340 = vmatpush1.bf16.msra.mxu0 0
    %3341 = vmatprep.subr.bf16.mxu0 0
    %3342 = vmatpush1.bf16.msra.mxu0 0
    %3343 = vmatprep.subr.bf16.mxu0 0
    %3344 = vmatpush1.bf16.msra.mxu0 0
    %3345 = vmatprep.subr.bf16.mxu0 0
    %3346 = vmatpush1.bf16.msra.mxu0 0
    %3347 = vmatprep.subr.bf16.mxu0 0
    %3348 = vmatpush1.bf16.msra.mxu0 0
    %3349 = vmatprep.subr.bf16.mxu0 0
    %3350 = vmatpush1.bf16.msra.mxu0 0
    %3351 = vmatprep.subr.bf16.mxu0 0
    %3352 = vmatpush1.bf16.msra.mxu0 0
    %3353 = vmatprep.subr.bf16.mxu0 0
    %3354 = vmatpush1.bf16.msra.mxu0 0
    %3355 = vmatprep.mubr.bf16.mxu0 0
    %3356 = vmatmul.mubr.bf16.gmra.mrb[0].mxu0 %v3321
    %v3357 = vpop.f32.mrb[0].mxu0
    %v3358 = vadd.f32 0.0, %v3357
    %v3359 = vpop.f32.mrb[0].mxu0
    %v3360 = vpop.f32.mrb[0].mxu0
    %v3361 = vadd.f32 0.0, %v3360
    %v3362 = vpop.f32.mrb[0].mxu0
    %3363 = vdwg.mxu0
    %3366 = vrot.lane.b32.xlu0 %v2898, 96
    %v3367 = vpop.permute.xlu0 %3366
    %3368 = vrot.lane.b32.xlu0 %v2899, 96
    %v3369 = vpop.permute.xlu0 %3368
    %v3373 = vsel %vm200, %v3207, 0
    %3375 = vmatprep.subr.bf16.mxu0 0
    %3376 = vmatpush1.bf16.msra.mxu0 %v3367
    %3377 = vmatprep.subr.bf16.mxu0 0
    %3378 = vmatpush1.bf16.msra.mxu0 %v3369
    %3379 = vmatprep.subr.bf16.mxu0 0
    %3380 = vmatpush1.bf16.msra.mxu0 0
    %3381 = vmatprep.subr.bf16.mxu0 0
    %3382 = vmatpush1.bf16.msra.mxu0 0
    %3383 = vmatprep.subr.bf16.mxu0 0
    %3384 = vmatpush1.bf16.msra.mxu0 0
    %3385 = vmatprep.subr.bf16.mxu0 0
    %3386 = vmatpush1.bf16.msra.mxu0 0
    %3387 = vmatprep.subr.bf16.mxu0 0
    %3388 = vmatpush1.bf16.msra.mxu0 0
    %3389 = vmatprep.subr.bf16.mxu0 0
    %3390 = vmatpush1.bf16.msra.mxu0 0
    %3391 = vmatprep.subr.bf16.mxu0 0
    %3392 = vmatpush1.bf16.msra.mxu0 0
    %3393 = vmatprep.subr.bf16.mxu0 0
    %3394 = vmatpush1.bf16.msra.mxu0 0
    %3395 = vmatprep.subr.bf16.mxu0 0
    %3396 = vmatpush1.bf16.msra.mxu0 0
    %3397 = vmatprep.subr.bf16.mxu0 0
    %3398 = vmatpush1.bf16.msra.mxu0 0
    %3399 = vmatprep.subr.bf16.mxu0 0
    %3400 = vmatpush1.bf16.msra.mxu0 0
    %3401 = vmatprep.subr.bf16.mxu0 0
    %3402 = vmatpush1.bf16.msra.mxu0 0
    %3403 = vmatprep.subr.bf16.mxu0 0
    %3404 = vmatpush1.bf16.msra.mxu0 0
    %3405 = vmatprep.subr.bf16.mxu0 0
    %3406 = vmatpush1.bf16.msra.mxu0 0
    %3407 = vmatprep.mubr.bf16.mxu0 0
    %3408 = vmatmul.mubr.bf16.gmra.mrb[0].mxu0 %v3373
    %v3409 = vpop.f32.mrb[0].mxu0
    %v3410 = vadd.f32 0.0, %v3409
    %v3411 = vpop.f32.mrb[0].mxu0
    %v3412 = vpop.f32.mrb[0].mxu0
    %v3413 = vadd.f32 0.0, %v3412
    %v3414 = vpop.f32.mrb[0].mxu0
    %3415 = vdwg.mxu0
    %3418 = vrot.lane.b32.xlu0 %v3306, 8
    %v3419 = vpop.permute.xlu0 %3418
    %3420 = vrot.lane.b32.xlu0 %v3309, 8
    %v3421 = vpop.permute.xlu0 %3420
    %3426 = vrot.lane.b32.xlu0 %v3358, 16
    %v3427 = vpop.permute.xlu0 %3426
    %3428 = vrot.lane.b32.xlu0 %v3361, 16
    %v3429 = vpop.permute.xlu0 %3428
    %3434 = vrot.lane.b32.xlu0 %v3410, 24
    %v3435 = vpop.permute.xlu0 %3434
    %3436 = vrot.lane.b32.xlu0 %v3413, 24
    %v3437 = vpop.permute.xlu0 %3436
    %v3440 = vsel %vm272, %v3254, %v3419
    %v3441 = vsel %vm272, %v3257, %v3421
    %v3442 = vsel %vm486, %v3440, %v3427
    %v3443 = vsel %vm486, %v3441, %v3429
    %v3444 = vsel %vm795, %v3442, %v3435
    %v3445 = vsel %vm795, %v3443, %v3437
    %v3446 = vpack.c.bf16 %v3445, %v3444
    %v3448 = vlaneseq
    %v3449 = vshrl.u32 %v3448, 7
    %v3450 = vsub.s32 0, %v3449
    %v3451 = vrot.slane %v2706, %v3450
    %v3457 = vunpack.c.l.b16 %v2701
    %v3458 = vunpack.c.l.b16 %v2702
    %v3459 = vunpack.c.l.b16 %v2703
    %v3460 = vunpack.c.l.b16 %v2704
    %v3461 = vpack.c.b16 %v3458, %v3457
    %v3462 = vpack.c.b16 %v3460, %v3459
    %v3466 = vsel %vm200, %v3446, 0
    %3468 = vmatprep.subr.bf16.mxu0 0
    %3469 = vmatpush1.bf16.msra.mxu0 %v3461
    %3470 = vmatprep.subr.bf16.mxu0 0
    %3471 = vmatpush1.bf16.msra.mxu0 %v3462
    %3472 = vmatprep.subr.bf16.mxu0 0
    %3473 = vmatpush1.bf16.msra.mxu0 0
    %3474 = vmatprep.subr.bf16.mxu0 0
    %3475 = vmatpush1.bf16.msra.mxu0 0
    %3476 = vmatprep.subr.bf16.mxu0 0
    %3477 = vmatpush1.bf16.msra.mxu0 0
    %3478 = vmatprep.subr.bf16.mxu0 0
    %3479 = vmatpush1.bf16.msra.mxu0 0
    %3480 = vmatprep.subr.bf16.mxu0 0
    %3481 = vmatpush1.bf16.msra.mxu0 0
    %3482 = vmatprep.subr.bf16.mxu0 0
    %3483 = vmatpush1.bf16.msra.mxu0 0
    %3484 = vmatprep.subr.bf16.mxu0 0
    %3485 = vmatpush1.bf16.msra.mxu0 0
    %3486 = vmatprep.subr.bf16.mxu0 0
    %3487 = vmatpush1.bf16.msra.mxu0 0
    %3488 = vmatprep.subr.bf16.mxu0 0
    %3489 = vmatpush1.bf16.msra.mxu0 0
    %3490 = vmatprep.subr.bf16.mxu0 0
    %3491 = vmatpush1.bf16.msra.mxu0 0
    %3492 = vmatprep.subr.bf16.mxu0 0
    %3493 = vmatpush1.bf16.msra.mxu0 0
    %3494 = vmatprep.subr.bf16.mxu0 0
    %3495 = vmatpush1.bf16.msra.mxu0 0
    %3496 = vmatprep.subr.bf16.mxu0 0
    %3497 = vmatpush1.bf16.msra.mxu0 0
    %3498 = vmatprep.subr.bf16.mxu0 0
    %3499 = vmatpush1.bf16.msra.mxu0 0
    %3500 = vmatprep.mubr.bf16.mxu0 0
    %3501 = vmatmul.mubr.bf16.gmra.mrb[0].mxu0 %v3466
    %v3502 = vpop.f32.mrb[0].mxu0
    %v3503 = vadd.f32 %v3451, %v3502
    %v3504 = vpop.f32.mrb[0].mxu0
    %v3505 = vpop.f32.mrb[0].mxu0
    %v3506 = vadd.f32 %v3451, %v3505
    %v3507 = vpop.f32.mrb[0].mxu0
    %3508 = vdwg.mxu0
    %v3509 = vadd.f32 %v2691, %v3503
    %v3510 = vadd.f32 %v2692, %v3506
    %v3511 = vsel %vm200, %v3509, 0.0
    %3512 = vadd.xlane.f32.xlu0 %v3511
    %v3513 = vpop.xlane.xlu0 %3512
    %v3514 = vsel %vm200, %v3510, 0.0
    %3515 = vadd.xlane.f32.xlu0 %v3514
    %v3516 = vpop.xlane.xlu0 %3515
    %v3517 = vmul.f32 %v3513, %v869
    %v3518 = vmul.f32 %v3516, %v869
    %v3519 = vsub.f32 %v3509, %v3517
    %v3520 = vsub.f32 %v3510, %v3518
    %v3521 = vmul.f32 %v3519, %v3519
    %v3522 = vmul.f32 %v3520, %v3520
    %v3523 = vsel %vm200, %v3521, 0.0
    %3524 = vadd.xlane.f32.xlu0 %v3523
    %v3525 = vpop.xlane.xlu0 %3524
    %v3526 = vsel %vm200, %v3522, 0.0
    %3527 = vadd.xlane.f32.xlu0 %v3526
    %v3528 = vpop.xlane.xlu0 %3527
    %v3529 = vmul.f32 %v3525, %v869
    %v3530 = vmul.f32 %v3528, %v869
    %v3531 = vadd.f32 %v3529, 1e-05
    %v3532 = vadd.f32 %v3530, 1e-05
    %v3533 = vrsqrt.pop %v3531
    %v3534 = vrsqrt.pop %v3532
    %v3535 = vmul.f32 %v3519, %v3533
    %v3536 = vmul.f32 %v3520, %v3534
    %v3537 = vlaneseq
    %v3538 = vshrl.u32 %v3537, 7
    %v3539 = vsub.s32 2, %v3538
    %v3540 = vrot.slane %v1962, %v3539
    %v3541 = vmul.f32 %v3535, %v3540
    %v3542 = vmul.f32 %v3536, %v3540
    %v3543 = vlaneseq
    %v3544 = vshrl.u32 %v3543, 7
    %v3545 = vsub.s32 3, %v3544
    %v3546 = vrot.slane %v1962, %v3545
    %v3547 = vadd.f32 %v3541, %v3546
    %v3548 = vadd.f32 %v3542, %v3546
    %v3549 = vpack.c.bf16 %v3548, %v3547
    %s3550 = scalar_lea.vmem %s10, 16
    %v3551 = vld [vmem:[%s3550] sm:$0xf]
    %v3552 = vld [vmem:[%s3550 + $0x4] sm:$0xf]
    %v3553 = vld [vmem:[%s3550 + $0x8] sm:$0xf]
    %v3554 = vld [vmem:[%s3550 + $0xc] sm:$0xf]
    %s3555 = scalar_lea.vmem %s11, 1
    %v3556 = vld [vmem:[%s3555] sm:$0x1]
    %v3558 = vlaneseq
    %v3559 = vshrl.u32 %v3558, 7
    %v3560 = vsub.s32 0, %v3559
    %v3561 = vrot.slane %v3556, %v3560
    %v3567 = vunpack.c.l.b16 %v3551
    %v3568 = vunpack.c.l.b16 %v3552
    %v3569 = vunpack.c.l.b16 %v3553
    %v3570 = vunpack.c.l.b16 %v3554
    %v3571 = vpack.c.b16 %v3568, %v3567
    %v3572 = vpack.c.b16 %v3570, %v3569
    %v3576 = vsel %vm200, %v3549, 0
    %3578 = vmatprep.subr.bf16.mxu0 0
    %3579 = vmatpush1.bf16.msra.mxu0 %v3571
    %3580 = vmatprep.subr.bf16.mxu0 0
    %3581 = vmatpush1.bf16.msra.mxu0 %v3572
    %3582 = vmatprep.subr.bf16.mxu0 0
    %3583 = vmatpush1.bf16.msra.mxu0 0
    %3584 = vmatprep.subr.bf16.mxu0 0
    %3585 = vmatpush1.bf16.msra.mxu0 0
    %3586 = vmatprep.subr.bf16.mxu0 0
    %3587 = vmatpush1.bf16.msra.mxu0 0
    %3588 = vmatprep.subr.bf16.mxu0 0
    %3589 = vmatpush1.bf16.msra.mxu0 0
    %3590 = vmatprep.subr.bf16.mxu0 0
    %3591 = vmatpush1.bf16.msra.mxu0 0
    %3592 = vmatprep.subr.bf16.mxu0 0
    %3593 = vmatpush1.bf16.msra.mxu0 0
    %3594 = vmatprep.subr.bf16.mxu0 0
    %3595 = vmatpush1.bf16.msra.mxu0 0
    %3596 = vmatprep.subr.bf16.mxu0 0
    %3597 = vmatpush1.bf16.msra.mxu0 0
    %3598 = vmatprep.subr.bf16.mxu0 0
    %3599 = vmatpush1.bf16.msra.mxu0 0
    %3600 = vmatprep.subr.bf16.mxu0 0
    %3601 = vmatpush1.bf16.msra.mxu0 0
    %3602 = vmatprep.subr.bf16.mxu0 0
    %3603 = vmatpush1.bf16.msra.mxu0 0
    %3604 = vmatprep.subr.bf16.mxu0 0
    %3605 = vmatpush1.bf16.msra.mxu0 0
    %3606 = vmatprep.subr.bf16.mxu0 0
    %3607 = vmatpush1.bf16.msra.mxu0 0
    %3608 = vmatprep.subr.bf16.mxu0 0
    %3609 = vmatpush1.bf16.msra.mxu0 0
    %3610 = vmatprep.mubr.bf16.mxu0 0
    %3611 = vmatmul.mubr.bf16.gmra.mrb[0].mxu0 %v3576
    %v3612 = vpop.f32.mrb[0].mxu0
    %v3613 = vadd.f32 %v3561, %v3612
    %v3614 = vpop.f32.mrb[0].mxu0
    %v3615 = vpop.f32.mrb[0].mxu0
    %v3616 = vadd.f32 %v3561, %v3615
    %v3617 = vpop.f32.mrb[0].mxu0
    %3618 = vdwg.mxu0
    %v3619 = vmax.f32 %v3613, 0.0
    %v3620 = vmax.f32 %v3616, 0.0
    %v3621 = vpack.c.bf16 %v3620, %v3619
    %s3622 = scalar_lea.vmem %s12, 32
    %v3623 = vld [vmem:[%s3622] sm:$0xf]
    %v3624 = vld [vmem:[%s3622 + $0x4] sm:$0xf]
    %v3625 = vld [vmem:[%s3622 + $0x8] sm:$0xf]
    %v3626 = vld [vmem:[%s3622 + $0xc] sm:$0xf]
    %v3627 = vld [vmem:[%s3622 + $0x10] sm:$0xf]
    %v3628 = vld [vmem:[%s3622 + $0x14] sm:$0xf]
    %v3629 = vld [vmem:[%s3622 + $0x18] sm:$0xf]
    %v3630 = vld [vmem:[%s3622 + $0x1c] sm:$0xf]
    %s3631 = scalar_lea.vmem %s13, 1
    %v3632 = vld [vmem:[%s3631] sm:$0x1]
    %v3634 = vlaneseq
    %v3635 = vshrl.u32 %v3634, 7
    %v3636 = vsub.s32 0, %v3635
    %v3637 = vrot.slane %v3632, %v3636
    %v3647 = vunpack.c.l.b16 %v3623
    %v3648 = vunpack.c.l.b16 %v3624
    %v3649 = vunpack.c.l.b16 %v3625
    %v3650 = vunpack.c.l.b16 %v3626
    %v3651 = vunpack.c.l.b16 %v3627
    %v3652 = vunpack.c.l.b16 %v3628
    %v3653 = vunpack.c.l.b16 %v3629
    %v3654 = vunpack.c.l.b16 %v3630
    %v3655 = vpack.c.b16 %v3648, %v3647
    %v3656 = vpack.c.b16 %v3650, %v3649
    %v3657 = vpack.c.b16 %v3652, %v3651
    %v3658 = vpack.c.b16 %v3654, %v3653
    %v3664 = vsel %vm1876, %v3621, 0
    %3666 = vmatprep.subr.bf16.mxu0 0
    %3667 = vmatpush1.bf16.msra.mxu0 %v3655
    %3668 = vmatprep.subr.bf16.mxu0 0
    %3669 = vmatpush1.bf16.msra.mxu0 %v3656
    %3670 = vmatprep.subr.bf16.mxu0 0
    %3671 = vmatpush1.bf16.msra.mxu0 %v3657
    %3672 = vmatprep.subr.bf16.mxu0 0
    %3673 = vmatpush1.bf16.msra.mxu0 %v3658
    %3674 = vmatprep.subr.bf16.mxu0 0
    %3675 = vmatpush1.bf16.msra.mxu0 0
    %3676 = vmatprep.subr.bf16.mxu0 0
    %3677 = vmatpush1.bf16.msra.mxu0 0
    %3678 = vmatprep.subr.bf16.mxu0 0
    %3679 = vmatpush1.bf16.msra.mxu0 0
    %3680 = vmatprep.subr.bf16.mxu0 0
    %3681 = vmatpush1.bf16.msra.mxu0 0
    %3682 = vmatprep.subr.bf16.mxu0 0
    %3683 = vmatpush1.bf16.msra.mxu0 0
    %3684 = vmatprep.subr.bf16.mxu0 0
    %3685 = vmatpush1.bf16.msra.mxu0 0
    %3686 = vmatprep.subr.bf16.mxu0 0
    %3687 = vmatpush1.bf16.msra.mxu0 0
    %3688 = vmatprep.subr.bf16.mxu0 0
    %3689 = vmatpush1.bf16.msra.mxu0 0
    %3690 = vmatprep.subr.bf16.mxu0 0
    %3691 = vmatpush1.bf16.msra.mxu0 0
    %3692 = vmatprep.subr.bf16.mxu0 0
    %3693 = vmatpush1.bf16.msra.mxu0 0
    %3694 = vmatprep.subr.bf16.mxu0 0
    %3695 = vmatpush1.bf16.msra.mxu0 0
    %3696 = vmatprep.subr.bf16.mxu0 0
    %3697 = vmatpush1.bf16.msra.mxu0 0
    %3698 = vmatprep.mubr.bf16.mxu0 0
    %3699 = vmatmul.mubr.bf16.gmra.mrb[0].mxu0 %v3664
    %v3700 = vpop.f32.mrb[0].mxu0
    %v3701 = vadd.f32 %v3637, %v3700
    %v3702 = vpop.f32.mrb[0].mxu0
    %v3703 = vpop.f32.mrb[0].mxu0
    %v3704 = vadd.f32 %v3637, %v3703
    %v3705 = vpop.f32.mrb[0].mxu0
    %3706 = vdwg.mxu0
    %v3707 = vadd.f32 %v3547, %v3701
    %v3708 = vadd.f32 %v3548, %v3704
    %v3709 = vsel %vm200, %v3707, 0.0
    %3710 = vadd.xlane.f32.xlu0 %v3709
    %v3711 = vpop.xlane.xlu0 %3710
    %v3712 = vsel %vm200, %v3708, 0.0
    %3713 = vadd.xlane.f32.xlu0 %v3712
    %v3714 = vpop.xlane.xlu0 %3713
    %v3715 = vmul.f32 %v3711, %v869
    %v3716 = vmul.f32 %v3714, %v869
    %v3717 = vsub.f32 %v3707, %v3715
    %v3718 = vsub.f32 %v3708, %v3716
    %v3719 = vmul.f32 %v3717, %v3717
    %v3720 = vmul.f32 %v3718, %v3718
    %v3721 = vsel %vm200, %v3719, 0.0
    %3722 = vadd.xlane.f32.xlu0 %v3721
    %v3723 = vpop.xlane.xlu0 %3722
    %v3724 = vsel %vm200, %v3720, 0.0
    %3725 = vadd.xlane.f32.xlu0 %v3724
    %v3726 = vpop.xlane.xlu0 %3725
    %v3727 = vmul.f32 %v3723, %v869
    %v3728 = vmul.f32 %v3726, %v869
    %v3729 = vadd.f32 %v3727, 1e-05
    %v3730 = vadd.f32 %v3728, 1e-05
    %v3731 = vrsqrt.pop %v3729
    %v3732 = vrsqrt.pop %v3730
    %v3733 = vmul.f32 %v3717, %v3731
    %v3734 = vmul.f32 %v3718, %v3732
    %v3735 = vlaneseq
    %v3736 = vshrl.u32 %v3735, 7
    %v3737 = vsub.s32 4, %v3736
    %v3738 = vrot.slane %v1962, %v3737
    %v3739 = vmul.f32 %v3733, %v3738
    %v3740 = vmul.f32 %v3734, %v3738
    %v3741 = vlaneseq
    %v3742 = vshrl.u32 %v3741, 7
    %v3743 = vsub.s32 5, %v3742
    %v3744 = vrot.slane %v1962, %v3743
    %v3745 = vadd.f32 %v3739, %v3744
    %v3746 = vadd.f32 %v3740, %v3744
    %v3747 = vpack.c.bf16 %v3746, %v3745
    %v3748 = vld [vmem:[%s14] sm:$0xf]
    %v3749 = vld [vmem:[%s14 + $0x4] sm:$0xf]
    %v3750 = vld [vmem:[%s14 + $0x8] sm:$0xf]
    %v3751 = vld [vmem:[%s14 + $0xc] sm:$0xf]
    %v3752 = vld [vmem:[%s15] sm:$0x1]
    %v3754 = vlaneseq
    %v3755 = vshrl.u32 %v3754, 7
    %v3756 = vsub.s32 0, %v3755
    %v3757 = vrot.slane %v3752, %v3756
    %v3763 = vunpack.c.l.b16 %v3748
    %v3764 = vunpack.c.l.b16 %v3749
    %v3765 = vunpack.c.l.b16 %v3750
    %v3766 = vunpack.c.l.b16 %v3751
    %v3767 = vpack.c.b16 %v3764, %v3763
    %v3768 = vpack.c.b16 %v3766, %v3765
    %v3772 = vsel %vm200, %v3747, 0
    %3774 = vmatprep.subr.bf16.mxu0 0
    %3775 = vmatpush1.bf16.msra.mxu0 %v3767
    %3776 = vmatprep.subr.bf16.mxu0 0
    %3777 = vmatpush1.bf16.msra.mxu0 %v3768
    %3778 = vmatprep.subr.bf16.mxu0 0
    %3779 = vmatpush1.bf16.msra.mxu0 0
    %3780 = vmatprep.subr.bf16.mxu0 0
    %3781 = vmatpush1.bf16.msra.mxu0 0
    %3782 = vmatprep.subr.bf16.mxu0 0
    %3783 = vmatpush1.bf16.msra.mxu0 0
    %3784 = vmatprep.subr.bf16.mxu0 0
    %3785 = vmatpush1.bf16.msra.mxu0 0
    %3786 = vmatprep.subr.bf16.mxu0 0
    %3787 = vmatpush1.bf16.msra.mxu0 0
    %3788 = vmatprep.subr.bf16.mxu0 0
    %3789 = vmatpush1.bf16.msra.mxu0 0
    %3790 = vmatprep.subr.bf16.mxu0 0
    %3791 = vmatpush1.bf16.msra.mxu0 0
    %3792 = vmatprep.subr.bf16.mxu0 0
    %3793 = vmatpush1.bf16.msra.mxu0 0
    %3794 = vmatprep.subr.bf16.mxu0 0
    %3795 = vmatpush1.bf16.msra.mxu0 0
    %3796 = vmatprep.subr.bf16.mxu0 0
    %3797 = vmatpush1.bf16.msra.mxu0 0
    %3798 = vmatprep.subr.bf16.mxu0 0
    %3799 = vmatpush1.bf16.msra.mxu0 0
    %3800 = vmatprep.subr.bf16.mxu0 0
    %3801 = vmatpush1.bf16.msra.mxu0 0
    %3802 = vmatprep.subr.bf16.mxu0 0
    %3803 = vmatpush1.bf16.msra.mxu0 0
    %3804 = vmatprep.subr.bf16.mxu0 0
    %3805 = vmatpush1.bf16.msra.mxu0 0
    %3806 = vmatprep.mubr.bf16.mxu0 0
    %3807 = vmatmul.mubr.bf16.gmra.mrb[0].mxu0 %v3772
    %v3808 = vpop.f32.mrb[0].mxu0
    %v3809 = vadd.f32 %v3757, %v3808
    %v3810 = vpop.f32.mrb[0].mxu0
    %v3811 = vpop.f32.mrb[0].mxu0
    %v3812 = vadd.f32 %v3757, %v3811
    %v3813 = vpop.f32.mrb[0].mxu0
    %3814 = vdwg.mxu0
    %3815 = vst [vmem:[#allocation2] sm:$0xff] %v3809
    %3816 = vst [vmem:[#allocation2 + $0x8] sm:$0xff] %v3812
    // Predicated region
    $region66: #{decoder_forward.1} parent=1 // pred_check
      _
    $region67: #{decoder_forward.1} parent=1 // pred_check_branch
      %3818 = sbr.rel (0) target = $region69
    $region68: #{decoder_forward.1} parent=1 // pred_region
      %s3820 = ssub.s32 256, 256
      %3821 = vsyncadd [#allocation3], %s3820
      %s3822 = sshll.u32 [#allocation2], 4
      %s3823 = int_to_ptr.vmem [resolvable:$true] %s3822
      %3828 = dma.vmem_to_hbm [thread:$0]  %s3823, 256, %s16, [#allocation3], 128, 128, 8
    $region69: #{decoder_forward.1} parent=1 // pred_fallthru
      _
    // Predicated region
    $region70: #{decoder_forward.1} parent=1 // pred_check
      _
    $region71: #{decoder_forward.1} parent=1 // pred_check_branch
      %3830 = sbr.rel (0) target = $region73
    $region72: #{decoder_forward.1} parent=1 // pred_region
      %3831 = dma.done [#allocation3], 256
    $region73: #{decoder_forward.1} parent=1 // pred_fallthru
      _
    %3832 = vsyncpa [#allocation3], 1

</llo_original>
